<compile_context>
chip_gen: v7x
topology: tpu7x:2x2x1
jax: 0.10.0
libtpu: 0.0.40
codegen_flags: <defaults>
</compile_context>

<pallas_src>
import functools
import math

import jax
import jax.numpy as jnp
from jax.experimental import pallas as pl
from jax.experimental.pallas import tpu as pltpu

# Recurrent-weight dtype for the MXU (f32 accumulate). Set to jnp.float32 for bit-exact studies.
MXU_DTYPE = jnp.bfloat16


def _sigmoid(x):
    # exp + approximate reciprocal both run on the EUP slot, keeping the VALU free.
    return pl.reciprocal(1.0 + jnp.exp(-x), approx=True)


def _elu(x):
    # F.elu (alpha=1); clamp the exp arg so the unused branch cannot overflow.
    return jnp.where(x > 0.0, x, jnp.exp(jnp.minimum(x, 0.0)) - 1.0)


# ----------------------------------------------------------------------------
# Shared fused 4-way GRU recurrence.
#
# Lane layout (H = hidden):
#   hidden h      : (Bp, 4H)   lanes [0:H]=rnn1-fwd, [H:2H]=rnn2-fwd,
#                              [2H:3H]=rnn1-bwd, [3H:4H]=rnn2-bwd
#   gates gi / gh : (Bp, 12H)  = [r | z | n] slabs, each 4H wide (128 lanes for H=32),
#                              group order inside each slab as above.
# gi_ref already holds the hoisted input gates in *kernel time* order (backward groups'
# timesteps pre-reversed by the wrapper).  Forward outputs go to fwd_ref[t]; backward
# outputs are un-reversed in-kernel via bwd_ref[L-1-t].
# ----------------------------------------------------------------------------
def _gru4_recurrence(gi_ref, whh_ref, bhh_ref, fwd_ref, bwd_ref):
    L, Bp, G3H = gi_ref.shape
    GH = G3H // 3          # 4H
    H = GH // 4

    whh = whh_ref[...]                                       # hoisted weight load
    bhh = jnp.broadcast_to(bhh_ref[...], (Bp, G3H))          # hoisted bias broadcast

    def step(t, h):
        gi = gi_ref[t]                                                    # (Bp, 12H)
        gh = jnp.dot(h.astype(whh.dtype), whh,
                     preferred_element_type=jnp.float32) + bhh            # MXU, f32 acc
        r = _sigmoid(gi[:, 0:GH] + gh[:, 0:GH])
        z = _sigmoid(gi[:, GH:2 * GH] + gh[:, GH:2 * GH])
        n = jnp.tanh(gi[:, 2 * GH:3 * GH] + r * gh[:, 2 * GH:3 * GH])     # b_hn inside r*(.)
        h_new = (1.0 - z) * n + z * h
        fwd_ref[t] = h_new[:, 0:2 * H]           # forward dirs: kernel time == real time
        bwd_ref[L - 1 - t] = h_new[:, 2 * H:]    # backward dirs: un-reverse on store
        return h_new

    jax.lax.fori_loop(0, L, step, jnp.zeros((Bp, GH), jnp.float32),
                      unroll=True if L <= 32 else 8)


# ----------------------------------------------------------------------------
# Kernel 1: middle layer -> emits fused features (fwd slab, bwd slab).
# ----------------------------------------------------------------------------
def gru4_layer_kernel(gi_ref, whh_ref, bhh_ref, fwd_ref, bwd_ref):
    _gru4_recurrence(gi_ref, whh_ref, bhh_ref, fwd_ref, bwd_ref)


def run_gru4_layer(gi, whh, bhh, *, batch_block=None):
    L, Bp, G3H = gi.shape
    GH = G3H // 3
    H = GH // 4
    # batch_block must be a multiple of 8; set to Bp//2 (if >=8) on v7x to use both TCs.
    bb = Bp if batch_block is None else batch_block
    grid = (Bp // bb,)
    feat_spec = pl.BlockSpec((L, bb, 2 * H), lambda i: (0, i, 0))
    fwd, bwd = pl.pallas_call(
        gru4_layer_kernel,
        out_shape=(jax.ShapeDtypeStruct((L, Bp, 2 * H), jnp.float32),
                   jax.ShapeDtypeStruct((L, Bp, 2 * H), jnp.float32)),
        grid=grid,
        in_specs=[pl.BlockSpec((L, bb, G3H), lambda i: (0, i, 0)),
                  pl.BlockSpec((GH, G3H), lambda i: (0, 0)),
                  pl.BlockSpec((1, G3H), lambda i: (0, 0))],
        out_specs=(feat_spec, feat_spec),
        compiler_params=pltpu.CompilerParams(dimension_semantics=("parallel",)),
    )(gi, whh, bhh)
    return fwd, bwd


# ----------------------------------------------------------------------------
# Kernel 2: last layer fused with heads + power constraint.
#   - Linear(2H,1) per branch as VPU broadcast-multiply + lane reduce (no width-1 matmul)
#   - single-pass sum / sum-of-squares for mean & unbiased std (masked to real batch rows)
#   - output (2, L, Bp) channel-major slab, transposed/sliced in the wrapper.
# Last-layer features live only in VMEM scratch (never written to HBM).
# ----------------------------------------------------------------------------
def gru4_head_kernel(b_valid, gi_ref, whh_ref, bhh_ref, whf_ref, whb_ref, bh_ref,
                     out_ref, fwd_scr, bwd_scr):
    L, Bp, _ = gi_ref.shape
    _gru4_recurrence(gi_ref, whh_ref, bhh_ref, fwd_scr, bwd_scr)

    fwd = fwd_scr[...]            # (L, Bp, 2H): lanes [0:H]=rnn1-fwd, [H:2H]=rnn2-fwd
    bwd = bwd_scr[...]            # (L, Bp, 2H): lanes [0:H]=rnn1-bwd, [H:2H]=rnn2-bwd
    whf = whf_ref[...]            # (2, 2H): row 0 -> x_sys head, row 1 -> x_p2 head
    whb = whb_ref[...]

    def head_proj(row):
        wf = whf[row:row + 1, :][None]      # (1, 1, 2H)
        wb = whb[row:row + 1, :][None]
        return jnp.sum(fwd * wf, axis=-1) + jnp.sum(bwd * wb, axis=-1)   # (L, Bp)

    xp1 = _elu(head_proj(0) + bh_ref[0])    # x_sys branch (rnn1, non-interleaved input)
    xp2 = _elu(head_proj(1) + bh_ref[1])    # x_p2 branch (rnn2, interleaved input)

    # power_constraint: global mean / unbiased std over both channels, one fused pass,
    # masked to the real (unpadded) batch rows.
    valid = jax.lax.broadcasted_iota(jnp.int32, (L, Bp), 1) < b_valid
    n = 2.0 * b_valid * L
    xs1 = jnp.where(valid, xp1, 0.0)
    xs2 = jnp.where(valid, xp2, 0.0)
    s1 = jnp.sum(xs1) + jnp.sum(xs2)
    s2 = jnp.sum(xs1 * xs1) + jnp.sum(xs2 * xs2)
    mean = s1 / n
    var = (s2 - s1 * s1 / n) / (n - 1.0)      # unbiased, matches torch.std
    inv_std = 1.0 / jnp.sqrt(var)

    out_ref[0] = (xp1 - mean) * inv_std       # channel 0: x_sys
    out_ref[1] = (xp2 - mean) * inv_std       # channel 1: x_p2


def run_gru4_head(gi, whh, bhh, whf, whb, bh, b_valid):
    L, Bp, G3H = gi.shape
    GH = G3H // 3
    H = GH // 4
    vmem = pl.BlockSpec(memory_space=pltpu.MemorySpace.VMEM)
    return pl.pallas_call(
        functools.partial(gru4_head_kernel, b_valid),
        out_shape=jax.ShapeDtypeStruct((2, L, Bp), jnp.float32),
        in_specs=[vmem, vmem, vmem, vmem, vmem,
                  pl.BlockSpec(memory_space=pltpu.MemorySpace.SMEM)],
        out_specs=vmem,
        scratch_shapes=[pltpu.VMEM((L, Bp, 2 * H), jnp.float32),
                        pltpu.VMEM((L, Bp, 2 * H), jnp.float32)],
    )(gi, whh, bhh, whf, whb, bh)


# ----------------------------------------------------------------------------
# Wrapper-side weight / activation packing (hoisted, fused by XLA).
# ----------------------------------------------------------------------------
def precompute_gi(x_groups, group_params, hidden):
    """Hoisted input->hidden gates for all 4 directions of one layer: (L, Bp, 12H).

    Backward groups' timesteps are reversed here (the reverse fuses into this XLA
    computation, so there are no standalone HBM flip copies)."""
    reverse = (False, False, True, True)          # rnn1f, rnn2f, rnn1b, rnn2b
    slabs = [[], [], []]
    for x_g, (w_ih, _, b_ih, _), rev in zip(x_groups, group_params, reverse):
        gi_g = jnp.einsum('lbi,oi->lbo', x_g, w_ih) + b_ih     # (L, Bp, 3H)
        if rev:
            gi_g = jnp.flip(gi_g, axis=0)                      # kernel-time order
        for q in range(3):                                     # r, z, n slabs
            slabs[q].append(gi_g[..., q * hidden:(q + 1) * hidden])
    return jnp.concatenate(slabs[0] + slabs[1] + slabs[2], axis=-1)


def combine_recurrent_weights(group_params, hidden):
    """Block-diagonal W_hh^T (4H, 12H) + b_hh (1, 12H), matching the gate-slab layout."""
    GH = 4 * hidden
    W = jnp.zeros((GH, 3 * GH), jnp.float32)
    b = jnp.zeros((3 * GH,), jnp.float32)
    for g, (_, w_hh, _, b_hh) in enumerate(group_params):
        for q in range(3):
            W = W.at[g * hidden:(g + 1) * hidden,
                     q * GH + g * hidden:q * GH + (g + 1) * hidden].set(
                         w_hh[q * hidden:(q + 1) * hidden, :].T)
            b = b.at[q * GH + g * hidden:q * GH + (g + 1) * hidden].set(
                b_hh[q * hidden:(q + 1) * hidden])
    return W.astype(MXU_DTYPE), b.reshape(1, 3 * GH)


def combine_head_weights(w1, b1, w2, b2, hidden):
    """Scatter the two Linear(2H,1) heads onto the fused fwd/bwd feature lanes."""
    H = hidden
    whf = jnp.zeros((2, 2 * H), jnp.float32)
    whb = jnp.zeros((2, 2 * H), jnp.float32)
    whf = whf.at[0, 0:H].set(w1[0, 0:H])          # rnn1 fwd features: fwd-slab lanes [0:H]
    whb = whb.at[0, 0:H].set(w1[0, H:2 * H])      # rnn1 bwd features: bwd-slab lanes [0:H]
    whf = whf.at[1, H:2 * H].set(w2[0, 0:H])      # rnn2 fwd
    whb = whb.at[1, H:2 * H].set(w2[0, H:2 * H])  # rnn2 bwd
    bh = jnp.stack([b1[0], b2[0]]).astype(jnp.float32)
    return whf, whb, bh


# ----------------------------------------------------------------------------
# Full forward (ENC_turbofy_rate2.forward)
# ----------------------------------------------------------------------------
def enc_turbofy_rate2_forward(inputs, params, p_array, *, batch_block=None):
    B, L, _ = inputs.shape
    H = params["rnn1"][0][0][1].shape[1]            # w_hh: (3H, H)
    Bp = max(8, ((B + 7) // 8) * 8)                 # pad batch to whole sublane tiles

    x1 = inputs.astype(jnp.float32)                 # systematic branch input
    x2 = jnp.take(x1, p_array, axis=1)              # Interleaver: permute the time axis

    def to_time_major(x):
        x = jnp.transpose(x, (1, 0, 2))             # (L, B, 1)
        return jnp.pad(x, ((0, 0), (0, Bp - B), (0, 0)))

    x1_tm, x2_tm = to_time_major(x1), to_time_major(x2)

    num_layers = len(params["rnn1"])
    feat_fwd = feat_bwd = None
    codes_clb = None
    for l in range(num_layers):
        p1f, p1b = params["rnn1"][l]
        p2f, p2b = params["rnn2"][l]
        gp = [p1f, p2f, p1b, p2b]                   # group order: rnn1f, rnn2f, rnn1b, rnn2b
        if l == 0:
            xg = [x1_tm, x2_tm, x1_tm, x2_tm]
        else:
            # PyTorch bi-GRU: layer l input = concat([fwd_out, bwd_out]) of the same branch.
            in1 = jnp.concatenate([feat_fwd[..., 0:H], feat_bwd[..., 0:H]], axis=-1)
            in2 = jnp.concatenate([feat_fwd[..., H:2 * H], feat_bwd[..., H:2 * H]], axis=-1)
            xg = [in1, in2, in1, in2]
        gi = precompute_gi(xg, gp, H)                             # (L, Bp, 12H)
        whh, bhh = combine_recurrent_weights(gp, H)               # (4H, 12H), (1, 12H)
        if l < num_layers - 1:
            feat_fwd, feat_bwd = run_gru4_layer(gi, whh, bhh, batch_block=batch_block)
        else:
            whf, whb, bh = combine_head_weights(params["lin1_w"], params["lin1_b"],
                                                params["lin2_w"], params["lin2_b"], H)
            codes_clb = run_gru4_head(gi, whh, bhh, whf, whb, bh, B)   # (2, L, Bp)

    # TODO(synk): STEQuantize (block_norm_ste) and the stateful precompute_norm_stats
    # running average are not exercised under the assumed default args.
    return jnp.transpose(codes_clb, (2, 1, 0))[:B]                # (B, L, 2)


# ----------------------------------------------------------------------------
# Deterministic parameter init (PyTorch GRU / Linear shapes and init ranges)
# ----------------------------------------------------------------------------
def init_params(key, num_layers, hidden):
    def init_gru(key, input_size):
        layers = []
        bound = 1.0 / math.sqrt(hidden)
        for l in range(num_layers):
            in_sz = input_size if l == 0 else 2 * hidden
            dirs = []
            for _ in range(2):  # fwd, bwd
                key, k1, k2, k3, k4 = jax.random.split(key, 5)
                dirs.append((
                    jax.random.uniform(k1, (3 * hidden, in_sz), jnp.float32, -bound, bound),
                    jax.random.uniform(k2, (3 * hidden, hidden), jnp.float32, -bound, bound),
                    jax.random.uniform(k3, (3 * hidden,), jnp.float32, -bound, bound),
                    jax.random.uniform(k4, (3 * hidden,), jnp.float32, -bound, bound),
                ))
            layers.append(tuple(dirs))
        return layers, key

    rnn1, key = init_gru(key, 1)
    rnn2, key = init_gru(key, 1)
    bound = 1.0 / math.sqrt(2 * hidden)
    key, k1, k2, k3, k4 = jax.random.split(key, 5)
    return {
        "rnn1": rnn1,
        "rnn2": rnn2,
        "lin1_w": jax.random.uniform(k1, (1, 2 * hidden), jnp.float32, -bound, bound),
        "lin1_b": jax.random.uniform(k2, (1,), jnp.float32, -bound, bound),
        "lin2_w": jax.random.uniform(k3, (1, 2 * hidden), jnp.float32, -bound, bound),
        "lin2_b": jax.random.uniform(k4, (1,), jnp.float32, -bound, bound),
    }


if __name__ == "__main__":
    BATCH, BLOCK_LEN, HIDDEN, NUM_LAYERS = 2, 8, 32, 2

    key = jax.random.PRNGKey(0)
    key, k_in, k_perm = jax.random.split(key, 3)

    inputs = jax.random.bernoulli(k_in, 0.5, (BATCH, BLOCK_LEN, 1)).astype(jnp.float32)
    p_array = jax.random.permutation(k_perm, BLOCK_LEN)
    params = init_params(key, NUM_LAYERS, HIDDEN)

    fwd = jax.jit(lambda x: enc_turbofy_rate2_forward(x, params, p_array))
    codes = jax.block_until_ready(fwd(inputs))

    assert codes.shape == (BATCH, BLOCK_LEN, 2)
    assert bool(jnp.all(jnp.isfinite(codes)))
    print("KERNEL_OK")
</pallas_src>

<mosaic_0001>
module attributes {stable_mosaic.version = 11 : i64} {
  func.func @gru4_layer_kernel(%arg0: i32, %arg1: memref<8x8x384xf32, #tpu.memory_space<vmem>>, %arg2: memref<128x384xbf16, #tpu.memory_space<vmem>>, %arg3: memref<1x384xf32, #tpu.memory_space<vmem>>, %arg4: memref<8x8x64xf32, #tpu.memory_space<vmem>>, %arg5: memref<8x8x64xf32, #tpu.memory_space<vmem>>) attributes {dimension_semantics = [#tpu.dimension_semantics<parallel>], iteration_bounds = array<i64: 1>, scalar_prefetch = 0 : i64, scratch_operands = 0 : i64, tpu.core_type = #tpu.core_type<tc>, window_params = [{transform_indices = @transform_0, window_bounds = array<i64: 8, 8, 384>}, {pipeline_mode = #tpu.pipeline_mode<synchronous>, transform_indices = @transform_1, window_bounds = array<i64: 128, 384>}, {pipeline_mode = #tpu.pipeline_mode<synchronous>, transform_indices = @transform_2, window_bounds = array<i64: 1, 384>}, {transform_indices = @transform_3, window_bounds = array<i64: 8, 8, 64>}, {transform_indices = @transform_4, window_bounds = array<i64: 8, 8, 64>}]} {
    %c0 = arith.constant 0 : index
    %c0_0 = arith.constant 0 : index
    %0 = vector.load %arg2[%c0, %c0_0] : memref<128x384xbf16, #tpu.memory_space<vmem>>, vector<128x384xbf16>
    %c0_1 = arith.constant 0 : index
    %c0_2 = arith.constant 0 : index
    %1 = vector.load %arg3[%c0_1, %c0_2] : memref<1x384xf32, #tpu.memory_space<vmem>>, vector<1x384xf32>
    %2 = vector.shape_cast %1 : vector<1x384xf32> to vector<1x384xf32>
    %3 = vector.broadcast %2 : vector<1x384xf32> to vector<8x384xf32>
    %cst = arith.constant 0.000000e+00 : f32
    %4 = vector.broadcast %cst : f32 to vector<8x128xf32>
    %c0_i32 = arith.constant 0 : i32
    %5 = arith.index_cast %c0_i32 : i32 to index
    %c0_3 = arith.constant 0 : index
    %c0_4 = arith.constant 0 : index
    %6 = vector.load %arg1[%5, %c0_3, %c0_4] : memref<8x8x384xf32, #tpu.memory_space<vmem>>, vector<1x8x384xf32>
    %7 = vector.shape_cast %6 : vector<1x8x384xf32> to vector<8x384xf32>
    %8 = arith.truncf %4 : vector<8x128xf32> to vector<8x128xbf16>
    %cst_5 = arith.constant dense<0.000000e+00> : vector<8x384xf32>
    %9 = tpu.matmul %8, %0, %cst_5 {dimension_numbers = #tpu.dot_dimension_numbers<[1], [0], [0], [1], [0, 0, 1, 1], [], []>} : vector<8x128xbf16>, vector<128x384xbf16>, vector<8x384xf32> -> vector<8x384xf32>
    %10 = arith.addf %9, %3 : vector<8x384xf32>
    %11 = vector.extract_strided_slice %7 {offsets = [0, 0], sizes = [8, 128], strides = [1, 1]} : vector<8x384xf32> to vector<8x128xf32>
    %12 = vector.extract_strided_slice %10 {offsets = [0, 0], sizes = [8, 128], strides = [1, 1]} : vector<8x384xf32> to vector<8x128xf32>
    %13 = arith.addf %11, %12 : vector<8x128xf32>
    %cst_6 = arith.constant 0.000000e+00 : f32
    %14 = vector.broadcast %cst_6 : f32 to vector<8x128xf32>
    %15 = arith.subf %14, %13 : vector<8x128xf32>
    %16 = math.exp %15 : vector<8x128xf32>
    %cst_7 = arith.constant 1.000000e+00 : f32
    %17 = vector.broadcast %cst_7 : f32 to vector<8x128xf32>
    %18 = arith.addf %17, %16 : vector<8x128xf32>
    %19 = tpu.reciprocal %18 {approx = true} : vector<8x128xf32> -> vector<8x128xf32>
    %20 = vector.extract_strided_slice %7 {offsets = [0, 128], sizes = [8, 128], strides = [1, 1]} : vector<8x384xf32> to vector<8x128xf32>
    %21 = vector.extract_strided_slice %10 {offsets = [0, 128], sizes = [8, 128], strides = [1, 1]} : vector<8x384xf32> to vector<8x128xf32>
    %22 = arith.addf %20, %21 : vector<8x128xf32>
    %cst_8 = arith.constant 0.000000e+00 : f32
    %23 = vector.broadcast %cst_8 : f32 to vector<8x128xf32>
    %24 = arith.subf %23, %22 : vector<8x128xf32>
    %25 = math.exp %24 : vector<8x128xf32>
    %cst_9 = arith.constant 1.000000e+00 : f32
    %26 = vector.broadcast %cst_9 : f32 to vector<8x128xf32>
    %27 = arith.addf %26, %25 : vector<8x128xf32>
    %28 = tpu.reciprocal %27 {approx = true} : vector<8x128xf32> -> vector<8x128xf32>
    %29 = vector.extract_strided_slice %7 {offsets = [0, 256], sizes = [8, 128], strides = [1, 1]} : vector<8x384xf32> to vector<8x128xf32>
    %30 = vector.extract_strided_slice %10 {offsets = [0, 256], sizes = [8, 128], strides = [1, 1]} : vector<8x384xf32> to vector<8x128xf32>
    %31 = arith.mulf %19, %30 : vector<8x128xf32>
    %32 = arith.addf %29, %31 : vector<8x128xf32>
    %33 = math.tanh %32 : vector<8x128xf32>
    %cst_10 = arith.constant 1.000000e+00 : f32
    %34 = vector.broadcast %cst_10 : f32 to vector<8x128xf32>
    %35 = arith.subf %34, %28 : vector<8x128xf32>
    %36 = arith.mulf %35, %33 : vector<8x128xf32>
    %37 = arith.mulf %28, %4 : vector<8x128xf32>
    %38 = arith.addf %36, %37 : vector<8x128xf32>
    %39 = vector.extract_strided_slice %38 {offsets = [0, 0], sizes = [8, 64], strides = [1, 1]} : vector<8x128xf32> to vector<8x64xf32>
    %40 = arith.index_cast %c0_i32 : i32 to index
    %c0_11 = arith.constant 0 : index
    %c0_12 = arith.constant 0 : index
    %41 = vector.load %arg4[%40, %c0_11, %c0_12] : memref<8x8x64xf32, #tpu.memory_space<vmem>>, vector<1x8x64xf32>
    %42 = vector.shape_cast %41 : vector<1x8x64xf32> to vector<8x64xf32>
    %43 = vector.shape_cast %39 : vector<8x64xf32> to vector<1x8x64xf32>
    tpu.vector_store %arg4[%40, %c0_11, %c0_12], %43 {strides = array<i32>} : memref<8x8x64xf32, #tpu.memory_space<vmem>>, vector<1x8x64xf32>,
    %44 = vector.extract_strided_slice %38 {offsets = [0, 64], sizes = [8, 64], strides = [1, 1]} : vector<8x128xf32> to vector<8x64xf32>
    %c7_i32 = arith.constant 7 : i32
    %45 = arith.subi %c7_i32, %c0_i32 : i32
    %46 = arith.index_cast %45 : i32 to index
    %c0_13 = arith.constant 0 : index
    %c0_14 = arith.constant 0 : index
    %47 = vector.load %arg5[%46, %c0_13, %c0_14] : memref<8x8x64xf32, #tpu.memory_space<vmem>>, vector<1x8x64xf32>
    %48 = vector.shape_cast %47 : vector<1x8x64xf32> to vector<8x64xf32>
    %49 = vector.shape_cast %44 : vector<8x64xf32> to vector<1x8x64xf32>
    tpu.vector_store %arg5[%46, %c0_13, %c0_14], %49 {strides = array<i32>} : memref<8x8x64xf32, #tpu.memory_space<vmem>>, vector<1x8x64xf32>,
    %c1_i32 = arith.constant 1 : i32
    %50 = arith.index_cast %c1_i32 : i32 to index
    %c0_15 = arith.constant 0 : index
    %c0_16 = arith.constant 0 : index
    %51 = vector.load %arg1[%50, %c0_15, %c0_16] : memref<8x8x384xf32, #tpu.memory_space<vmem>>, vector<1x8x384xf32>
    %52 = vector.shape_cast %51 : vector<1x8x384xf32> to vector<8x384xf32>
    %53 = arith.truncf %38 : vector<8x128xf32> to vector<8x128xbf16>
    %cst_17 = arith.constant dense<0.000000e+00> : vector<8x384xf32>
    %54 = tpu.matmul %53, %0, %cst_17 {dimension_numbers = #tpu.dot_dimension_numbers<[1], [0], [0], [1], [0, 0, 1, 1], [], []>} : vector<8x128xbf16>, vector<128x384xbf16>, vector<8x384xf32> -> vector<8x384xf32>
    %55 = arith.addf %54, %3 : vector<8x384xf32>
    %56 = vector.extract_strided_slice %52 {offsets = [0, 0], sizes = [8, 128], strides = [1, 1]} : vector<8x384xf32> to vector<8x128xf32>
    %57 = vector.extract_strided_slice %55 {offsets = [0, 0], sizes = [8, 128], strides = [1, 1]} : vector<8x384xf32> to vector<8x128xf32>
    %58 = arith.addf %56, %57 : vector<8x128xf32>
    %cst_18 = arith.constant 0.000000e+00 : f32
    %59 = vector.broadcast %cst_18 : f32 to vector<8x128xf32>
    %60 = arith.subf %59, %58 : vector<8x128xf32>
    %61 = math.exp %60 : vector<8x128xf32>
    %cst_19 = arith.constant 1.000000e+00 : f32
    %62 = vector.broadcast %cst_19 : f32 to vector<8x128xf32>
    %63 = arith.addf %62, %61 : vector<8x128xf32>
    %64 = tpu.reciprocal %63 {approx = true} : vector<8x128xf32> -> vector<8x128xf32>
    %65 = vector.extract_strided_slice %52 {offsets = [0, 128], sizes = [8, 128], strides = [1, 1]} : vector<8x384xf32> to vector<8x128xf32>
    %66 = vector.extract_strided_slice %55 {offsets = [0, 128], sizes = [8, 128], strides = [1, 1]} : vector<8x384xf32> to vector<8x128xf32>
    %67 = arith.addf %65, %66 : vector<8x128xf32>
    %cst_20 = arith.constant 0.000000e+00 : f32
    %68 = vector.broadcast %cst_20 : f32 to vector<8x128xf32>
    %69 = arith.subf %68, %67 : vector<8x128xf32>
    %70 = math.exp %69 : vector<8x128xf32>
    %cst_21 = arith.constant 1.000000e+00 : f32
    %71 = vector.broadcast %cst_21 : f32 to vector<8x128xf32>
    %72 = arith.addf %71, %70 : vector<8x128xf32>
    %73 = tpu.reciprocal %72 {approx = true} : vector<8x128xf32> -> vector<8x128xf32>
    %74 = vector.extract_strided_slice %52 {offsets = [0, 256], sizes = [8, 128], strides = [1, 1]} : vector<8x384xf32> to vector<8x128xf32>
    %75 = vector.extract_strided_slice %55 {offsets = [0, 256], sizes = [8, 128], strides = [1, 1]} : vector<8x384xf32> to vector<8x128xf32>
    %76 = arith.mulf %64, %75 : vector<8x128xf32>
    %77 = arith.addf %74, %76 : vector<8x128xf32>
    %78 = math.tanh %77 : vector<8x128xf32>
    %cst_22 = arith.constant 1.000000e+00 : f32
    %79 = vector.broadcast %cst_22 : f32 to vector<8x128xf32>
    %80 = arith.subf %79, %73 : vector<8x128xf32>
    %81 = arith.mulf %80, %78 : vector<8x128xf32>
    %82 = arith.mulf %73, %38 : vector<8x128xf32>
    %83 = arith.addf %81, %82 : vector<8x128xf32>
    %84 = vector.extract_strided_slice %83 {offsets = [0, 0], sizes = [8, 64], strides = [1, 1]} : vector<8x128xf32> to vector<8x64xf32>
    %85 = arith.index_cast %c1_i32 : i32 to index
    %c0_23 = arith.constant 0 : index
    %c0_24 = arith.constant 0 : index
    %86 = vector.load %arg4[%85, %c0_23, %c0_24] : memref<8x8x64xf32, #tpu.memory_space<vmem>>, vector<1x8x64xf32>
    %87 = vector.shape_cast %86 : vector<1x8x64xf32> to vector<8x64xf32>
    %88 = vector.shape_cast %84 : vector<8x64xf32> to vector<1x8x64xf32>
    tpu.vector_store %arg4[%85, %c0_23, %c0_24], %88 {strides = array<i32>} : memref<8x8x64xf32, #tpu.memory_space<vmem>>, vector<1x8x64xf32>,
    %89 = vector.extract_strided_slice %83 {offsets = [0, 64], sizes = [8, 64], strides = [1, 1]} : vector<8x128xf32> to vector<8x64xf32>
    %c7_i32_25 = arith.constant 7 : i32
    %90 = arith.subi %c7_i32_25, %c1_i32 : i32
    %91 = arith.index_cast %90 : i32 to index
    %c0_26 = arith.constant 0 : index
    %c0_27 = arith.constant 0 : index
    %92 = vector.load %arg5[%91, %c0_26, %c0_27] : memref<8x8x64xf32, #tpu.memory_space<vmem>>, vector<1x8x64xf32>
    %93 = vector.shape_cast %92 : vector<1x8x64xf32> to vector<8x64xf32>
    %94 = vector.shape_cast %89 : vector<8x64xf32> to vector<1x8x64xf32>
    tpu.vector_store %arg5[%91, %c0_26, %c0_27], %94 {strides = array<i32>} : memref<8x8x64xf32, #tpu.memory_space<vmem>>, vector<1x8x64xf32>,
    %c2_i32 = arith.constant 2 : i32
    %95 = arith.index_cast %c2_i32 : i32 to index
    %c0_28 = arith.constant 0 : index
    %c0_29 = arith.constant 0 : index
    %96 = vector.load %arg1[%95, %c0_28, %c0_29] : memref<8x8x384xf32, #tpu.memory_space<vmem>>, vector<1x8x384xf32>
    %97 = vector.shape_cast %96 : vector<1x8x384xf32> to vector<8x384xf32>
    %98 = arith.truncf %83 : vector<8x128xf32> to vector<8x128xbf16>
    %cst_30 = arith.constant dense<0.000000e+00> : vector<8x384xf32>
    %99 = tpu.matmul %98, %0, %cst_30 {dimension_numbers = #tpu.dot_dimension_numbers<[1], [0], [0], [1], [0, 0, 1, 1], [], []>} : vector<8x128xbf16>, vector<128x384xbf16>, vector<8x384xf32> -> vector<8x384xf32>
    %100 = arith.addf %99, %3 : vector<8x384xf32>
    %101 = vector.extract_strided_slice %97 {offsets = [0, 0], sizes = [8, 128], strides = [1, 1]} : vector<8x384xf32> to vector<8x128xf32>
    %102 = vector.extract_strided_slice %100 {offsets = [0, 0], sizes = [8, 128], strides = [1, 1]} : vector<8x384xf32> to vector<8x128xf32>
    %103 = arith.addf %101, %102 : vector<8x128xf32>
    %cst_31 = arith.constant 0.000000e+00 : f32
    %104 = vector.broadcast %cst_31 : f32 to vector<8x128xf32>
    %105 = arith.subf %104, %103 : vector<8x128xf32>
    %106 = math.exp %105 : vector<8x128xf32>
    %cst_32 = arith.constant 1.000000e+00 : f32
    %107 = vector.broadcast %cst_32 : f32 to vector<8x128xf32>
    %108 = arith.addf %107, %106 : vector<8x128xf32>
    %109 = tpu.reciprocal %108 {approx = true} : vector<8x128xf32> -> vector<8x128xf32>
    %110 = vector.extract_strided_slice %97 {offsets = [0, 128], sizes = [8, 128], strides = [1, 1]} : vector<8x384xf32> to vector<8x128xf32>
    %111 = vector.extract_strided_slice %100 {offsets = [0, 128], sizes = [8, 128], strides = [1, 1]} : vector<8x384xf32> to vector<8x128xf32>
    %112 = arith.addf %110, %111 : vector<8x128xf32>
    %cst_33 = arith.constant 0.000000e+00 : f32
    %113 = vector.broadcast %cst_33 : f32 to vector<8x128xf32>
    %114 = arith.subf %113, %112 : vector<8x128xf32>
    %115 = math.exp %114 : vector<8x128xf32>
    %cst_34 = arith.constant 1.000000e+00 : f32
    %116 = vector.broadcast %cst_34 : f32 to vector<8x128xf32>
    %117 = arith.addf %116, %115 : vector<8x128xf32>
    %118 = tpu.reciprocal %117 {approx = true} : vector<8x128xf32> -> vector<8x128xf32>
    %119 = vector.extract_strided_slice %97 {offsets = [0, 256], sizes = [8, 128], strides = [1, 1]} : vector<8x384xf32> to vector<8x128xf32>
    %120 = vector.extract_strided_slice %100 {offsets = [0, 256], sizes = [8, 128], strides = [1, 1]} : vector<8x384xf32> to vector<8x128xf32>
    %121 = arith.mulf %109, %120 : vector<8x128xf32>
    %122 = arith.addf %119, %121 : vector<8x128xf32>
    %123 = math.tanh %122 : vector<8x128xf32>
    %cst_35 = arith.constant 1.000000e+00 : f32
    %124 = vector.broadcast %cst_35 : f32 to vector<8x128xf32>
    %125 = arith.subf %124, %118 : vector<8x128xf32>
    %126 = arith.mulf %125, %123 : vector<8x128xf32>
    %127 = arith.mulf %118, %83 : vector<8x128xf32>
    %128 = arith.addf %126, %127 : vector<8x128xf32>
    %129 = vector.extract_strided_slice %128 {offsets = [0, 0], sizes = [8, 64], strides = [1, 1]} : vector<8x128xf32> to vector<8x64xf32>
    %130 = arith.index_cast %c2_i32 : i32 to index
    %c0_36 = arith.constant 0 : index
    %c0_37 = arith.constant 0 : index
    %131 = vector.load %arg4[%130, %c0_36, %c0_37] : memref<8x8x64xf32, #tpu.memory_space<vmem>>, vector<1x8x64xf32>
    %132 = vector.shape_cast %131 : vector<1x8x64xf32> to vector<8x64xf32>
    %133 = vector.shape_cast %129 : vector<8x64xf32> to vector<1x8x64xf32>
    tpu.vector_store %arg4[%130, %c0_36, %c0_37], %133 {strides = array<i32>} : memref<8x8x64xf32, #tpu.memory_space<vmem>>, vector<1x8x64xf32>,
    %134 = vector.extract_strided_slice %128 {offsets = [0, 64], sizes = [8, 64], strides = [1, 1]} : vector<8x128xf32> to vector<8x64xf32>
    %c7_i32_38 = arith.constant 7 : i32
    %135 = arith.subi %c7_i32_38, %c2_i32 : i32
    %136 = arith.index_cast %135 : i32 to index
    %c0_39 = arith.constant 0 : index
    %c0_40 = arith.constant 0 : index
    %137 = vector.load %arg5[%136, %c0_39, %c0_40] : memref<8x8x64xf32, #tpu.memory_space<vmem>>, vector<1x8x64xf32>
    %138 = vector.shape_cast %137 : vector<1x8x64xf32> to vector<8x64xf32>
    %139 = vector.shape_cast %134 : vector<8x64xf32> to vector<1x8x64xf32>
    tpu.vector_store %arg5[%136, %c0_39, %c0_40], %139 {strides = array<i32>} : memref<8x8x64xf32, #tpu.memory_space<vmem>>, vector<1x8x64xf32>,
    %c3_i32 = arith.constant 3 : i32
    %140 = arith.index_cast %c3_i32 : i32 to index
    %c0_41 = arith.constant 0 : index
    %c0_42 = arith.constant 0 : index
    %141 = vector.load %arg1[%140, %c0_41, %c0_42] : memref<8x8x384xf32, #tpu.memory_space<vmem>>, vector<1x8x384xf32>
    %142 = vector.shape_cast %141 : vector<1x8x384xf32> to vector<8x384xf32>
    %143 = arith.truncf %128 : vector<8x128xf32> to vector<8x128xbf16>
    %cst_43 = arith.constant dense<0.000000e+00> : vector<8x384xf32>
    %144 = tpu.matmul %143, %0, %cst_43 {dimension_numbers = #tpu.dot_dimension_numbers<[1], [0], [0], [1], [0, 0, 1, 1], [], []>} : vector<8x128xbf16>, vector<128x384xbf16>, vector<8x384xf32> -> vector<8x384xf32>
    %145 = arith.addf %144, %3 : vector<8x384xf32>
    %146 = vector.extract_strided_slice %142 {offsets = [0, 0], sizes = [8, 128], strides = [1, 1]} : vector<8x384xf32> to vector<8x128xf32>
    %147 = vector.extract_strided_slice %145 {offsets = [0, 0], sizes = [8, 128], strides = [1, 1]} : vector<8x384xf32> to vector<8x128xf32>
    %148 = arith.addf %146, %147 : vector<8x128xf32>
    %cst_44 = arith.constant 0.000000e+00 : f32
    %149 = vector.broadcast %cst_44 : f32 to vector<8x128xf32>
    %150 = arith.subf %149, %148 : vector<8x128xf32>
    %151 = math.exp %150 : vector<8x128xf32>
    %cst_45 = arith.constant 1.000000e+00 : f32
    %152 = vector.broadcast %cst_45 : f32 to vector<8x128xf32>
    %153 = arith.addf %152, %151 : vector<8x128xf32>
    %154 = tpu.reciprocal %153 {approx = true} : vector<8x128xf32> -> vector<8x128xf32>
    %155 = vector.extract_strided_slice %142 {offsets = [0, 128], sizes = [8, 128], strides = [1, 1]} : vector<8x384xf32> to vector<8x128xf32>
    %156 = vector.extract_strided_slice %145 {offsets = [0, 128], sizes = [8, 128], strides = [1, 1]} : vector<8x384xf32> to vector<8x128xf32>
    %157 = arith.addf %155, %156 : vector<8x128xf32>
    %cst_46 = arith.constant 0.000000e+00 : f32
    %158 = vector.broadcast %cst_46 : f32 to vector<8x128xf32>
    %159 = arith.subf %158, %157 : vector<8x128xf32>
    %160 = math.exp %159 : vector<8x128xf32>
    %cst_47 = arith.constant 1.000000e+00 : f32
    %161 = vector.broadcast %cst_47 : f32 to vector<8x128xf32>
    %162 = arith.addf %161, %160 : vector<8x128xf32>
    %163 = tpu.reciprocal %162 {approx = true} : vector<8x128xf32> -> vector<8x128xf32>
    %164 = vector.extract_strided_slice %142 {offsets = [0, 256], sizes = [8, 128], strides = [1, 1]} : vector<8x384xf32> to vector<8x128xf32>
    %165 = vector.extract_strided_slice %145 {offsets = [0, 256], sizes = [8, 128], strides = [1, 1]} : vector<8x384xf32> to vector<8x128xf32>
    %166 = arith.mulf %154, %165 : vector<8x128xf32>
    %167 = arith.addf %164, %166 : vector<8x128xf32>
    %168 = math.tanh %167 : vector<8x128xf32>
    %cst_48 = arith.constant 1.000000e+00 : f32
    %169 = vector.broadcast %cst_48 : f32 to vector<8x128xf32>
    %170 = arith.subf %169, %163 : vector<8x128xf32>
    %171 = arith.mulf %170, %168 : vector<8x128xf32>
    %172 = arith.mulf %163, %128 : vector<8x128xf32>
    %173 = arith.addf %171, %172 : vector<8x128xf32>
    %174 = vector.extract_strided_slice %173 {offsets = [0, 0], sizes = [8, 64], strides = [1, 1]} : vector<8x128xf32> to vector<8x64xf32>
    %175 = arith.index_cast %c3_i32 : i32 to index
    %c0_49 = arith.constant 0 : index
    %c0_50 = arith.constant 0 : index
    %176 = vector.load %arg4[%175, %c0_49, %c0_50] : memref<8x8x64xf32, #tpu.memory_space<vmem>>, vector<1x8x64xf32>
    %177 = vector.shape_cast %176 : vector<1x8x64xf32> to vector<8x64xf32>
    %178 = vector.shape_cast %174 : vector<8x64xf32> to vector<1x8x64xf32>
    tpu.vector_store %arg4[%175, %c0_49, %c0_50], %178 {strides = array<i32>} : memref<8x8x64xf32, #tpu.memory_space<vmem>>, vector<1x8x64xf32>,
    %179 = vector.extract_strided_slice %173 {offsets = [0, 64], sizes = [8, 64], strides = [1, 1]} : vector<8x128xf32> to vector<8x64xf32>
    %c7_i32_51 = arith.constant 7 : i32
    %180 = arith.subi %c7_i32_51, %c3_i32 : i32
    %181 = arith.index_cast %180 : i32 to index
    %c0_52 = arith.constant 0 : index
    %c0_53 = arith.constant 0 : index
    %182 = vector.load %arg5[%181, %c0_52, %c0_53] : memref<8x8x64xf32, #tpu.memory_space<vmem>>, vector<1x8x64xf32>
    %183 = vector.shape_cast %182 : vector<1x8x64xf32> to vector<8x64xf32>
    %184 = vector.shape_cast %179 : vector<8x64xf32> to vector<1x8x64xf32>
    tpu.vector_store %arg5[%181, %c0_52, %c0_53], %184 {strides = array<i32>} : memref<8x8x64xf32, #tpu.memory_space<vmem>>, vector<1x8x64xf32>,
    %c4_i32 = arith.constant 4 : i32
    %185 = arith.index_cast %c4_i32 : i32 to index
    %c0_54 = arith.constant 0 : index
    %c0_55 = arith.constant 0 : index
    %186 = vector.load %arg1[%185, %c0_54, %c0_55] : memref<8x8x384xf32, #tpu.memory_space<vmem>>, vector<1x8x384xf32>
    %187 = vector.shape_cast %186 : vector<1x8x384xf32> to vector<8x384xf32>
    %188 = arith.truncf %173 : vector<8x128xf32> to vector<8x128xbf16>
    %cst_56 = arith.constant dense<0.000000e+00> : vector<8x384xf32>
    %189 = tpu.matmul %188, %0, %cst_56 {dimension_numbers = #tpu.dot_dimension_numbers<[1], [0], [0], [1], [0, 0, 1, 1], [], []>} : vector<8x128xbf16>, vector<128x384xbf16>, vector<8x384xf32> -> vector<8x384xf32>
    %190 = arith.addf %189, %3 : vector<8x384xf32>
    %191 = vector.extract_strided_slice %187 {offsets = [0, 0], sizes = [8, 128], strides = [1, 1]} : vector<8x384xf32> to vector<8x128xf32>
    %192 = vector.extract_strided_slice %190 {offsets = [0, 0], sizes = [8, 128], strides = [1, 1]} : vector<8x384xf32> to vector<8x128xf32>
    %193 = arith.addf %191, %192 : vector<8x128xf32>
    %cst_57 = arith.constant 0.000000e+00 : f32
    %194 = vector.broadcast %cst_57 : f32 to vector<8x128xf32>
    %195 = arith.subf %194, %193 : vector<8x128xf32>
    %196 = math.exp %195 : vector<8x128xf32>
    %cst_58 = arith.constant 1.000000e+00 : f32
    %197 = vector.broadcast %cst_58 : f32 to vector<8x128xf32>
    %198 = arith.addf %197, %196 : vector<8x128xf32>
    %199 = tpu.reciprocal %198 {approx = true} : vector<8x128xf32> -> vector<8x128xf32>
    %200 = vector.extract_strided_slice %187 {offsets = [0, 128], sizes = [8, 128], strides = [1, 1]} : vector<8x384xf32> to vector<8x128xf32>
    %201 = vector.extract_strided_slice %190 {offsets = [0, 128], sizes = [8, 128], strides = [1, 1]} : vector<8x384xf32> to vector<8x128xf32>
    %202 = arith.addf %200, %201 : vector<8x128xf32>
    %cst_59 = arith.constant 0.000000e+00 : f32
    %203 = vector.broadcast %cst_59 : f32 to vector<8x128xf32>
    %204 = arith.subf %203, %202 : vector<8x128xf32>
    %205 = math.exp %204 : vector<8x128xf32>
    %cst_60 = arith.constant 1.000000e+00 : f32
    %206 = vector.broadcast %cst_60 : f32 to vector<8x128xf32>
    %207 = arith.addf %206, %205 : vector<8x128xf32>
    %208 = tpu.reciprocal %207 {approx = true} : vector<8x128xf32> -> vector<8x128xf32>
    %209 = vector.extract_strided_slice %187 {offsets = [0, 256], sizes = [8, 128], strides = [1, 1]} : vector<8x384xf32> to vector<8x128xf32>
    %210 = vector.extract_strided_slice %190 {offsets = [0, 256], sizes = [8, 128], strides = [1, 1]} : vector<8x384xf32> to vector<8x128xf32>
    %211 = arith.mulf %199, %210 : vector<8x128xf32>
    %212 = arith.addf %209, %211 : vector<8x128xf32>
    %213 = math.tanh %212 : vector<8x128xf32>
    %cst_61 = arith.constant 1.000000e+00 : f32
    %214 = vector.broadcast %cst_61 : f32 to vector<8x128xf32>
    %215 = arith.subf %214, %208 : vector<8x128xf32>
    %216 = arith.mulf %215, %213 : vector<8x128xf32>
    %217 = arith.mulf %208, %173 : vector<8x128xf32>
    %218 = arith.addf %216, %217 : vector<8x128xf32>
    %219 = vector.extract_strided_slice %218 {offsets = [0, 0], sizes = [8, 64], strides = [1, 1]} : vector<8x128xf32> to vector<8x64xf32>
    %220 = arith.index_cast %c4_i32 : i32 to index
    %c0_62 = arith.constant 0 : index
    %c0_63 = arith.constant 0 : index
    %221 = vector.load %arg4[%220, %c0_62, %c0_63] : memref<8x8x64xf32, #tpu.memory_space<vmem>>, vector<1x8x64xf32>
    %222 = vector.shape_cast %221 : vector<1x8x64xf32> to vector<8x64xf32>
    %223 = vector.shape_cast %219 : vector<8x64xf32> to vector<1x8x64xf32>
    tpu.vector_store %arg4[%220, %c0_62, %c0_63], %223 {strides = array<i32>} : memref<8x8x64xf32, #tpu.memory_space<vmem>>, vector<1x8x64xf32>,
    %224 = vector.extract_strided_slice %218 {offsets = [0, 64], sizes = [8, 64], strides = [1, 1]} : vector<8x128xf32> to vector<8x64xf32>
    %c7_i32_64 = arith.constant 7 : i32
    %225 = arith.subi %c7_i32_64, %c4_i32 : i32
    %226 = arith.index_cast %225 : i32 to index
    %c0_65 = arith.constant 0 : index
    %c0_66 = arith.constant 0 : index
    %227 = vector.load %arg5[%226, %c0_65, %c0_66] : memref<8x8x64xf32, #tpu.memory_space<vmem>>, vector<1x8x64xf32>
    %228 = vector.shape_cast %227 : vector<1x8x64xf32> to vector<8x64xf32>
    %229 = vector.shape_cast %224 : vector<8x64xf32> to vector<1x8x64xf32>
    tpu.vector_store %arg5[%226, %c0_65, %c0_66], %229 {strides = array<i32>} : memref<8x8x64xf32, #tpu.memory_space<vmem>>, vector<1x8x64xf32>,
    %c5_i32 = arith.constant 5 : i32
    %230 = arith.index_cast %c5_i32 : i32 to index
    %c0_67 = arith.constant 0 : index
    %c0_68 = arith.constant 0 : index
    %231 = vector.load %arg1[%230, %c0_67, %c0_68] : memref<8x8x384xf32, #tpu.memory_space<vmem>>, vector<1x8x384xf32>
    %232 = vector.shape_cast %231 : vector<1x8x384xf32> to vector<8x384xf32>
    %233 = arith.truncf %218 : vector<8x128xf32> to vector<8x128xbf16>
    %cst_69 = arith.constant dense<0.000000e+00> : vector<8x384xf32>
    %234 = tpu.matmul %233, %0, %cst_69 {dimension_numbers = #tpu.dot_dimension_numbers<[1], [0], [0], [1], [0, 0, 1, 1], [], []>} : vector<8x128xbf16>, vector<128x384xbf16>, vector<8x384xf32> -> vector<8x384xf32>
    %235 = arith.addf %234, %3 : vector<8x384xf32>
    %236 = vector.extract_strided_slice %232 {offsets = [0, 0], sizes = [8, 128], strides = [1, 1]} : vector<8x384xf32> to vector<8x128xf32>
    %237 = vector.extract_strided_slice %235 {offsets = [0, 0], sizes = [8, 128], strides = [1, 1]} : vector<8x384xf32> to vector<8x128xf32>
    %238 = arith.addf %236, %237 : vector<8x128xf32>
    %cst_70 = arith.constant 0.000000e+00 : f32
    %239 = vector.broadcast %cst_70 : f32 to vector<8x128xf32>
    %240 = arith.subf %239, %238 : vector<8x128xf32>
    %241 = math.exp %240 : vector<8x128xf32>
    %cst_71 = arith.constant 1.000000e+00 : f32
    %242 = vector.broadcast %cst_71 : f32 to vector<8x128xf32>
    %243 = arith.addf %242, %241 : vector<8x128xf32>
    %244 = tpu.reciprocal %243 {approx = true} : vector<8x128xf32> -> vector<8x128xf32>
    %245 = vector.extract_strided_slice %232 {offsets = [0, 128], sizes = [8, 128], strides = [1, 1]} : vector<8x384xf32> to vector<8x128xf32>
    %246 = vector.extract_strided_slice %235 {offsets = [0, 128], sizes = [8, 128], strides = [1, 1]} : vector<8x384xf32> to vector<8x128xf32>
    %247 = arith.addf %245, %246 : vector<8x128xf32>
    %cst_72 = arith.constant 0.000000e+00 : f32
    %248 = vector.broadcast %cst_72 : f32 to vector<8x128xf32>
    %249 = arith.subf %248, %247 : vector<8x128xf32>
    %250 = math.exp %249 : vector<8x128xf32>
    %cst_73 = arith.constant 1.000000e+00 : f32
    %251 = vector.broadcast %cst_73 : f32 to vector<8x128xf32>
    %252 = arith.addf %251, %250 : vector<8x128xf32>
    %253 = tpu.reciprocal %252 {approx = true} : vector<8x128xf32> -> vector<8x128xf32>
    %254 = vector.extract_strided_slice %232 {offsets = [0, 256], sizes = [8, 128], strides = [1, 1]} : vector<8x384xf32> to vector<8x128xf32>
    %255 = vector.extract_strided_slice %235 {offsets = [0, 256], sizes = [8, 128], strides = [1, 1]} : vector<8x384xf32> to vector<8x128xf32>
    %256 = arith.mulf %244, %255 : vector<8x128xf32>
    %257 = arith.addf %254, %256 : vector<8x128xf32>
    %258 = math.tanh %257 : vector<8x128xf32>
    %cst_74 = arith.constant 1.000000e+00 : f32
    %259 = vector.broadcast %cst_74 : f32 to vector<8x128xf32>
    %260 = arith.subf %259, %253 : vector<8x128xf32>
    %261 = arith.mulf %260, %258 : vector<8x128xf32>
    %262 = arith.mulf %253, %218 : vector<8x128xf32>
    %263 = arith.addf %261, %262 : vector<8x128xf32>
    %264 = vector.extract_strided_slice %263 {offsets = [0, 0], sizes = [8, 64], strides = [1, 1]} : vector<8x128xf32> to vector<8x64xf32>
    %265 = arith.index_cast %c5_i32 : i32 to index
    %c0_75 = arith.constant 0 : index
    %c0_76 = arith.constant 0 : index
    %266 = vector.load %arg4[%265, %c0_75, %c0_76] : memref<8x8x64xf32, #tpu.memory_space<vmem>>, vector<1x8x64xf32>
    %267 = vector.shape_cast %266 : vector<1x8x64xf32> to vector<8x64xf32>
    %268 = vector.shape_cast %264 : vector<8x64xf32> to vector<1x8x64xf32>
    tpu.vector_store %arg4[%265, %c0_75, %c0_76], %268 {strides = array<i32>} : memref<8x8x64xf32, #tpu.memory_space<vmem>>, vector<1x8x64xf32>,
    %269 = vector.extract_strided_slice %263 {offsets = [0, 64], sizes = [8, 64], strides = [1, 1]} : vector<8x128xf32> to vector<8x64xf32>
    %c7_i32_77 = arith.constant 7 : i32
    %270 = arith.subi %c7_i32_77, %c5_i32 : i32
    %271 = arith.index_cast %270 : i32 to index
    %c0_78 = arith.constant 0 : index
    %c0_79 = arith.constant 0 : index
    %272 = vector.load %arg5[%271, %c0_78, %c0_79] : memref<8x8x64xf32, #tpu.memory_space<vmem>>, vector<1x8x64xf32>
    %273 = vector.shape_cast %272 : vector<1x8x64xf32> to vector<8x64xf32>
    %274 = vector.shape_cast %269 : vector<8x64xf32> to vector<1x8x64xf32>
    tpu.vector_store %arg5[%271, %c0_78, %c0_79], %274 {strides = array<i32>} : memref<8x8x64xf32, #tpu.memory_space<vmem>>, vector<1x8x64xf32>,
    %c6_i32 = arith.constant 6 : i32
    %275 = arith.index_cast %c6_i32 : i32 to index
    %c0_80 = arith.constant 0 : index
    %c0_81 = arith.constant 0 : index
    %276 = vector.load %arg1[%275, %c0_80, %c0_81] : memref<8x8x384xf32, #tpu.memory_space<vmem>>, vector<1x8x384xf32>
    %277 = vector.shape_cast %276 : vector<1x8x384xf32> to vector<8x384xf32>
    %278 = arith.truncf %263 : vector<8x128xf32> to vector<8x128xbf16>
    %cst_82 = arith.constant dense<0.000000e+00> : vector<8x384xf32>
    %279 = tpu.matmul %278, %0, %cst_82 {dimension_numbers = #tpu.dot_dimension_numbers<[1], [0], [0], [1], [0, 0, 1, 1], [], []>} : vector<8x128xbf16>, vector<128x384xbf16>, vector<8x384xf32> -> vector<8x384xf32>
    %280 = arith.addf %279, %3 : vector<8x384xf32>
    %281 = vector.extract_strided_slice %277 {offsets = [0, 0], sizes = [8, 128], strides = [1, 1]} : vector<8x384xf32> to vector<8x128xf32>
    %282 = vector.extract_strided_slice %280 {offsets = [0, 0], sizes = [8, 128], strides = [1, 1]} : vector<8x384xf32> to vector<8x128xf32>
    %283 = arith.addf %281, %282 : vector<8x128xf32>
    %cst_83 = arith.constant 0.000000e+00 : f32
    %284 = vector.broadcast %cst_83 : f32 to vector<8x128xf32>
    %285 = arith.subf %284, %283 : vector<8x128xf32>
    %286 = math.exp %285 : vector<8x128xf32>
    %cst_84 = arith.constant 1.000000e+00 : f32
    %287 = vector.broadcast %cst_84 : f32 to vector<8x128xf32>
    %288 = arith.addf %287, %286 : vector<8x128xf32>
    %289 = tpu.reciprocal %288 {approx = true} : vector<8x128xf32> -> vector<8x128xf32>
    %290 = vector.extract_strided_slice %277 {offsets = [0, 128], sizes = [8, 128], strides = [1, 1]} : vector<8x384xf32> to vector<8x128xf32>
    %291 = vector.extract_strided_slice %280 {offsets = [0, 128], sizes = [8, 128], strides = [1, 1]} : vector<8x384xf32> to vector<8x128xf32>
    %292 = arith.addf %290, %291 : vector<8x128xf32>
    %cst_85 = arith.constant 0.000000e+00 : f32
    %293 = vector.broadcast %cst_85 : f32 to vector<8x128xf32>
    %294 = arith.subf %293, %292 : vector<8x128xf32>
    %295 = math.exp %294 : vector<8x128xf32>
    %cst_86 = arith.constant 1.000000e+00 : f32
    %296 = vector.broadcast %cst_86 : f32 to vector<8x128xf32>
    %297 = arith.addf %296, %295 : vector<8x128xf32>
    %298 = tpu.reciprocal %297 {approx = true} : vector<8x128xf32> -> vector<8x128xf32>
    %299 = vector.extract_strided_slice %277 {offsets = [0, 256], sizes = [8, 128], strides = [1, 1]} : vector<8x384xf32> to vector<8x128xf32>
    %300 = vector.extract_strided_slice %280 {offsets = [0, 256], sizes = [8, 128], strides = [1, 1]} : vector<8x384xf32> to vector<8x128xf32>
    %301 = arith.mulf %289, %300 : vector<8x128xf32>
    %302 = arith.addf %299, %301 : vector<8x128xf32>
    %303 = math.tanh %302 : vector<8x128xf32>
    %cst_87 = arith.constant 1.000000e+00 : f32
    %304 = vector.broadcast %cst_87 : f32 to vector<8x128xf32>
    %305 = arith.subf %304, %298 : vector<8x128xf32>
    %306 = arith.mulf %305, %303 : vector<8x128xf32>
    %307 = arith.mulf %298, %263 : vector<8x128xf32>
    %308 = arith.addf %306, %307 : vector<8x128xf32>
    %309 = vector.extract_strided_slice %308 {offsets = [0, 0], sizes = [8, 64], strides = [1, 1]} : vector<8x128xf32> to vector<8x64xf32>
    %310 = arith.index_cast %c6_i32 : i32 to index
    %c0_88 = arith.constant 0 : index
    %c0_89 = arith.constant 0 : index
    %311 = vector.load %arg4[%310, %c0_88, %c0_89] : memref<8x8x64xf32, #tpu.memory_space<vmem>>, vector<1x8x64xf32>
    %312 = vector.shape_cast %311 : vector<1x8x64xf32> to vector<8x64xf32>
    %313 = vector.shape_cast %309 : vector<8x64xf32> to vector<1x8x64xf32>
    tpu.vector_store %arg4[%310, %c0_88, %c0_89], %313 {strides = array<i32>} : memref<8x8x64xf32, #tpu.memory_space<vmem>>, vector<1x8x64xf32>,
    %314 = vector.extract_strided_slice %308 {offsets = [0, 64], sizes = [8, 64], strides = [1, 1]} : vector<8x128xf32> to vector<8x64xf32>
    %c7_i32_90 = arith.constant 7 : i32
    %315 = arith.subi %c7_i32_90, %c6_i32 : i32
    %316 = arith.index_cast %315 : i32 to index
    %c0_91 = arith.constant 0 : index
    %c0_92 = arith.constant 0 : index
    %317 = vector.load %arg5[%316, %c0_91, %c0_92] : memref<8x8x64xf32, #tpu.memory_space<vmem>>, vector<1x8x64xf32>
    %318 = vector.shape_cast %317 : vector<1x8x64xf32> to vector<8x64xf32>
    %319 = vector.shape_cast %314 : vector<8x64xf32> to vector<1x8x64xf32>
    tpu.vector_store %arg5[%316, %c0_91, %c0_92], %319 {strides = array<i32>} : memref<8x8x64xf32, #tpu.memory_space<vmem>>, vector<1x8x64xf32>,
    %c7_i32_93 = arith.constant 7 : i32
    %320 = arith.index_cast %c7_i32_93 : i32 to index
    %c0_94 = arith.constant 0 : index
    %c0_95 = arith.constant 0 : index
    %321 = vector.load %arg1[%320, %c0_94, %c0_95] : memref<8x8x384xf32, #tpu.memory_space<vmem>>, vector<1x8x384xf32>
    %322 = vector.shape_cast %321 : vector<1x8x384xf32> to vector<8x384xf32>
    %323 = arith.truncf %308 : vector<8x128xf32> to vector<8x128xbf16>
    %cst_96 = arith.constant dense<0.000000e+00> : vector<8x384xf32>
    %324 = tpu.matmul %323, %0, %cst_96 {dimension_numbers = #tpu.dot_dimension_numbers<[1], [0], [0], [1], [0, 0, 1, 1], [], []>} : vector<8x128xbf16>, vector<128x384xbf16>, vector<8x384xf32> -> vector<8x384xf32>
    %325 = arith.addf %324, %3 : vector<8x384xf32>
    %326 = vector.extract_strided_slice %322 {offsets = [0, 0], sizes = [8, 128], strides = [1, 1]} : vector<8x384xf32> to vector<8x128xf32>
    %327 = vector.extract_strided_slice %325 {offsets = [0, 0], sizes = [8, 128], strides = [1, 1]} : vector<8x384xf32> to vector<8x128xf32>
    %328 = arith.addf %326, %327 : vector<8x128xf32>
    %cst_97 = arith.constant 0.000000e+00 : f32
    %329 = vector.broadcast %cst_97 : f32 to vector<8x128xf32>
    %330 = arith.subf %329, %328 : vector<8x128xf32>
    %331 = math.exp %330 : vector<8x128xf32>
    %cst_98 = arith.constant 1.000000e+00 : f32
    %332 = vector.broadcast %cst_98 : f32 to vector<8x128xf32>
    %333 = arith.addf %332, %331 : vector<8x128xf32>
    %334 = tpu.reciprocal %333 {approx = true} : vector<8x128xf32> -> vector<8x128xf32>
    %335 = vector.extract_strided_slice %322 {offsets = [0, 128], sizes = [8, 128], strides = [1, 1]} : vector<8x384xf32> to vector<8x128xf32>
    %336 = vector.extract_strided_slice %325 {offsets = [0, 128], sizes = [8, 128], strides = [1, 1]} : vector<8x384xf32> to vector<8x128xf32>
    %337 = arith.addf %335, %336 : vector<8x128xf32>
    %cst_99 = arith.constant 0.000000e+00 : f32
    %338 = vector.broadcast %cst_99 : f32 to vector<8x128xf32>
    %339 = arith.subf %338, %337 : vector<8x128xf32>
    %340 = math.exp %339 : vector<8x128xf32>
    %cst_100 = arith.constant 1.000000e+00 : f32
    %341 = vector.broadcast %cst_100 : f32 to vector<8x128xf32>
    %342 = arith.addf %341, %340 : vector<8x128xf32>
    %343 = tpu.reciprocal %342 {approx = true} : vector<8x128xf32> -> vector<8x128xf32>
    %344 = vector.extract_strided_slice %322 {offsets = [0, 256], sizes = [8, 128], strides = [1, 1]} : vector<8x384xf32> to vector<8x128xf32>
    %345 = vector.extract_strided_slice %325 {offsets = [0, 256], sizes = [8, 128], strides = [1, 1]} : vector<8x384xf32> to vector<8x128xf32>
    %346 = arith.mulf %334, %345 : vector<8x128xf32>
    %347 = arith.addf %344, %346 : vector<8x128xf32>
    %348 = math.tanh %347 : vector<8x128xf32>
    %cst_101 = arith.constant 1.000000e+00 : f32
    %349 = vector.broadcast %cst_101 : f32 to vector<8x128xf32>
    %350 = arith.subf %349, %343 : vector<8x128xf32>
    %351 = arith.mulf %350, %348 : vector<8x128xf32>
    %352 = arith.mulf %343, %308 : vector<8x128xf32>
    %353 = arith.addf %351, %352 : vector<8x128xf32>
    %354 = vector.extract_strided_slice %353 {offsets = [0, 0], sizes = [8, 64], strides = [1, 1]} : vector<8x128xf32> to vector<8x64xf32>
    %355 = arith.index_cast %c7_i32_93 : i32 to index
    %c0_102 = arith.constant 0 : index
    %c0_103 = arith.constant 0 : index
    %356 = vector.load %arg4[%355, %c0_102, %c0_103] : memref<8x8x64xf32, #tpu.memory_space<vmem>>, vector<1x8x64xf32>
    %357 = vector.shape_cast %356 : vector<1x8x64xf32> to vector<8x64xf32>
    %358 = vector.shape_cast %354 : vector<8x64xf32> to vector<1x8x64xf32>
    tpu.vector_store %arg4[%355, %c0_102, %c0_103], %358 {strides = array<i32>} : memref<8x8x64xf32, #tpu.memory_space<vmem>>, vector<1x8x64xf32>,
    %359 = vector.extract_strided_slice %353 {offsets = [0, 64], sizes = [8, 64], strides = [1, 1]} : vector<8x128xf32> to vector<8x64xf32>
    %c7_i32_104 = arith.constant 7 : i32
    %360 = arith.subi %c7_i32_104, %c7_i32_93 : i32
    %361 = arith.index_cast %360 : i32 to index
    %c0_105 = arith.constant 0 : index
    %c0_106 = arith.constant 0 : index
    %362 = vector.load %arg5[%361, %c0_105, %c0_106] : memref<8x8x64xf32, #tpu.memory_space<vmem>>, vector<1x8x64xf32>
    %363 = vector.shape_cast %362 : vector<1x8x64xf32> to vector<8x64xf32>
    %364 = vector.shape_cast %359 : vector<8x64xf32> to vector<1x8x64xf32>
    tpu.vector_store %arg5[%361, %c0_105, %c0_106], %364 {strides = array<i32>} : memref<8x8x64xf32, #tpu.memory_space<vmem>>, vector<1x8x64xf32>,
    %c8_i32 = arith.constant 8 : i32
    return
  }
  func.func @transform_0(%arg0: i32) -> (i32, i32, i32) {
    %c0_i32 = arith.constant 0 : i32
    %c0_i32_0 = arith.constant 0 : i32
    %c0_i32_1 = arith.constant 0 : i32
    return %c0_i32, %arg0, %c0_i32_0 : i32, i32, i32
  }
  func.func @transform_1(%arg0: i32) -> (i32, i32) {
    %c0_i32 = arith.constant 0 : i32
    %c0_i32_0 = arith.constant 0 : i32
    %c0_i32_1 = arith.constant 0 : i32
    return %c0_i32, %c0_i32_0 : i32, i32
  }
  func.func @transform_2(%arg0: i32) -> (i32, i32) {
    %c0_i32 = arith.constant 0 : i32
    %c0_i32_0 = arith.constant 0 : i32
    %c0_i32_1 = arith.constant 0 : i32
    return %c0_i32, %c0_i32_0 : i32, i32
  }
  func.func @transform_3(%arg0: i32) -> (i32, i32, i32) {
    %c0_i32 = arith.constant 0 : i32
    %c0_i32_0 = arith.constant 0 : i32
    %c0_i32_1 = arith.constant 0 : i32
    return %c0_i32, %arg0, %c0_i32_0 : i32, i32, i32
  }
  func.func @transform_4(%arg0: i32) -> (i32, i32, i32) {
    %c0_i32 = arith.constant 0 : i32
    %c0_i32_0 = arith.constant 0 : i32
    %c0_i32_1 = arith.constant 0 : i32
    return %c0_i32, %arg0, %c0_i32_0 : i32, i32, i32
  }
}

module attributes {stable_mosaic.version = 11 : i64} {
  func.func @gru4_head_kernel(%arg0: memref<8x8x384xf32, #tpu.memory_space<vmem>>, %arg1: memref<128x384xbf16, #tpu.memory_space<vmem>>, %arg2: memref<1x384xf32, #tpu.memory_space<vmem>>, %arg3: memref<2x64xf32, #tpu.memory_space<vmem>>, %arg4: memref<2x64xf32, #tpu.memory_space<vmem>>, %arg5: memref<2xf32, #tpu.memory_space<smem>>, %arg6: memref<2x8x8xf32, #tpu.memory_space<vmem>>, %arg7: memref<8x8x64xf32, #tpu.memory_space<vmem>>, %arg8: memref<8x8x64xf32, #tpu.memory_space<vmem>>) attributes {dimension_semantics = [], scalar_prefetch = 0 : i64, scratch_operands = 2 : i64, tpu.core_type = #tpu.core_type<tc>} {
    %c0 = arith.constant 0 : index
    %c0_0 = arith.constant 0 : index
    %0 = vector.load %arg1[%c0, %c0_0] : memref<128x384xbf16, #tpu.memory_space<vmem>>, vector<128x384xbf16>
    %c0_1 = arith.constant 0 : index
    %c0_2 = arith.constant 0 : index
    %1 = vector.load %arg2[%c0_1, %c0_2] : memref<1x384xf32, #tpu.memory_space<vmem>>, vector<1x384xf32>
    %2 = vector.shape_cast %1 : vector<1x384xf32> to vector<1x384xf32>
    %3 = vector.broadcast %2 : vector<1x384xf32> to vector<8x384xf32>
    %cst = arith.constant 0.000000e+00 : f32
    %4 = vector.broadcast %cst : f32 to vector<8x128xf32>
    %c0_i32 = arith.constant 0 : i32
    %5 = arith.index_cast %c0_i32 : i32 to index
    %c0_3 = arith.constant 0 : index
    %c0_4 = arith.constant 0 : index
    %6 = vector.load %arg0[%5, %c0_3, %c0_4] : memref<8x8x384xf32, #tpu.memory_space<vmem>>, vector<1x8x384xf32>
    %7 = vector.shape_cast %6 : vector<1x8x384xf32> to vector<8x384xf32>
    %8 = arith.truncf %4 : vector<8x128xf32> to vector<8x128xbf16>
    %cst_5 = arith.constant dense<0.000000e+00> : vector<8x384xf32>
    %9 = tpu.matmul %8, %0, %cst_5 {dimension_numbers = #tpu.dot_dimension_numbers<[1], [0], [0], [1], [0, 0, 1, 1], [], []>} : vector<8x128xbf16>, vector<128x384xbf16>, vector<8x384xf32> -> vector<8x384xf32>
    %10 = arith.addf %9, %3 : vector<8x384xf32>
    %11 = vector.extract_strided_slice %7 {offsets = [0, 0], sizes = [8, 128], strides = [1, 1]} : vector<8x384xf32> to vector<8x128xf32>
    %12 = vector.extract_strided_slice %10 {offsets = [0, 0], sizes = [8, 128], strides = [1, 1]} : vector<8x384xf32> to vector<8x128xf32>
    %13 = arith.addf %11, %12 : vector<8x128xf32>
    %cst_6 = arith.constant 0.000000e+00 : f32
    %14 = vector.broadcast %cst_6 : f32 to vector<8x128xf32>
    %15 = arith.subf %14, %13 : vector<8x128xf32>
    %16 = math.exp %15 : vector<8x128xf32>
    %cst_7 = arith.constant 1.000000e+00 : f32
    %17 = vector.broadcast %cst_7 : f32 to vector<8x128xf32>
    %18 = arith.addf %17, %16 : vector<8x128xf32>
    %19 = tpu.reciprocal %18 {approx = true} : vector<8x128xf32> -> vector<8x128xf32>
    %20 = vector.extract_strided_slice %7 {offsets = [0, 128], sizes = [8, 128], strides = [1, 1]} : vector<8x384xf32> to vector<8x128xf32>
    %21 = vector.extract_strided_slice %10 {offsets = [0, 128], sizes = [8, 128], strides = [1, 1]} : vector<8x384xf32> to vector<8x128xf32>
    %22 = arith.addf %20, %21 : vector<8x128xf32>
    %cst_8 = arith.constant 0.000000e+00 : f32
    %23 = vector.broadcast %cst_8 : f32 to vector<8x128xf32>
    %24 = arith.subf %23, %22 : vector<8x128xf32>
    %25 = math.exp %24 : vector<8x128xf32>
    %cst_9 = arith.constant 1.000000e+00 : f32
    %26 = vector.broadcast %cst_9 : f32 to vector<8x128xf32>
    %27 = arith.addf %26, %25 : vector<8x128xf32>
    %28 = tpu.reciprocal %27 {approx = true} : vector<8x128xf32> -> vector<8x128xf32>
    %29 = vector.extract_strided_slice %7 {offsets = [0, 256], sizes = [8, 128], strides = [1, 1]} : vector<8x384xf32> to vector<8x128xf32>
    %30 = vector.extract_strided_slice %10 {offsets = [0, 256], sizes = [8, 128], strides = [1, 1]} : vector<8x384xf32> to vector<8x128xf32>
    %31 = arith.mulf %19, %30 : vector<8x128xf32>
    %32 = arith.addf %29, %31 : vector<8x128xf32>
    %33 = math.tanh %32 : vector<8x128xf32>
    %cst_10 = arith.constant 1.000000e+00 : f32
    %34 = vector.broadcast %cst_10 : f32 to vector<8x128xf32>
    %35 = arith.subf %34, %28 : vector<8x128xf32>
    %36 = arith.mulf %35, %33 : vector<8x128xf32>
    %37 = arith.mulf %28, %4 : vector<8x128xf32>
    %38 = arith.addf %36, %37 : vector<8x128xf32>
    %39 = vector.extract_strided_slice %38 {offsets = [0, 0], sizes = [8, 64], strides = [1, 1]} : vector<8x128xf32> to vector<8x64xf32>
    %40 = arith.index_cast %c0_i32 : i32 to index
    %c0_11 = arith.constant 0 : index
    %c0_12 = arith.constant 0 : index
    %41 = vector.load %arg7[%40, %c0_11, %c0_12] : memref<8x8x64xf32, #tpu.memory_space<vmem>>, vector<1x8x64xf32>
    %42 = vector.shape_cast %41 : vector<1x8x64xf32> to vector<8x64xf32>
    %43 = vector.shape_cast %39 : vector<8x64xf32> to vector<1x8x64xf32>
    tpu.vector_store %arg7[%40, %c0_11, %c0_12], %43 {strides = array<i32>} : memref<8x8x64xf32, #tpu.memory_space<vmem>>, vector<1x8x64xf32>,
    %44 = vector.extract_strided_slice %38 {offsets = [0, 64], sizes = [8, 64], strides = [1, 1]} : vector<8x128xf32> to vector<8x64xf32>
    %c7_i32 = arith.constant 7 : i32
    %45 = arith.subi %c7_i32, %c0_i32 : i32
    %46 = arith.index_cast %45 : i32 to index
    %c0_13 = arith.constant 0 : index
    %c0_14 = arith.constant 0 : index
    %47 = vector.load %arg8[%46, %c0_13, %c0_14] : memref<8x8x64xf32, #tpu.memory_space<vmem>>, vector<1x8x64xf32>
    %48 = vector.shape_cast %47 : vector<1x8x64xf32> to vector<8x64xf32>
    %49 = vector.shape_cast %44 : vector<8x64xf32> to vector<1x8x64xf32>
    tpu.vector_store %arg8[%46, %c0_13, %c0_14], %49 {strides = array<i32>} : memref<8x8x64xf32, #tpu.memory_space<vmem>>, vector<1x8x64xf32>,
    %c1_i32 = arith.constant 1 : i32
    %50 = arith.index_cast %c1_i32 : i32 to index
    %c0_15 = arith.constant 0 : index
    %c0_16 = arith.constant 0 : index
    %51 = vector.load %arg0[%50, %c0_15, %c0_16] : memref<8x8x384xf32, #tpu.memory_space<vmem>>, vector<1x8x384xf32>
    %52 = vector.shape_cast %51 : vector<1x8x384xf32> to vector<8x384xf32>
    %53 = arith.truncf %38 : vector<8x128xf32> to vector<8x128xbf16>
    %cst_17 = arith.constant dense<0.000000e+00> : vector<8x384xf32>
    %54 = tpu.matmul %53, %0, %cst_17 {dimension_numbers = #tpu.dot_dimension_numbers<[1], [0], [0], [1], [0, 0, 1, 1], [], []>} : vector<8x128xbf16>, vector<128x384xbf16>, vector<8x384xf32> -> vector<8x384xf32>
    %55 = arith.addf %54, %3 : vector<8x384xf32>
    %56 = vector.extract_strided_slice %52 {offsets = [0, 0], sizes = [8, 128], strides = [1, 1]} : vector<8x384xf32> to vector<8x128xf32>
    %57 = vector.extract_strided_slice %55 {offsets = [0, 0], sizes = [8, 128], strides = [1, 1]} : vector<8x384xf32> to vector<8x128xf32>
    %58 = arith.addf %56, %57 : vector<8x128xf32>
    %cst_18 = arith.constant 0.000000e+00 : f32
    %59 = vector.broadcast %cst_18 : f32 to vector<8x128xf32>
    %60 = arith.subf %59, %58 : vector<8x128xf32>
    %61 = math.exp %60 : vector<8x128xf32>
    %cst_19 = arith.constant 1.000000e+00 : f32
    %62 = vector.broadcast %cst_19 : f32 to vector<8x128xf32>
    %63 = arith.addf %62, %61 : vector<8x128xf32>
    %64 = tpu.reciprocal %63 {approx = true} : vector<8x128xf32> -> vector<8x128xf32>
    %65 = vector.extract_strided_slice %52 {offsets = [0, 128], sizes = [8, 128], strides = [1, 1]} : vector<8x384xf32> to vector<8x128xf32>
    %66 = vector.extract_strided_slice %55 {offsets = [0, 128], sizes = [8, 128], strides = [1, 1]} : vector<8x384xf32> to vector<8x128xf32>
    %67 = arith.addf %65, %66 : vector<8x128xf32>
    %cst_20 = arith.constant 0.000000e+00 : f32
    %68 = vector.broadcast %cst_20 : f32 to vector<8x128xf32>
    %69 = arith.subf %68, %67 : vector<8x128xf32>
    %70 = math.exp %69 : vector<8x128xf32>
    %cst_21 = arith.constant 1.000000e+00 : f32
    %71 = vector.broadcast %cst_21 : f32 to vector<8x128xf32>
    %72 = arith.addf %71, %70 : vector<8x128xf32>
    %73 = tpu.reciprocal %72 {approx = true} : vector<8x128xf32> -> vector<8x128xf32>
    %74 = vector.extract_strided_slice %52 {offsets = [0, 256], sizes = [8, 128], strides = [1, 1]} : vector<8x384xf32> to vector<8x128xf32>
    %75 = vector.extract_strided_slice %55 {offsets = [0, 256], sizes = [8, 128], strides = [1, 1]} : vector<8x384xf32> to vector<8x128xf32>
    %76 = arith.mulf %64, %75 : vector<8x128xf32>
    %77 = arith.addf %74, %76 : vector<8x128xf32>
    %78 = math.tanh %77 : vector<8x128xf32>
    %cst_22 = arith.constant 1.000000e+00 : f32
    %79 = vector.broadcast %cst_22 : f32 to vector<8x128xf32>
    %80 = arith.subf %79, %73 : vector<8x128xf32>
    %81 = arith.mulf %80, %78 : vector<8x128xf32>
    %82 = arith.mulf %73, %38 : vector<8x128xf32>
    %83 = arith.addf %81, %82 : vector<8x128xf32>
    %84 = vector.extract_strided_slice %83 {offsets = [0, 0], sizes = [8, 64], strides = [1, 1]} : vector<8x128xf32> to vector<8x64xf32>
    %85 = arith.index_cast %c1_i32 : i32 to index
    %c0_23 = arith.constant 0 : index
    %c0_24 = arith.constant 0 : index
    %86 = vector.load %arg7[%85, %c0_23, %c0_24] : memref<8x8x64xf32, #tpu.memory_space<vmem>>, vector<1x8x64xf32>
    %87 = vector.shape_cast %86 : vector<1x8x64xf32> to vector<8x64xf32>
    %88 = vector.shape_cast %84 : vector<8x64xf32> to vector<1x8x64xf32>
    tpu.vector_store %arg7[%85, %c0_23, %c0_24], %88 {strides = array<i32>} : memref<8x8x64xf32, #tpu.memory_space<vmem>>, vector<1x8x64xf32>,
    %89 = vector.extract_strided_slice %83 {offsets = [0, 64], sizes = [8, 64], strides = [1, 1]} : vector<8x128xf32> to vector<8x64xf32>
    %c7_i32_25 = arith.constant 7 : i32
    %90 = arith.subi %c7_i32_25, %c1_i32 : i32
    %91 = arith.index_cast %90 : i32 to index
    %c0_26 = arith.constant 0 : index
    %c0_27 = arith.constant 0 : index
    %92 = vector.load %arg8[%91, %c0_26, %c0_27] : memref<8x8x64xf32, #tpu.memory_space<vmem>>, vector<1x8x64xf32>
    %93 = vector.shape_cast %92 : vector<1x8x64xf32> to vector<8x64xf32>
    %94 = vector.shape_cast %89 : vector<8x64xf32> to vector<1x8x64xf32>
    tpu.vector_store %arg8[%91, %c0_26, %c0_27], %94 {strides = array<i32>} : memref<8x8x64xf32, #tpu.memory_space<vmem>>, vector<1x8x64xf32>,
    %c2_i32 = arith.constant 2 : i32
    %95 = arith.index_cast %c2_i32 : i32 to index
    %c0_28 = arith.constant 0 : index
    %c0_29 = arith.constant 0 : index
    %96 = vector.load %arg0[%95, %c0_28, %c0_29] : memref<8x8x384xf32, #tpu.memory_space<vmem>>, vector<1x8x384xf32>
    %97 = vector.shape_cast %96 : vector<1x8x384xf32> to vector<8x384xf32>
    %98 = arith.truncf %83 : vector<8x128xf32> to vector<8x128xbf16>
    %cst_30 = arith.constant dense<0.000000e+00> : vector<8x384xf32>
    %99 = tpu.matmul %98, %0, %cst_30 {dimension_numbers = #tpu.dot_dimension_numbers<[1], [0], [0], [1], [0, 0, 1, 1], [], []>} : vector<8x128xbf16>, vector<128x384xbf16>, vector<8x384xf32> -> vector<8x384xf32>
    %100 = arith.addf %99, %3 : vector<8x384xf32>
    %101 = vector.extract_strided_slice %97 {offsets = [0, 0], sizes = [8, 128], strides = [1, 1]} : vector<8x384xf32> to vector<8x128xf32>
    %102 = vector.extract_strided_slice %100 {offsets = [0, 0], sizes = [8, 128], strides = [1, 1]} : vector<8x384xf32> to vector<8x128xf32>
    %103 = arith.addf %101, %102 : vector<8x128xf32>
    %cst_31 = arith.constant 0.000000e+00 : f32
    %104 = vector.broadcast %cst_31 : f32 to vector<8x128xf32>
    %105 = arith.subf %104, %103 : vector<8x128xf32>
    %106 = math.exp %105 : vector<8x128xf32>
    %cst_32 = arith.constant 1.000000e+00 : f32
    %107 = vector.broadcast %cst_32 : f32 to vector<8x128xf32>
    %108 = arith.addf %107, %106 : vector<8x128xf32>
    %109 = tpu.reciprocal %108 {approx = true} : vector<8x128xf32> -> vector<8x128xf32>
    %110 = vector.extract_strided_slice %97 {offsets = [0, 128], sizes = [8, 128], strides = [1, 1]} : vector<8x384xf32> to vector<8x128xf32>
    %111 = vector.extract_strided_slice %100 {offsets = [0, 128], sizes = [8, 128], strides = [1, 1]} : vector<8x384xf32> to vector<8x128xf32>
    %112 = arith.addf %110, %111 : vector<8x128xf32>
    %cst_33 = arith.constant 0.000000e+00 : f32
    %113 = vector.broadcast %cst_33 : f32 to vector<8x128xf32>
    %114 = arith.subf %113, %112 : vector<8x128xf32>
    %115 = math.exp %114 : vector<8x128xf32>
    %cst_34 = arith.constant 1.000000e+00 : f32
    %116 = vector.broadcast %cst_34 : f32 to vector<8x128xf32>
    %117 = arith.addf %116, %115 : vector<8x128xf32>
    %118 = tpu.reciprocal %117 {approx = true} : vector<8x128xf32> -> vector<8x128xf32>
    %119 = vector.extract_strided_slice %97 {offsets = [0, 256], sizes = [8, 128], strides = [1, 1]} : vector<8x384xf32> to vector<8x128xf32>
    %120 = vector.extract_strided_slice %100 {offsets = [0, 256], sizes = [8, 128], strides = [1, 1]} : vector<8x384xf32> to vector<8x128xf32>
    %121 = arith.mulf %109, %120 : vector<8x128xf32>
    %122 = arith.addf %119, %121 : vector<8x128xf32>
    %123 = math.tanh %122 : vector<8x128xf32>
    %cst_35 = arith.constant 1.000000e+00 : f32
    %124 = vector.broadcast %cst_35 : f32 to vector<8x128xf32>
    %125 = arith.subf %124, %118 : vector<8x128xf32>
    %126 = arith.mulf %125, %123 : vector<8x128xf32>
    %127 = arith.mulf %118, %83 : vector<8x128xf32>
    %128 = arith.addf %126, %127 : vector<8x128xf32>
    %129 = vector.extract_strided_slice %128 {offsets = [0, 0], sizes = [8, 64], strides = [1, 1]} : vector<8x128xf32> to vector<8x64xf32>
    %130 = arith.index_cast %c2_i32 : i32 to index
    %c0_36 = arith.constant 0 : index
    %c0_37 = arith.constant 0 : index
    %131 = vector.load %arg7[%130, %c0_36, %c0_37] : memref<8x8x64xf32, #tpu.memory_space<vmem>>, vector<1x8x64xf32>
    %132 = vector.shape_cast %131 : vector<1x8x64xf32> to vector<8x64xf32>
    %133 = vector.shape_cast %129 : vector<8x64xf32> to vector<1x8x64xf32>
    tpu.vector_store %arg7[%130, %c0_36, %c0_37], %133 {strides = array<i32>} : memref<8x8x64xf32, #tpu.memory_space<vmem>>, vector<1x8x64xf32>,
    %134 = vector.extract_strided_slice %128 {offsets = [0, 64], sizes = [8, 64], strides = [1, 1]} : vector<8x128xf32> to vector<8x64xf32>
    %c7_i32_38 = arith.constant 7 : i32
    %135 = arith.subi %c7_i32_38, %c2_i32 : i32
    %136 = arith.index_cast %135 : i32 to index
    %c0_39 = arith.constant 0 : index
    %c0_40 = arith.constant 0 : index
    %137 = vector.load %arg8[%136, %c0_39, %c0_40] : memref<8x8x64xf32, #tpu.memory_space<vmem>>, vector<1x8x64xf32>
    %138 = vector.shape_cast %137 : vector<1x8x64xf32> to vector<8x64xf32>
    %139 = vector.shape_cast %134 : vector<8x64xf32> to vector<1x8x64xf32>
    tpu.vector_store %arg8[%136, %c0_39, %c0_40], %139 {strides = array<i32>} : memref<8x8x64xf32, #tpu.memory_space<vmem>>, vector<1x8x64xf32>,
    %c3_i32 = arith.constant 3 : i32
    %140 = arith.index_cast %c3_i32 : i32 to index
    %c0_41 = arith.constant 0 : index
    %c0_42 = arith.constant 0 : index
    %141 = vector.load %arg0[%140, %c0_41, %c0_42] : memref<8x8x384xf32, #tpu.memory_space<vmem>>, vector<1x8x384xf32>
    %142 = vector.shape_cast %141 : vector<1x8x384xf32> to vector<8x384xf32>
    %143 = arith.truncf %128 : vector<8x128xf32> to vector<8x128xbf16>
    %cst_43 = arith.constant dense<0.000000e+00> : vector<8x384xf32>
    %144 = tpu.matmul %143, %0, %cst_43 {dimension_numbers = #tpu.dot_dimension_numbers<[1], [0], [0], [1], [0, 0, 1, 1], [], []>} : vector<8x128xbf16>, vector<128x384xbf16>, vector<8x384xf32> -> vector<8x384xf32>
    %145 = arith.addf %144, %3 : vector<8x384xf32>
    %146 = vector.extract_strided_slice %142 {offsets = [0, 0], sizes = [8, 128], strides = [1, 1]} : vector<8x384xf32> to vector<8x128xf32>
    %147 = vector.extract_strided_slice %145 {offsets = [0, 0], sizes = [8, 128], strides = [1, 1]} : vector<8x384xf32> to vector<8x128xf32>
    %148 = arith.addf %146, %147 : vector<8x128xf32>
    %cst_44 = arith.constant 0.000000e+00 : f32
    %149 = vector.broadcast %cst_44 : f32 to vector<8x128xf32>
    %150 = arith.subf %149, %148 : vector<8x128xf32>
    %151 = math.exp %150 : vector<8x128xf32>
    %cst_45 = arith.constant 1.000000e+00 : f32
    %152 = vector.broadcast %cst_45 : f32 to vector<8x128xf32>
    %153 = arith.addf %152, %151 : vector<8x128xf32>
    %154 = tpu.reciprocal %153 {approx = true} : vector<8x128xf32> -> vector<8x128xf32>
    %155 = vector.extract_strided_slice %142 {offsets = [0, 128], sizes = [8, 128], strides = [1, 1]} : vector<8x384xf32> to vector<8x128xf32>
    %156 = vector.extract_strided_slice %145 {offsets = [0, 128], sizes = [8, 128], strides = [1, 1]} : vector<8x384xf32> to vector<8x128xf32>
    %157 = arith.addf %155, %156 : vector<8x128xf32>
    %cst_46 = arith.constant 0.000000e+00 : f32
    %158 = vector.broadcast %cst_46 : f32 to vector<8x128xf32>
    %159 = arith.subf %158, %157 : vector<8x128xf32>
    %160 = math.exp %159 : vector<8x128xf32>
    %cst_47 = arith.constant 1.000000e+00 : f32
    %161 = vector.broadcast %cst_47 : f32 to vector<8x128xf32>
    %162 = arith.addf %161, %160 : vector<8x128xf32>
    %163 = tpu.reciprocal %162 {approx = true} : vector<8x128xf32> -> vector<8x128xf32>
    %164 = vector.extract_strided_slice %142 {offsets = [0, 256], sizes = [8, 128], strides = [1, 1]} : vector<8x384xf32> to vector<8x128xf32>
    %165 = vector.extract_strided_slice %145 {offsets = [0, 256], sizes = [8, 128], strides = [1, 1]} : vector<8x384xf32> to vector<8x128xf32>
    %166 = arith.mulf %154, %165 : vector<8x128xf32>
    %167 = arith.addf %164, %166 : vector<8x128xf32>
    %168 = math.tanh %167 : vector<8x128xf32>
    %cst_48 = arith.constant 1.000000e+00 : f32
    %169 = vector.broadcast %cst_48 : f32 to vector<8x128xf32>
    %170 = arith.subf %169, %163 : vector<8x128xf32>
    %171 = arith.mulf %170, %168 : vector<8x128xf32>
    %172 = arith.mulf %163, %128 : vector<8x128xf32>
    %173 = arith.addf %171, %172 : vector<8x128xf32>
    %174 = vector.extract_strided_slice %173 {offsets = [0, 0], sizes = [8, 64], strides = [1, 1]} : vector<8x128xf32> to vector<8x64xf32>
    %175 = arith.index_cast %c3_i32 : i32 to index
    %c0_49 = arith.constant 0 : index
    %c0_50 = arith.constant 0 : index
    %176 = vector.load %arg7[%175, %c0_49, %c0_50] : memref<8x8x64xf32, #tpu.memory_space<vmem>>, vector<1x8x64xf32>
    %177 = vector.shape_cast %176 : vector<1x8x64xf32> to vector<8x64xf32>
    %178 = vector.shape_cast %174 : vector<8x64xf32> to vector<1x8x64xf32>
    tpu.vector_store %arg7[%175, %c0_49, %c0_50], %178 {strides = array<i32>} : memref<8x8x64xf32, #tpu.memory_space<vmem>>, vector<1x8x64xf32>,
    %179 = vector.extract_strided_slice %173 {offsets = [0, 64], sizes = [8, 64], strides = [1, 1]} : vector<8x128xf32> to vector<8x64xf32>
    %c7_i32_51 = arith.constant 7 : i32
    %180 = arith.subi %c7_i32_51, %c3_i32 : i32
    %181 = arith.index_cast %180 : i32 to index
    %c0_52 = arith.constant 0 : index
    %c0_53 = arith.constant 0 : index
    %182 = vector.load %arg8[%181, %c0_52, %c0_53] : memref<8x8x64xf32, #tpu.memory_space<vmem>>, vector<1x8x64xf32>
    %183 = vector.shape_cast %182 : vector<1x8x64xf32> to vector<8x64xf32>
    %184 = vector.shape_cast %179 : vector<8x64xf32> to vector<1x8x64xf32>
    tpu.vector_store %arg8[%181, %c0_52, %c0_53], %184 {strides = array<i32>} : memref<8x8x64xf32, #tpu.memory_space<vmem>>, vector<1x8x64xf32>,
    %c4_i32 = arith.constant 4 : i32
    %185 = arith.index_cast %c4_i32 : i32 to index
    %c0_54 = arith.constant 0 : index
    %c0_55 = arith.constant 0 : index
    %186 = vector.load %arg0[%185, %c0_54, %c0_55] : memref<8x8x384xf32, #tpu.memory_space<vmem>>, vector<1x8x384xf32>
    %187 = vector.shape_cast %186 : vector<1x8x384xf32> to vector<8x384xf32>
    %188 = arith.truncf %173 : vector<8x128xf32> to vector<8x128xbf16>
    %cst_56 = arith.constant dense<0.000000e+00> : vector<8x384xf32>
    %189 = tpu.matmul %188, %0, %cst_56 {dimension_numbers = #tpu.dot_dimension_numbers<[1], [0], [0], [1], [0, 0, 1, 1], [], []>} : vector<8x128xbf16>, vector<128x384xbf16>, vector<8x384xf32> -> vector<8x384xf32>
    %190 = arith.addf %189, %3 : vector<8x384xf32>
    %191 = vector.extract_strided_slice %187 {offsets = [0, 0], sizes = [8, 128], strides = [1, 1]} : vector<8x384xf32> to vector<8x128xf32>
    %192 = vector.extract_strided_slice %190 {offsets = [0, 0], sizes = [8, 128], strides = [1, 1]} : vector<8x384xf32> to vector<8x128xf32>
    %193 = arith.addf %191, %192 : vector<8x128xf32>
    %cst_57 = arith.constant 0.000000e+00 : f32
    %194 = vector.broadcast %cst_57 : f32 to vector<8x128xf32>
    %195 = arith.subf %194, %193 : vector<8x128xf32>
    %196 = math.exp %195 : vector<8x128xf32>
    %cst_58 = arith.constant 1.000000e+00 : f32
    %197 = vector.broadcast %cst_58 : f32 to vector<8x128xf32>
    %198 = arith.addf %197, %196 : vector<8x128xf32>
    %199 = tpu.reciprocal %198 {approx = true} : vector<8x128xf32> -> vector<8x128xf32>
    %200 = vector.extract_strided_slice %187 {offsets = [0, 128], sizes = [8, 128], strides = [1, 1]} : vector<8x384xf32> to vector<8x128xf32>
    %201 = vector.extract_strided_slice %190 {offsets = [0, 128], sizes = [8, 128], strides = [1, 1]} : vector<8x384xf32> to vector<8x128xf32>
    %202 = arith.addf %200, %201 : vector<8x128xf32>
    %cst_59 = arith.constant 0.000000e+00 : f32
    %203 = vector.broadcast %cst_59 : f32 to vector<8x128xf32>
    %204 = arith.subf %203, %202 : vector<8x128xf32>
    %205 = math.exp %204 : vector<8x128xf32>
    %cst_60 = arith.constant 1.000000e+00 : f32
    %206 = vector.broadcast %cst_60 : f32 to vector<8x128xf32>
    %207 = arith.addf %206, %205 : vector<8x128xf32>
    %208 = tpu.reciprocal %207 {approx = true} : vector<8x128xf32> -> vector<8x128xf32>
    %209 = vector.extract_strided_slice %187 {offsets = [0, 256], sizes = [8, 128], strides = [1, 1]} : vector<8x384xf32> to vector<8x128xf32>
    %210 = vector.extract_strided_slice %190 {offsets = [0, 256], sizes = [8, 128], strides = [1, 1]} : vector<8x384xf32> to vector<8x128xf32>
    %211 = arith.mulf %199, %210 : vector<8x128xf32>
    %212 = arith.addf %209, %211 : vector<8x128xf32>
    %213 = math.tanh %212 : vector<8x128xf32>
    %cst_61 = arith.constant 1.000000e+00 : f32
    %214 = vector.broadcast %cst_61 : f32 to vector<8x128xf32>
    %215 = arith.subf %214, %208 : vector<8x128xf32>
    %216 = arith.mulf %215, %213 : vector<8x128xf32>
    %217 = arith.mulf %208, %173 : vector<8x128xf32>
    %218 = arith.addf %216, %217 : vector<8x128xf32>
    %219 = vector.extract_strided_slice %218 {offsets = [0, 0], sizes = [8, 64], strides = [1, 1]} : vector<8x128xf32> to vector<8x64xf32>
    %220 = arith.index_cast %c4_i32 : i32 to index
    %c0_62 = arith.constant 0 : index
    %c0_63 = arith.constant 0 : index
    %221 = vector.load %arg7[%220, %c0_62, %c0_63] : memref<8x8x64xf32, #tpu.memory_space<vmem>>, vector<1x8x64xf32>
    %222 = vector.shape_cast %221 : vector<1x8x64xf32> to vector<8x64xf32>
    %223 = vector.shape_cast %219 : vector<8x64xf32> to vector<1x8x64xf32>
    tpu.vector_store %arg7[%220, %c0_62, %c0_63], %223 {strides = array<i32>} : memref<8x8x64xf32, #tpu.memory_space<vmem>>, vector<1x8x64xf32>,
    %224 = vector.extract_strided_slice %218 {offsets = [0, 64], sizes = [8, 64], strides = [1, 1]} : vector<8x128xf32> to vector<8x64xf32>
    %c7_i32_64 = arith.constant 7 : i32
    %225 = arith.subi %c7_i32_64, %c4_i32 : i32
    %226 = arith.index_cast %225 : i32 to index
    %c0_65 = arith.constant 0 : index
    %c0_66 = arith.constant 0 : index
    %227 = vector.load %arg8[%226, %c0_65, %c0_66] : memref<8x8x64xf32, #tpu.memory_space<vmem>>, vector<1x8x64xf32>
    %228 = vector.shape_cast %227 : vector<1x8x64xf32> to vector<8x64xf32>
    %229 = vector.shape_cast %224 : vector<8x64xf32> to vector<1x8x64xf32>
    tpu.vector_store %arg8[%226, %c0_65, %c0_66], %229 {strides = array<i32>} : memref<8x8x64xf32, #tpu.memory_space<vmem>>, vector<1x8x64xf32>,
    %c5_i32 = arith.constant 5 : i32
    %230 = arith.index_cast %c5_i32 : i32 to index
    %c0_67 = arith.constant 0 : index
    %c0_68 = arith.constant 0 : index
    %231 = vector.load %arg0[%230, %c0_67, %c0_68] : memref<8x8x384xf32, #tpu.memory_space<vmem>>, vector<1x8x384xf32>
    %232 = vector.shape_cast %231 : vector<1x8x384xf32> to vector<8x384xf32>
    %233 = arith.truncf %218 : vector<8x128xf32> to vector<8x128xbf16>
    %cst_69 = arith.constant dense<0.000000e+00> : vector<8x384xf32>
    %234 = tpu.matmul %233, %0, %cst_69 {dimension_numbers = #tpu.dot_dimension_numbers<[1], [0], [0], [1], [0, 0, 1, 1], [], []>} : vector<8x128xbf16>, vector<128x384xbf16>, vector<8x384xf32> -> vector<8x384xf32>
    %235 = arith.addf %234, %3 : vector<8x384xf32>
    %236 = vector.extract_strided_slice %232 {offsets = [0, 0], sizes = [8, 128], strides = [1, 1]} : vector<8x384xf32> to vector<8x128xf32>
    %237 = vector.extract_strided_slice %235 {offsets = [0, 0], sizes = [8, 128], strides = [1, 1]} : vector<8x384xf32> to vector<8x128xf32>
    %238 = arith.addf %236, %237 : vector<8x128xf32>
    %cst_70 = arith.constant 0.000000e+00 : f32
    %239 = vector.broadcast %cst_70 : f32 to vector<8x128xf32>
    %240 = arith.subf %239, %238 : vector<8x128xf32>
    %241 = math.exp %240 : vector<8x128xf32>
    %cst_71 = arith.constant 1.000000e+00 : f32
    %242 = vector.broadcast %cst_71 : f32 to vector<8x128xf32>
    %243 = arith.addf %242, %241 : vector<8x128xf32>
    %244 = tpu.reciprocal %243 {approx = true} : vector<8x128xf32> -> vector<8x128xf32>
    %245 = vector.extract_strided_slice %232 {offsets = [0, 128], sizes = [8, 128], strides = [1, 1]} : vector<8x384xf32> to vector<8x128xf32>
    %246 = vector.extract_strided_slice %235 {offsets = [0, 128], sizes = [8, 128], strides = [1, 1]} : vector<8x384xf32> to vector<8x128xf32>
    %247 = arith.addf %245, %246 : vector<8x128xf32>
    %cst_72 = arith.constant 0.000000e+00 : f32
    %248 = vector.broadcast %cst_72 : f32 to vector<8x128xf32>
    %249 = arith.subf %248, %247 : vector<8x128xf32>
    %250 = math.exp %249 : vector<8x128xf32>
    %cst_73 = arith.constant 1.000000e+00 : f32
    %251 = vector.broadcast %cst_73 : f32 to vector<8x128xf32>
    %252 = arith.addf %251, %250 : vector<8x128xf32>
    %253 = tpu.reciprocal %252 {approx = true} : vector<8x128xf32> -> vector<8x128xf32>
    %254 = vector.extract_strided_slice %232 {offsets = [0, 256], sizes = [8, 128], strides = [1, 1]} : vector<8x384xf32> to vector<8x128xf32>
    %255 = vector.extract_strided_slice %235 {offsets = [0, 256], sizes = [8, 128], strides = [1, 1]} : vector<8x384xf32> to vector<8x128xf32>
    %256 = arith.mulf %244, %255 : vector<8x128xf32>
    %257 = arith.addf %254, %256 : vector<8x128xf32>
    %258 = math.tanh %257 : vector<8x128xf32>
    %cst_74 = arith.constant 1.000000e+00 : f32
    %259 = vector.broadcast %cst_74 : f32 to vector<8x128xf32>
    %260 = arith.subf %259, %253 : vector<8x128xf32>
    %261 = arith.mulf %260, %258 : vector<8x128xf32>
    %262 = arith.mulf %253, %218 : vector<8x128xf32>
    %263 = arith.addf %261, %262 : vector<8x128xf32>
    %264 = vector.extract_strided_slice %263 {offsets = [0, 0], sizes = [8, 64], strides = [1, 1]} : vector<8x128xf32> to vector<8x64xf32>
    %265 = arith.index_cast %c5_i32 : i32 to index
    %c0_75 = arith.constant 0 : index
    %c0_76 = arith.constant 0 : index
    %266 = vector.load %arg7[%265, %c0_75, %c0_76] : memref<8x8x64xf32, #tpu.memory_space<vmem>>, vector<1x8x64xf32>
    %267 = vector.shape_cast %266 : vector<1x8x64xf32> to vector<8x64xf32>
    %268 = vector.shape_cast %264 : vector<8x64xf32> to vector<1x8x64xf32>
    tpu.vector_store %arg7[%265, %c0_75, %c0_76], %268 {strides = array<i32>} : memref<8x8x64xf32, #tpu.memory_space<vmem>>, vector<1x8x64xf32>,
    %269 = vector.extract_strided_slice %263 {offsets = [0, 64], sizes = [8, 64], strides = [1, 1]} : vector<8x128xf32> to vector<8x64xf32>
    %c7_i32_77 = arith.constant 7 : i32
    %270 = arith.subi %c7_i32_77, %c5_i32 : i32
    %271 = arith.index_cast %270 : i32 to index
    %c0_78 = arith.constant 0 : index
    %c0_79 = arith.constant 0 : index
    %272 = vector.load %arg8[%271, %c0_78, %c0_79] : memref<8x8x64xf32, #tpu.memory_space<vmem>>, vector<1x8x64xf32>
    %273 = vector.shape_cast %272 : vector<1x8x64xf32> to vector<8x64xf32>
    %274 = vector.shape_cast %269 : vector<8x64xf32> to vector<1x8x64xf32>
    tpu.vector_store %arg8[%271, %c0_78, %c0_79], %274 {strides = array<i32>} : memref<8x8x64xf32, #tpu.memory_space<vmem>>, vector<1x8x64xf32>,
    %c6_i32 = arith.constant 6 : i32
    %275 = arith.index_cast %c6_i32 : i32 to index
    %c0_80 = arith.constant 0 : index
    %c0_81 = arith.constant 0 : index
    %276 = vector.load %arg0[%275, %c0_80, %c0_81] : memref<8x8x384xf32, #tpu.memory_space<vmem>>, vector<1x8x384xf32>
    %277 = vector.shape_cast %276 : vector<1x8x384xf32> to vector<8x384xf32>
    %278 = arith.truncf %263 : vector<8x128xf32> to vector<8x128xbf16>
    %cst_82 = arith.constant dense<0.000000e+00> : vector<8x384xf32>
    %279 = tpu.matmul %278, %0, %cst_82 {dimension_numbers = #tpu.dot_dimension_numbers<[1], [0], [0], [1], [0, 0, 1, 1], [], []>} : vector<8x128xbf16>, vector<128x384xbf16>, vector<8x384xf32> -> vector<8x384xf32>
    %280 = arith.addf %279, %3 : vector<8x384xf32>
    %281 = vector.extract_strided_slice %277 {offsets = [0, 0], sizes = [8, 128], strides = [1, 1]} : vector<8x384xf32> to vector<8x128xf32>
    %282 = vector.extract_strided_slice %280 {offsets = [0, 0], sizes = [8, 128], strides = [1, 1]} : vector<8x384xf32> to vector<8x128xf32>
    %283 = arith.addf %281, %282 : vector<8x128xf32>
    %cst_83 = arith.constant 0.000000e+00 : f32
    %284 = vector.broadcast %cst_83 : f32 to vector<8x128xf32>
    %285 = arith.subf %284, %283 : vector<8x128xf32>
    %286 = math.exp %285 : vector<8x128xf32>
    %cst_84 = arith.constant 1.000000e+00 : f32
    %287 = vector.broadcast %cst_84 : f32 to vector<8x128xf32>
    %288 = arith.addf %287, %286 : vector<8x128xf32>
    %289 = tpu.reciprocal %288 {approx = true} : vector<8x128xf32> -> vector<8x128xf32>
    %290 = vector.extract_strided_slice %277 {offsets = [0, 128], sizes = [8, 128], strides = [1, 1]} : vector<8x384xf32> to vector<8x128xf32>
    %291 = vector.extract_strided_slice %280 {offsets = [0, 128], sizes = [8, 128], strides = [1, 1]} : vector<8x384xf32> to vector<8x128xf32>
    %292 = arith.addf %290, %291 : vector<8x128xf32>
    %cst_85 = arith.constant 0.000000e+00 : f32
    %293 = vector.broadcast %cst_85 : f32 to vector<8x128xf32>
    %294 = arith.subf %293, %292 : vector<8x128xf32>
    %295 = math.exp %294 : vector<8x128xf32>
    %cst_86 = arith.constant 1.000000e+00 : f32
    %296 = vector.broadcast %cst_86 : f32 to vector<8x128xf32>
    %297 = arith.addf %296, %295 : vector<8x128xf32>
    %298 = tpu.reciprocal %297 {approx = true} : vector<8x128xf32> -> vector<8x128xf32>
    %299 = vector.extract_strided_slice %277 {offsets = [0, 256], sizes = [8, 128], strides = [1, 1]} : vector<8x384xf32> to vector<8x128xf32>
    %300 = vector.extract_strided_slice %280 {offsets = [0, 256], sizes = [8, 128], strides = [1, 1]} : vector<8x384xf32> to vector<8x128xf32>
    %301 = arith.mulf %289, %300 : vector<8x128xf32>
    %302 = arith.addf %299, %301 : vector<8x128xf32>
    %303 = math.tanh %302 : vector<8x128xf32>
    %cst_87 = arith.constant 1.000000e+00 : f32
    %304 = vector.broadcast %cst_87 : f32 to vector<8x128xf32>
    %305 = arith.subf %304, %298 : vector<8x128xf32>
    %306 = arith.mulf %305, %303 : vector<8x128xf32>
    %307 = arith.mulf %298, %263 : vector<8x128xf32>
    %308 = arith.addf %306, %307 : vector<8x128xf32>
    %309 = vector.extract_strided_slice %308 {offsets = [0, 0], sizes = [8, 64], strides = [1, 1]} : vector<8x128xf32> to vector<8x64xf32>
    %310 = arith.index_cast %c6_i32 : i32 to index
    %c0_88 = arith.constant 0 : index
    %c0_89 = arith.constant 0 : index
    %311 = vector.load %arg7[%310, %c0_88, %c0_89] : memref<8x8x64xf32, #tpu.memory_space<vmem>>, vector<1x8x64xf32>
    %312 = vector.shape_cast %311 : vector<1x8x64xf32> to vector<8x64xf32>
    %313 = vector.shape_cast %309 : vector<8x64xf32> to vector<1x8x64xf32>
    tpu.vector_store %arg7[%310, %c0_88, %c0_89], %313 {strides = array<i32>} : memref<8x8x64xf32, #tpu.memory_space<vmem>>, vector<1x8x64xf32>,
    %314 = vector.extract_strided_slice %308 {offsets = [0, 64], sizes = [8, 64], strides = [1, 1]} : vector<8x128xf32> to vector<8x64xf32>
    %c7_i32_90 = arith.constant 7 : i32
    %315 = arith.subi %c7_i32_90, %c6_i32 : i32
    %316 = arith.index_cast %315 : i32 to index
    %c0_91 = arith.constant 0 : index
    %c0_92 = arith.constant 0 : index
    %317 = vector.load %arg8[%316, %c0_91, %c0_92] : memref<8x8x64xf32, #tpu.memory_space<vmem>>, vector<1x8x64xf32>
    %318 = vector.shape_cast %317 : vector<1x8x64xf32> to vector<8x64xf32>
    %319 = vector.shape_cast %314 : vector<8x64xf32> to vector<1x8x64xf32>
    tpu.vector_store %arg8[%316, %c0_91, %c0_92], %319 {strides = array<i32>} : memref<8x8x64xf32, #tpu.memory_space<vmem>>, vector<1x8x64xf32>,
    %c7_i32_93 = arith.constant 7 : i32
    %320 = arith.index_cast %c7_i32_93 : i32 to index
    %c0_94 = arith.constant 0 : index
    %c0_95 = arith.constant 0 : index
    %321 = vector.load %arg0[%320, %c0_94, %c0_95] : memref<8x8x384xf32, #tpu.memory_space<vmem>>, vector<1x8x384xf32>
    %322 = vector.shape_cast %321 : vector<1x8x384xf32> to vector<8x384xf32>
    %323 = arith.truncf %308 : vector<8x128xf32> to vector<8x128xbf16>
    %cst_96 = arith.constant dense<0.000000e+00> : vector<8x384xf32>
    %324 = tpu.matmul %323, %0, %cst_96 {dimension_numbers = #tpu.dot_dimension_numbers<[1], [0], [0], [1], [0, 0, 1, 1], [], []>} : vector<8x128xbf16>, vector<128x384xbf16>, vector<8x384xf32> -> vector<8x384xf32>
    %325 = arith.addf %324, %3 : vector<8x384xf32>
    %326 = vector.extract_strided_slice %322 {offsets = [0, 0], sizes = [8, 128], strides = [1, 1]} : vector<8x384xf32> to vector<8x128xf32>
    %327 = vector.extract_strided_slice %325 {offsets = [0, 0], sizes = [8, 128], strides = [1, 1]} : vector<8x384xf32> to vector<8x128xf32>
    %328 = arith.addf %326, %327 : vector<8x128xf32>
    %cst_97 = arith.constant 0.000000e+00 : f32
    %329 = vector.broadcast %cst_97 : f32 to vector<8x128xf32>
    %330 = arith.subf %329, %328 : vector<8x128xf32>
    %331 = math.exp %330 : vector<8x128xf32>
    %cst_98 = arith.constant 1.000000e+00 : f32
    %332 = vector.broadcast %cst_98 : f32 to vector<8x128xf32>
    %333 = arith.addf %332, %331 : vector<8x128xf32>
    %334 = tpu.reciprocal %333 {approx = true} : vector<8x128xf32> -> vector<8x128xf32>
    %335 = vector.extract_strided_slice %322 {offsets = [0, 128], sizes = [8, 128], strides = [1, 1]} : vector<8x384xf32> to vector<8x128xf32>
    %336 = vector.extract_strided_slice %325 {offsets = [0, 128], sizes = [8, 128], strides = [1, 1]} : vector<8x384xf32> to vector<8x128xf32>
    %337 = arith.addf %335, %336 : vector<8x128xf32>
    %cst_99 = arith.constant 0.000000e+00 : f32
    %338 = vector.broadcast %cst_99 : f32 to vector<8x128xf32>
    %339 = arith.subf %338, %337 : vector<8x128xf32>
    %340 = math.exp %339 : vector<8x128xf32>
    %cst_100 = arith.constant 1.000000e+00 : f32
    %341 = vector.broadcast %cst_100 : f32 to vector<8x128xf32>
    %342 = arith.addf %341, %340 : vector<8x128xf32>
    %343 = tpu.reciprocal %342 {approx = true} : vector<8x128xf32> -> vector<8x128xf32>
    %344 = vector.extract_strided_slice %322 {offsets = [0, 256], sizes = [8, 128], strides = [1, 1]} : vector<8x384xf32> to vector<8x128xf32>
    %345 = vector.extract_strided_slice %325 {offsets = [0, 256], sizes = [8, 128], strides = [1, 1]} : vector<8x384xf32> to vector<8x128xf32>
    %346 = arith.mulf %334, %345 : vector<8x128xf32>
    %347 = arith.addf %344, %346 : vector<8x128xf32>
    %348 = math.tanh %347 : vector<8x128xf32>
    %cst_101 = arith.constant 1.000000e+00 : f32
    %349 = vector.broadcast %cst_101 : f32 to vector<8x128xf32>
    %350 = arith.subf %349, %343 : vector<8x128xf32>
    %351 = arith.mulf %350, %348 : vector<8x128xf32>
    %352 = arith.mulf %343, %308 : vector<8x128xf32>
    %353 = arith.addf %351, %352 : vector<8x128xf32>
    %354 = vector.extract_strided_slice %353 {offsets = [0, 0], sizes = [8, 64], strides = [1, 1]} : vector<8x128xf32> to vector<8x64xf32>
    %355 = arith.index_cast %c7_i32_93 : i32 to index
    %c0_102 = arith.constant 0 : index
    %c0_103 = arith.constant 0 : index
    %356 = vector.load %arg7[%355, %c0_102, %c0_103] : memref<8x8x64xf32, #tpu.memory_space<vmem>>, vector<1x8x64xf32>
    %357 = vector.shape_cast %356 : vector<1x8x64xf32> to vector<8x64xf32>
    %358 = vector.shape_cast %354 : vector<8x64xf32> to vector<1x8x64xf32>
    tpu.vector_store %arg7[%355, %c0_102, %c0_103], %358 {strides = array<i32>} : memref<8x8x64xf32, #tpu.memory_space<vmem>>, vector<1x8x64xf32>,
    %359 = vector.extract_strided_slice %353 {offsets = [0, 64], sizes = [8, 64], strides = [1, 1]} : vector<8x128xf32> to vector<8x64xf32>
    %c7_i32_104 = arith.constant 7 : i32
    %360 = arith.subi %c7_i32_104, %c7_i32_93 : i32
    %361 = arith.index_cast %360 : i32 to index
    %c0_105 = arith.constant 0 : index
    %c0_106 = arith.constant 0 : index
    %362 = vector.load %arg8[%361, %c0_105, %c0_106] : memref<8x8x64xf32, #tpu.memory_space<vmem>>, vector<1x8x64xf32>
    %363 = vector.shape_cast %362 : vector<1x8x64xf32> to vector<8x64xf32>
    %364 = vector.shape_cast %359 : vector<8x64xf32> to vector<1x8x64xf32>
    tpu.vector_store %arg8[%361, %c0_105, %c0_106], %364 {strides = array<i32>} : memref<8x8x64xf32, #tpu.memory_space<vmem>>, vector<1x8x64xf32>,
    %c8_i32 = arith.constant 8 : i32
    %c0_107 = arith.constant 0 : index
    %c0_108 = arith.constant 0 : index
    %c0_109 = arith.constant 0 : index
    %365 = vector.load %arg7[%c0_107, %c0_108, %c0_109] : memref<8x8x64xf32, #tpu.memory_space<vmem>>, vector<8x8x64xf32>
    %c0_110 = arith.constant 0 : index
    %c0_111 = arith.constant 0 : index
    %c0_112 = arith.constant 0 : index
    %366 = vector.load %arg8[%c0_110, %c0_111, %c0_112] : memref<8x8x64xf32, #tpu.memory_space<vmem>>, vector<8x8x64xf32>
    %c0_113 = arith.constant 0 : index
    %c0_114 = arith.constant 0 : index
    %367 = vector.load %arg3[%c0_113, %c0_114] : memref<2x64xf32, #tpu.memory_space<vmem>>, vector<2x64xf32>
    %c0_115 = arith.constant 0 : index
    %c0_116 = arith.constant 0 : index
    %368 = vector.load %arg4[%c0_115, %c0_116] : memref<2x64xf32, #tpu.memory_space<vmem>>, vector<2x64xf32>
    %369 = vector.extract_strided_slice %367 {offsets = [0, 0], sizes = [1, 64], strides = [1, 1]} : vector<2x64xf32> to vector<1x64xf32>
    %370 = vector.shape_cast %369 : vector<1x64xf32> to vector<1x1x64xf32>
    %371 = vector.extract_strided_slice %368 {offsets = [0, 0], sizes = [1, 64], strides = [1, 1]} : vector<2x64xf32> to vector<1x64xf32>
    %372 = vector.shape_cast %371 : vector<1x64xf32> to vector<1x1x64xf32>
    %373 = vector.broadcast %370 : vector<1x1x64xf32> to vector<8x8x64xf32>
    %374 = arith.mulf %365, %373 : vector<8x8x64xf32>
    %cst_117 = arith.constant dense<0.000000e+00> : vector<8x8xf32>
    %375 = vector.multi_reduction <add>, %374, %cst_117 [2] : vector<8x8x64xf32> to vector<8x8xf32>
    %376 = vector.broadcast %372 : vector<1x1x64xf32> to vector<8x8x64xf32>
    %377 = arith.mulf %366, %376 : vector<8x8x64xf32>
    %cst_118 = arith.constant dense<0.000000e+00> : vector<8x8xf32>
    %378 = vector.multi_reduction <add>, %377, %cst_118 [2] : vector<8x8x64xf32> to vector<8x8xf32>
    %379 = arith.addf %375, %378 : vector<8x8xf32>
    %c0_119 = arith.constant 0 : index
    %380 = memref.load %arg5[%c0_119] : memref<2xf32, #tpu.memory_space<smem>>
    %381 = vector.broadcast %380 : f32 to vector<8x8xf32>
    %382 = arith.addf %379, %381 : vector<8x8xf32>
    %cst_120 = arith.constant 0.000000e+00 : f32
    %383 = vector.broadcast %cst_120 : f32 to vector<8x8xf32>
    %384 = arith.cmpf ogt, %382, %383 : vector<8x8xf32>
    %cst_121 = arith.constant 0.000000e+00 : f32
    %385 = vector.broadcast %cst_121 : f32 to vector<8x8xf32>
    %386 = arith.minimumf %382, %385 : vector<8x8xf32>
    %387 = math.exp %386 : vector<8x8xf32>
    %cst_122 = arith.constant 1.000000e+00 : f32
    %388 = vector.broadcast %cst_122 : f32 to vector<8x8xf32>
    %389 = arith.subf %387, %388 : vector<8x8xf32>
    %390 = arith.select %384, %382, %389 : vector<8x8xi1>, vector<8x8xf32>
    %391 = vector.extract_strided_slice %367 {offsets = [1, 0], sizes = [1, 64], strides = [1, 1]} : vector<2x64xf32> to vector<1x64xf32>
    %392 = vector.shape_cast %391 : vector<1x64xf32> to vector<1x1x64xf32>
    %393 = vector.extract_strided_slice %368 {offsets = [1, 0], sizes = [1, 64], strides = [1, 1]} : vector<2x64xf32> to vector<1x64xf32>
    %394 = vector.shape_cast %393 : vector<1x64xf32> to vector<1x1x64xf32>
    %395 = vector.broadcast %392 : vector<1x1x64xf32> to vector<8x8x64xf32>
    %396 = arith.mulf %365, %395 : vector<8x8x64xf32>
    %cst_123 = arith.constant dense<0.000000e+00> : vector<8x8xf32>
    %397 = vector.multi_reduction <add>, %396, %cst_123 [2] : vector<8x8x64xf32> to vector<8x8xf32>
    %398 = vector.broadcast %394 : vector<1x1x64xf32> to vector<8x8x64xf32>
    %399 = arith.mulf %366, %398 : vector<8x8x64xf32>
    %cst_124 = arith.constant dense<0.000000e+00> : vector<8x8xf32>
    %400 = vector.multi_reduction <add>, %399, %cst_124 [2] : vector<8x8x64xf32> to vector<8x8xf32>
    %401 = arith.addf %397, %400 : vector<8x8xf32>
    %c1 = arith.constant 1 : index
    %402 = memref.load %arg5[%c1] : memref<2xf32, #tpu.memory_space<smem>>
    %403 = vector.broadcast %402 : f32 to vector<8x8xf32>
    %404 = arith.addf %401, %403 : vector<8x8xf32>
    %cst_125 = arith.constant 0.000000e+00 : f32
    %405 = vector.broadcast %cst_125 : f32 to vector<8x8xf32>
    %406 = arith.cmpf ogt, %404, %405 : vector<8x8xf32>
    %cst_126 = arith.constant 0.000000e+00 : f32
    %407 = vector.broadcast %cst_126 : f32 to vector<8x8xf32>
    %408 = arith.minimumf %404, %407 : vector<8x8xf32>
    %409 = math.exp %408 : vector<8x8xf32>
    %cst_127 = arith.constant 1.000000e+00 : f32
    %410 = vector.broadcast %cst_127 : f32 to vector<8x8xf32>
    %411 = arith.subf %409, %410 : vector<8x8xf32>
    %412 = arith.select %406, %404, %411 : vector<8x8xi1>, vector<8x8xf32>
    %413 = tpu.iota {dimensions = array<i32: 1>} : vector<8x8xi32>
    %c2_i32_128 = arith.constant 2 : i32
    %414 = vector.broadcast %c2_i32_128 : i32 to vector<8x8xi32>
    %415 = arith.cmpi slt, %413, %414 : vector<8x8xi32>
    %cst_129 = arith.constant 0.000000e+00 : f32
    %416 = vector.broadcast %cst_129 : f32 to vector<8x8xf32>
    %417 = arith.select %415, %390, %416 : vector<8x8xi1>, vector<8x8xf32>
    %cst_130 = arith.constant 0.000000e+00 : f32
    %418 = vector.broadcast %cst_130 : f32 to vector<8x8xf32>
    %419 = arith.select %415, %412, %418 : vector<8x8xi1>, vector<8x8xf32>
    %420 = vector.shape_cast %417 : vector<8x8xf32> to vector<1x8x8xf32>
    %cst_131 = arith.constant dense<0.000000e+00> : vector<1xf32>
    %421 = vector.multi_reduction <add>, %420, %cst_131 [1, 2] : vector<1x8x8xf32> to vector<1xf32>
    %422 = vector.shape_cast %421 : vector<1xf32> to vector<1x1x1xf32>
    %423 = vector.extract %422[0, 0, 0] : f32 from vector<1x1x1xf32>
    %424 = vector.shape_cast %419 : vector<8x8xf32> to vector<1x8x8xf32>
    %cst_132 = arith.constant dense<0.000000e+00> : vector<1xf32>
    %425 = vector.multi_reduction <add>, %424, %cst_132 [1, 2] : vector<1x8x8xf32> to vector<1xf32>
    %426 = vector.shape_cast %425 : vector<1xf32> to vector<1x1x1xf32>
    %427 = vector.extract %426[0, 0, 0] : f32 from vector<1x1x1xf32>
    %428 = arith.addf %423, %427 : f32
    %429 = arith.mulf %417, %417 : vector<8x8xf32>
    %430 = vector.shape_cast %429 : vector<8x8xf32> to vector<1x8x8xf32>
    %cst_133 = arith.constant dense<0.000000e+00> : vector<1xf32>
    %431 = vector.multi_reduction <add>, %430, %cst_133 [1, 2] : vector<1x8x8xf32> to vector<1xf32>
    %432 = vector.shape_cast %431 : vector<1xf32> to vector<1x1x1xf32>
    %433 = vector.extract %432[0, 0, 0] : f32 from vector<1x1x1xf32>
    %434 = arith.mulf %419, %419 : vector<8x8xf32>
    %435 = vector.shape_cast %434 : vector<8x8xf32> to vector<1x8x8xf32>
    %cst_134 = arith.constant dense<0.000000e+00> : vector<1xf32>
    %436 = vector.multi_reduction <add>, %435, %cst_134 [1, 2] : vector<1x8x8xf32> to vector<1xf32>
    %437 = vector.shape_cast %436 : vector<1xf32> to vector<1x1x1xf32>
    %438 = vector.extract %437[0, 0, 0] : f32 from vector<1x1x1xf32>
    %439 = arith.addf %433, %438 : f32
    %cst_135 = arith.constant 3.200000e+01 : f32
    %440 = arith.divf %428, %cst_135 : f32
    %441 = arith.mulf %428, %428 : f32
    %cst_136 = arith.constant 3.200000e+01 : f32
    %442 = arith.divf %441, %cst_136 : f32
    %443 = arith.subf %439, %442 : f32
    %cst_137 = arith.constant 3.100000e+01 : f32
    %444 = arith.divf %443, %cst_137 : f32
    %445 = math.sqrt %444 : f32
    %cst_138 = arith.constant 1.000000e+00 : f32
    %446 = arith.divf %cst_138, %445 : f32
    %447 = vector.broadcast %440 : f32 to vector<8x8xf32>
    %448 = arith.subf %390, %447 : vector<8x8xf32>
    %449 = vector.broadcast %446 : f32 to vector<8x8xf32>
    %450 = arith.mulf %448, %449 : vector<8x8xf32>
    %c0_139 = arith.constant 0 : index
    %c0_140 = arith.constant 0 : index
    %c0_141 = arith.constant 0 : index
    %451 = vector.load %arg6[%c0_139, %c0_140, %c0_141] : memref<2x8x8xf32, #tpu.memory_space<vmem>>, vector<1x8x8xf32>
    %452 = vector.shape_cast %451 : vector<1x8x8xf32> to vector<8x8xf32>
    %453 = vector.shape_cast %450 : vector<8x8xf32> to vector<1x8x8xf32>
    tpu.vector_store %arg6[%c0_139, %c0_140, %c0_141], %453 {strides = array<i32>} : memref<2x8x8xf32, #tpu.memory_space<vmem>>, vector<1x8x8xf32>,
    %454 = vector.broadcast %440 : f32 to vector<8x8xf32>
    %455 = arith.subf %412, %454 : vector<8x8xf32>
    %456 = vector.broadcast %446 : f32 to vector<8x8xf32>
    %457 = arith.mulf %455, %456 : vector<8x8xf32>
    %c1_142 = arith.constant 1 : index
    %c0_143 = arith.constant 0 : index
    %c0_144 = arith.constant 0 : index
    %458 = vector.load %arg6[%c1_142, %c0_143, %c0_144] : memref<2x8x8xf32, #tpu.memory_space<vmem>>, vector<1x8x8xf32>
    %459 = vector.shape_cast %458 : vector<1x8x8xf32> to vector<8x8xf32>
    %460 = vector.shape_cast %457 : vector<8x8xf32> to vector<1x8x8xf32>
    tpu.vector_store %arg6[%c1_142, %c0_143, %c0_144], %460 {strides = array<i32>} : memref<2x8x8xf32, #tpu.memory_space<vmem>>, vector<1x8x8xf32>,
    return
  }
}

</mosaic_0001>

<llo_original>
// kernel: reverse.1
$region0: #{reverse.1}
  #allocation0 [shape = 's32[1]{0}', space=sflag, size = 0x4, scoped, tag = 'scoped memory for reverse.1']
  %s0 = inlined_call_operand.vmem [shape: f32[8,8,32], index: 0, kind: input, shape index: {}]
  %s1 = inlined_call_operand.vmem [shape: f32[8,8,32], index: 1, kind: output, shape index: {}]
  %s2 = scalar_lea.vmem %s0, 56
  %v3 = vld [vmem:[%s2] sm:$0xff]
  %4 = vst [vmem:[%s1] sm:$0xff] %v3
  %s5 = scalar_lea.vmem %s0, 48
  %v6 = vld [vmem:[%s5] sm:$0xff]
  %s7 = scalar_lea.vmem %s1, 8
  %8 = vst [vmem:[%s7] sm:$0xff] %v6
  %s9 = scalar_lea.vmem %s0, 40
  %v10 = vld [vmem:[%s9] sm:$0xff]
  %s11 = scalar_lea.vmem %s1, 16
  %12 = vst [vmem:[%s11] sm:$0xff] %v10
  %s13 = scalar_lea.vmem %s0, 32
  %v14 = vld [vmem:[%s13] sm:$0xff]
  %s15 = scalar_lea.vmem %s1, 24
  %16 = vst [vmem:[%s15] sm:$0xff] %v14
  %s17 = scalar_lea.vmem %s0, 24
  %v18 = vld [vmem:[%s17] sm:$0xff]
  %s19 = scalar_lea.vmem %s1, 32
  %20 = vst [vmem:[%s19] sm:$0xff] %v18
  %s21 = scalar_lea.vmem %s0, 16
  %v22 = vld [vmem:[%s21] sm:$0xff]
  %s23 = scalar_lea.vmem %s1, 40
  %24 = vst [vmem:[%s23] sm:$0xff] %v22
  %s25 = scalar_lea.vmem %s0, 8
  %v26 = vld [vmem:[%s25] sm:$0xff]
  %s27 = scalar_lea.vmem %s1, 48
  %28 = vst [vmem:[%s27] sm:$0xff] %v26
  %v29 = vld [vmem:[%s0] sm:$0xff]
  %s30 = scalar_lea.vmem %s1, 56
  %31 = vst [vmem:[%s30] sm:$0xff] %v29

// kernel: _lambda_.2
$region0: #{_lambda_.2}
  #allocation0 [shape = 'u32[]', space=smem, size = 0x4, offset = 0x4, fixed_abs, tag = 'smem constant byte address 0x4 - core index']
  #allocation1 [shape = 'u32[144,128]{1,0:T(1,128)}', space=vmem, size = 0x12000, scoped, tag = 'internal scratch']
  %s0 = inlined_call_operand.vmem [shape: f32[8,8,384], index: 0, kind: input, shape index: {}]
  %s1 = inlined_call_operand.vmem [shape: bf16[128,384], index: 1, kind: input, shape index: {}]
  %s2 = inlined_call_operand.vmem [shape: f32[1,384], index: 2, kind: input, shape index: {}]
  %s3 = inlined_call_operand.vmem [shape: f32[8,8,64], index: 3, kind: output, shape index: {0}]
  %s4 = inlined_call_operand.vmem [shape: f32[8,8,64], index: 4, kind: output, shape index: {1}]
  %5 = xla_tuple %s3, %s4
  %s6 = sld [smem:[#allocation0]]
  $region30: #{_lambda_.2} parent=0
    _
  %s8 = ssub.s32 1, %s6
  %s9 = scalar_select 0, %s8, %s6
  // Predicated region
  $region2: #{_lambda_.2} parent=0 // pred_check
    _
  $region3: #{_lambda_.2} parent=0 // pred_check_branch
    %11 = sbr.rel (0) target = $region5
  $region4: #{_lambda_.2} parent=0 // pred_region
    _
  $region5: #{_lambda_.2} parent=0 // pred_fallthru
    _
  // Predicated region
  $region6: #{_lambda_.2} parent=0 // pred_check
    _
  $region7: #{_lambda_.2} parent=0 // pred_check_branch
    %13 = sbr.rel (0) target = $region9
  $region8: #{_lambda_.2} parent=0 // pred_region
    _
  $region9: #{_lambda_.2} parent=0 // pred_fallthru
    _
  // Predicated region
  $region10: #{_lambda_.2} parent=0 // pred_check
    _
  $region11: #{_lambda_.2} parent=0 // pred_check_branch
    %15 = sbr.rel (0) target = $region13
  $region12: #{_lambda_.2} parent=0 // pred_region
    _
  $region13: #{_lambda_.2} parent=0 // pred_fallthru
    _
  %v17 = vld [vmem:[%s1] sm:$0xff]
  %v18 = vld [vmem:[%s1 + $0x8] sm:$0xf]
  %v19 = vld [vmem:[%s1 + $0xc] sm:$0xff]
  %v20 = vld [vmem:[%s1 + $0x14] sm:$0xf]
  %v21 = vld [vmem:[%s1 + $0x18] sm:$0xff]
  %v22 = vld [vmem:[%s1 + $0x20] sm:$0xf]
  %v23 = vld [vmem:[%s1 + $0x24] sm:$0xff]
  %v24 = vld [vmem:[%s1 + $0x2c] sm:$0xf]
  %v25 = vld [vmem:[%s1 + $0x30] sm:$0xff]
  %v26 = vld [vmem:[%s1 + $0x38] sm:$0xf]
  %v27 = vld [vmem:[%s1 + $0x3c] sm:$0xff]
  %v28 = vld [vmem:[%s1 + $0x44] sm:$0xf]
  %v29 = vld [vmem:[%s1 + $0x48] sm:$0xff]
  %v30 = vld [vmem:[%s1 + $0x50] sm:$0xf]
  %v31 = vld [vmem:[%s1 + $0x54] sm:$0xff]
  %v32 = vld [vmem:[%s1 + $0x5c] sm:$0xf]
  %v33 = vld [vmem:[%s1 + $0x60] sm:$0xff]
  %v34 = vld [vmem:[%s1 + $0x68] sm:$0xf]
  %v35 = vld [vmem:[%s1 + $0x6c] sm:$0xff]
  %v36 = vld [vmem:[%s1 + $0x74] sm:$0xf]
  %v37 = vld [vmem:[%s1 + $0x78] sm:$0xff]
  %v38 = vld [vmem:[%s1 + $0x80] sm:$0xf]
  %v39 = vld [vmem:[%s1 + $0x84] sm:$0xff]
  %v40 = vld [vmem:[%s1 + $0x8c] sm:$0xf]
  %v41 = vld [vmem:[%s1 + $0x90] sm:$0xff]
  %v42 = vld [vmem:[%s1 + $0x98] sm:$0xf]
  %v43 = vld [vmem:[%s1 + $0x9c] sm:$0xff]
  %v44 = vld [vmem:[%s1 + $0xa4] sm:$0xf]
  %v45 = vld [vmem:[%s1 + $0xa8] sm:$0xff]
  %v46 = vld [vmem:[%s1 + $0xb0] sm:$0xf]
  %v47 = vld [vmem:[%s1 + $0xb4] sm:$0xff]
  %v48 = vld [vmem:[%s1 + $0xbc] sm:$0xf]
  %v49 = vld [vmem:[%s2] sm:$0x7]
  %v51 = vlaneseq
  %v52 = vshrl.u32 %v51, 7
  %v53 = vsub.s32 0, %v52
  %v54 = vrot.slane %v49, %v53
  %v55 = vlaneseq
  %v56 = vshrl.u32 %v55, 7
  %v57 = vsub.s32 1, %v56
  %v58 = vrot.slane %v49, %v57
  %v59 = vlaneseq
  %v60 = vshrl.u32 %v59, 7
  %v61 = vsub.s32 2, %v60
  %v62 = vrot.slane %v49, %v61
  %v66 = vld [vmem:[%s0] sm:$0xff]
  %v67 = vld [vmem:[%s0 + $0x8] sm:$0xff]
  %v68 = vld [vmem:[%s0 + $0x10] sm:$0xff]
  %v101 = vunpack.c.l.b16 %v17
  %v102 = vunpack.c.h.b16 %v17
  %v103 = vunpack.c.l.b16 %v18
  %v104 = vunpack.c.l.b16 %v19
  %v105 = vunpack.c.h.b16 %v19
  %v106 = vunpack.c.l.b16 %v20
  %v107 = vunpack.c.l.b16 %v21
  %v108 = vunpack.c.h.b16 %v21
  %v109 = vunpack.c.l.b16 %v22
  %v110 = vunpack.c.l.b16 %v23
  %v111 = vunpack.c.h.b16 %v23
  %v112 = vunpack.c.l.b16 %v24
  %v113 = vunpack.c.l.b16 %v25
  %v114 = vunpack.c.h.b16 %v25
  %v115 = vunpack.c.l.b16 %v26
  %v116 = vunpack.c.l.b16 %v27
  %v117 = vunpack.c.h.b16 %v27
  %v118 = vunpack.c.l.b16 %v28
  %v119 = vunpack.c.l.b16 %v29
  %v120 = vunpack.c.h.b16 %v29
  %v121 = vunpack.c.l.b16 %v30
  %v122 = vunpack.c.l.b16 %v31
  %v123 = vunpack.c.h.b16 %v31
  %v124 = vunpack.c.l.b16 %v32
  %v125 = vunpack.c.l.b16 %v33
  %v126 = vunpack.c.h.b16 %v33
  %v127 = vunpack.c.l.b16 %v34
  %v128 = vunpack.c.l.b16 %v35
  %v129 = vunpack.c.h.b16 %v35
  %v130 = vunpack.c.l.b16 %v36
  %v131 = vunpack.c.l.b16 %v37
  %v132 = vunpack.c.h.b16 %v37
  %v133 = vunpack.c.l.b16 %v38
  %v134 = vunpack.c.l.b16 %v39
  %v135 = vunpack.c.h.b16 %v39
  %v136 = vunpack.c.l.b16 %v40
  %v137 = vunpack.c.l.b16 %v41
  %v138 = vunpack.c.h.b16 %v41
  %v139 = vunpack.c.l.b16 %v42
  %v140 = vunpack.c.l.b16 %v43
  %v141 = vunpack.c.h.b16 %v43
  %v142 = vunpack.c.l.b16 %v44
  %v143 = vunpack.c.l.b16 %v45
  %v144 = vunpack.c.h.b16 %v45
  %v145 = vunpack.c.l.b16 %v46
  %v146 = vunpack.c.l.b16 %v47
  %v147 = vunpack.c.h.b16 %v47
  %v148 = vunpack.c.l.b16 %v48
  %v149 = vpack.c.b16 %v104, %v101
  %v150 = vpack.c.b16 %v105, %v102
  %v151 = vpack.c.b16 %v106, %v103
  %v152 = vpack.c.b16 %v110, %v107
  %v153 = vpack.c.b16 %v111, %v108
  %v154 = vpack.c.b16 %v112, %v109
  %v155 = vpack.c.b16 %v116, %v113
  %v156 = vpack.c.b16 %v117, %v114
  %v157 = vpack.c.b16 %v118, %v115
  %v158 = vpack.c.b16 %v122, %v119
  %v159 = vpack.c.b16 %v123, %v120
  %v160 = vpack.c.b16 %v124, %v121
  %v161 = vpack.c.b16 %v128, %v125
  %v162 = vpack.c.b16 %v129, %v126
  %v163 = vpack.c.b16 %v130, %v127
  %v164 = vpack.c.b16 %v134, %v131
  %v165 = vpack.c.b16 %v135, %v132
  %v166 = vpack.c.b16 %v136, %v133
  %v167 = vpack.c.b16 %v140, %v137
  %v168 = vpack.c.b16 %v141, %v138
  %v169 = vpack.c.b16 %v142, %v139
  %v170 = vpack.c.b16 %v146, %v143
  %v171 = vpack.c.b16 %v147, %v144
  %v172 = vpack.c.b16 %v148, %v145
  %197 = vmatprep.subr.bf16.mxu0 %v150
  %198 = vmatpush1.bf16.msra.mxu0 %v149
  %199 = vmatprep.subr.bf16.mxu0 %v153
  %200 = vmatpush1.bf16.msra.mxu0 %v152
  %201 = vmatprep.subr.bf16.mxu0 %v156
  %202 = vmatpush1.bf16.msra.mxu0 %v155
  %203 = vmatprep.subr.bf16.mxu0 %v159
  %204 = vmatpush1.bf16.msra.mxu0 %v158
  %205 = vmatprep.subr.bf16.mxu0 %v162
  %206 = vmatpush1.bf16.msra.mxu0 %v161
  %207 = vmatprep.subr.bf16.mxu0 %v165
  %208 = vmatpush1.bf16.msra.mxu0 %v164
  %209 = vmatprep.subr.bf16.mxu0 %v168
  %210 = vmatpush1.bf16.msra.mxu0 %v167
  %211 = vmatprep.subr.bf16.mxu0 %v171
  %212 = vmatpush1.bf16.msra.mxu0 %v170
  %213 = vmatprep.subr.bf16.mxu0 0
  %214 = vmatpush1.bf16.msra.mxu0 0
  %215 = vmatprep.subr.bf16.mxu0 0
  %216 = vmatpush1.bf16.msra.mxu0 0
  %217 = vmatprep.subr.bf16.mxu0 0
  %218 = vmatpush1.bf16.msra.mxu0 0
  %219 = vmatprep.subr.bf16.mxu0 0
  %220 = vmatpush1.bf16.msra.mxu0 0
  %221 = vmatprep.subr.bf16.mxu0 0
  %222 = vmatpush1.bf16.msra.mxu0 0
  %223 = vmatprep.subr.bf16.mxu0 0
  %224 = vmatpush1.bf16.msra.mxu0 0
  %225 = vmatprep.subr.bf16.mxu0 0
  %226 = vmatpush1.bf16.msra.mxu0 0
  %227 = vmatprep.subr.bf16.mxu0 0
  %228 = vmatpush1.bf16.msra.mxu0 0
  %229 = vmatprep.mubr.bf16.mxu0 0
  %230 = vmatmul.mubr.bf16.gmra.mrb[0].mxu0 0
  %v231 = vpop.f32.mrb[0].mxu0
  %v232 = vadd.f32 %v54, %v231
  %v233 = vpop.f32.mrb[0].mxu0
  %v234 = vadd.f32 %v58, %v233
  %v235 = vpop.f32.mrb[0].mxu0
  %v236 = vpop.f32.mrb[0].mxu0
  %237 = vdwg.mxu0
  %238 = vmatprep.subr.bf16.mxu0 0
  %239 = vmatpush1.bf16.msra.mxu0 %v151
  %240 = vmatprep.subr.bf16.mxu0 0
  %241 = vmatpush1.bf16.msra.mxu0 %v154
  %242 = vmatprep.subr.bf16.mxu0 0
  %243 = vmatpush1.bf16.msra.mxu0 %v157
  %244 = vmatprep.subr.bf16.mxu0 0
  %245 = vmatpush1.bf16.msra.mxu0 %v160
  %246 = vmatprep.subr.bf16.mxu0 0
  %247 = vmatpush1.bf16.msra.mxu0 %v163
  %248 = vmatprep.subr.bf16.mxu0 0
  %249 = vmatpush1.bf16.msra.mxu0 %v166
  %250 = vmatprep.subr.bf16.mxu0 0
  %251 = vmatpush1.bf16.msra.mxu0 %v169
  %252 = vmatprep.subr.bf16.mxu0 0
  %253 = vmatpush1.bf16.msra.mxu0 %v172
  %254 = vmatprep.subr.bf16.mxu0 0
  %255 = vmatpush1.bf16.msra.mxu0 0
  %256 = vmatprep.subr.bf16.mxu0 0
  %257 = vmatpush1.bf16.msra.mxu0 0
  %258 = vmatprep.subr.bf16.mxu0 0
  %259 = vmatpush1.bf16.msra.mxu0 0
  %260 = vmatprep.subr.bf16.mxu0 0
  %261 = vmatpush1.bf16.msra.mxu0 0
  %262 = vmatprep.subr.bf16.mxu0 0
  %263 = vmatpush1.bf16.msra.mxu0 0
  %264 = vmatprep.subr.bf16.mxu0 0
  %265 = vmatpush1.bf16.msra.mxu0 0
  %266 = vmatprep.subr.bf16.mxu0 0
  %267 = vmatpush1.bf16.msra.mxu0 0
  %268 = vmatprep.subr.bf16.mxu0 0
  %269 = vmatpush1.bf16.msra.mxu0 0
  %270 = vmatprep.mubr.bf16.mxu0 0
  %271 = vmatmul.mubr.bf16.gmra.mrb[0].mxu0 0
  %v272 = vpop.f32.mrb[0].mxu0
  %v273 = vadd.f32 %v62, %v272
  %v274 = vpop.f32.mrb[0].mxu0
  %v275 = vpop.f32.mrb[0].mxu0
  %v276 = vpop.f32.mrb[0].mxu0
  %277 = vdwg.mxu0
  %v278 = vadd.f32 %v66, %v232
  %v279 = vsub.f32 0.0, %v278
  %v280 = vmul.f32 %v279, 1.442695
  %v281 = vpow.pop %v280
  %v282 = vadd.f32 %v281, 1.0
  %v283 = vrcp.pop %v282
  %v284 = vadd.f32 %v67, %v234
  %v285 = vsub.f32 0.0, %v284
  %v286 = vmul.f32 %v285, 1.442695
  %v287 = vpow.pop %v286
  %v288 = vadd.f32 %v287, 1.0
  %v289 = vrcp.pop %v288
  %v290 = vmul.f32 %v283, %v273
  %v291 = vadd.f32 %v68, %v290
  %v292 = vtanh.pop %v291
  %v293 = vsub.f32 1.0, %v289
  %v294 = vmul.f32 %v293, %v292
  %v295 = vmul.f32 %v289, 0.0
  %v296 = vadd.f32 %v294, %v295
  %vm297 = vcmask 523264
  %298 = vst.msk [vmem:[%s3] sm:$0xff] %vm297, %v296
  %300 = vrot.lane.b32.xlu0 %v296, 64
  %v301 = vpop.permute.xlu0 %300
  %s303 = scalar_lea.vmem %s4, 56
  %304 = vst.msk [vmem:[%s303] sm:$0xff] %vm297, %v301
  %s305 = scalar_lea.vmem %s0, 24
  %v306 = vld [vmem:[%s305] sm:$0xff]
  %v307 = vld [vmem:[%s305 + $0x8] sm:$0xff]
  %v308 = vld [vmem:[%s305 + $0x10] sm:$0xff]
  %v309 = vpack.c.bf16 %v296, %v296
  %310 = vmatprep.subr.bf16.mxu0 %v150
  %311 = vmatpush1.bf16.msra.mxu0 %v149
  %312 = vmatprep.subr.bf16.mxu0 %v153
  %313 = vmatpush1.bf16.msra.mxu0 %v152
  %314 = vmatprep.subr.bf16.mxu0 %v156
  %315 = vmatpush1.bf16.msra.mxu0 %v155
  %316 = vmatprep.subr.bf16.mxu0 %v159
  %317 = vmatpush1.bf16.msra.mxu0 %v158
  %318 = vmatprep.subr.bf16.mxu0 %v162
  %319 = vmatpush1.bf16.msra.mxu0 %v161
  %320 = vmatprep.subr.bf16.mxu0 %v165
  %321 = vmatpush1.bf16.msra.mxu0 %v164
  %322 = vmatprep.subr.bf16.mxu0 %v168
  %323 = vmatpush1.bf16.msra.mxu0 %v167
  %324 = vmatprep.subr.bf16.mxu0 %v171
  %325 = vmatpush1.bf16.msra.mxu0 %v170
  %326 = vmatprep.subr.bf16.mxu0 0
  %327 = vmatpush1.bf16.msra.mxu0 0
  %328 = vmatprep.subr.bf16.mxu0 0
  %329 = vmatpush1.bf16.msra.mxu0 0
  %330 = vmatprep.subr.bf16.mxu0 0
  %331 = vmatpush1.bf16.msra.mxu0 0
  %332 = vmatprep.subr.bf16.mxu0 0
  %333 = vmatpush1.bf16.msra.mxu0 0
  %334 = vmatprep.subr.bf16.mxu0 0
  %335 = vmatpush1.bf16.msra.mxu0 0
  %336 = vmatprep.subr.bf16.mxu0 0
  %337 = vmatpush1.bf16.msra.mxu0 0
  %338 = vmatprep.subr.bf16.mxu0 0
  %339 = vmatpush1.bf16.msra.mxu0 0
  %340 = vmatprep.subr.bf16.mxu0 0
  %341 = vmatpush1.bf16.msra.mxu0 0
  %342 = vmatprep.mubr.bf16.mxu0 0
  %343 = vmatmul.mubr.bf16.gmra.mrb[0].mxu0 %v309
  %v344 = vpop.f32.mrb[0].mxu0
  %v345 = vadd.f32 %v54, %v344
  %v346 = vpop.f32.mrb[0].mxu0
  %v347 = vadd.f32 %v58, %v346
  %v348 = vpop.f32.mrb[0].mxu0
  %v349 = vpop.f32.mrb[0].mxu0
  %350 = vdwg.mxu0
  %351 = vmatprep.subr.bf16.mxu0 0
  %352 = vmatpush1.bf16.msra.mxu0 %v151
  %353 = vmatprep.subr.bf16.mxu0 0
  %354 = vmatpush1.bf16.msra.mxu0 %v154
  %355 = vmatprep.subr.bf16.mxu0 0
  %356 = vmatpush1.bf16.msra.mxu0 %v157
  %357 = vmatprep.subr.bf16.mxu0 0
  %358 = vmatpush1.bf16.msra.mxu0 %v160
  %359 = vmatprep.subr.bf16.mxu0 0
  %360 = vmatpush1.bf16.msra.mxu0 %v163
  %361 = vmatprep.subr.bf16.mxu0 0
  %362 = vmatpush1.bf16.msra.mxu0 %v166
  %363 = vmatprep.subr.bf16.mxu0 0
  %364 = vmatpush1.bf16.msra.mxu0 %v169
  %365 = vmatprep.subr.bf16.mxu0 0
  %366 = vmatpush1.bf16.msra.mxu0 %v172
  %367 = vmatprep.subr.bf16.mxu0 0
  %368 = vmatpush1.bf16.msra.mxu0 0
  %369 = vmatprep.subr.bf16.mxu0 0
  %370 = vmatpush1.bf16.msra.mxu0 0
  %371 = vmatprep.subr.bf16.mxu0 0
  %372 = vmatpush1.bf16.msra.mxu0 0
  %373 = vmatprep.subr.bf16.mxu0 0
  %374 = vmatpush1.bf16.msra.mxu0 0
  %375 = vmatprep.subr.bf16.mxu0 0
  %376 = vmatpush1.bf16.msra.mxu0 0
  %377 = vmatprep.subr.bf16.mxu0 0
  %378 = vmatpush1.bf16.msra.mxu0 0
  %379 = vmatprep.subr.bf16.mxu0 0
  %380 = vmatpush1.bf16.msra.mxu0 0
  %381 = vmatprep.subr.bf16.mxu0 0
  %382 = vmatpush1.bf16.msra.mxu0 0
  %383 = vmatprep.mubr.bf16.mxu0 0
  %384 = vmatmul.mubr.bf16.gmra.mrb[0].mxu0 %v309
  %v385 = vpop.f32.mrb[0].mxu0
  %v386 = vadd.f32 %v62, %v385
  %v387 = vpop.f32.mrb[0].mxu0
  %v388 = vpop.f32.mrb[0].mxu0
  %v389 = vpop.f32.mrb[0].mxu0
  %390 = vdwg.mxu0
  %v391 = vadd.f32 %v306, %v345
  %v392 = vsub.f32 0.0, %v391
  %v393 = vmul.f32 %v392, 1.442695
  %v394 = vpow.pop %v393
  %v395 = vadd.f32 %v394, 1.0
  %v396 = vrcp.pop %v395
  %v397 = vadd.f32 %v307, %v347
  %v398 = vsub.f32 0.0, %v397
  %v399 = vmul.f32 %v398, 1.442695
  %v400 = vpow.pop %v399
  %v401 = vadd.f32 %v400, 1.0
  %v402 = vrcp.pop %v401
  %v403 = vmul.f32 %v396, %v386
  %v404 = vadd.f32 %v308, %v403
  %v405 = vtanh.pop %v404
  %v406 = vsub.f32 1.0, %v402
  %v407 = vmul.f32 %v406, %v405
  %v408 = vmul.f32 %v402, %v296
  %v409 = vadd.f32 %v407, %v408
  %s410 = scalar_lea.vmem %s3, 8
  %411 = vst.msk [vmem:[%s410] sm:$0xff] %vm297, %v409
  %413 = vrot.lane.b32.xlu0 %v409, 64
  %v414 = vpop.permute.xlu0 %413
  %s416 = scalar_lea.vmem %s4, 48
  %417 = vst.msk [vmem:[%s416] sm:$0xff] %vm297, %v414
  %s418 = scalar_lea.vmem %s0, 48
  %v419 = vld [vmem:[%s418] sm:$0xff]
  %v420 = vld [vmem:[%s418 + $0x8] sm:$0xff]
  %v421 = vld [vmem:[%s418 + $0x10] sm:$0xff]
  %v422 = vpack.c.bf16 %v409, %v409
  %423 = vmatprep.subr.bf16.mxu0 %v150
  %424 = vmatpush1.bf16.msra.mxu0 %v149
  %425 = vmatprep.subr.bf16.mxu0 %v153
  %426 = vmatpush1.bf16.msra.mxu0 %v152
  %427 = vmatprep.subr.bf16.mxu0 %v156
  %428 = vmatpush1.bf16.msra.mxu0 %v155
  %429 = vmatprep.subr.bf16.mxu0 %v159
  %430 = vmatpush1.bf16.msra.mxu0 %v158
  %431 = vmatprep.subr.bf16.mxu0 %v162
  %432 = vmatpush1.bf16.msra.mxu0 %v161
  %433 = vmatprep.subr.bf16.mxu0 %v165
  %434 = vmatpush1.bf16.msra.mxu0 %v164
  %435 = vmatprep.subr.bf16.mxu0 %v168
  %436 = vmatpush1.bf16.msra.mxu0 %v167
  %437 = vmatprep.subr.bf16.mxu0 %v171
  %438 = vmatpush1.bf16.msra.mxu0 %v170
  %439 = vmatprep.subr.bf16.mxu0 0
  %440 = vmatpush1.bf16.msra.mxu0 0
  %441 = vmatprep.subr.bf16.mxu0 0
  %442 = vmatpush1.bf16.msra.mxu0 0
  %443 = vmatprep.subr.bf16.mxu0 0
  %444 = vmatpush1.bf16.msra.mxu0 0
  %445 = vmatprep.subr.bf16.mxu0 0
  %446 = vmatpush1.bf16.msra.mxu0 0
  %447 = vmatprep.subr.bf16.mxu0 0
  %448 = vmatpush1.bf16.msra.mxu0 0
  %449 = vmatprep.subr.bf16.mxu0 0
  %450 = vmatpush1.bf16.msra.mxu0 0
  %451 = vmatprep.subr.bf16.mxu0 0
  %452 = vmatpush1.bf16.msra.mxu0 0
  %453 = vmatprep.subr.bf16.mxu0 0
  %454 = vmatpush1.bf16.msra.mxu0 0
  %455 = vmatprep.mubr.bf16.mxu0 0
  %456 = vmatmul.mubr.bf16.gmra.mrb[0].mxu0 %v422
  %v457 = vpop.f32.mrb[0].mxu0
  %v458 = vadd.f32 %v54, %v457
  %v459 = vpop.f32.mrb[0].mxu0
  %v460 = vadd.f32 %v58, %v459
  %v461 = vpop.f32.mrb[0].mxu0
  %v462 = vpop.f32.mrb[0].mxu0
  %463 = vdwg.mxu0
  %464 = vmatprep.subr.bf16.mxu0 0
  %465 = vmatpush1.bf16.msra.mxu0 %v151
  %466 = vmatprep.subr.bf16.mxu0 0
  %467 = vmatpush1.bf16.msra.mxu0 %v154
  %468 = vmatprep.subr.bf16.mxu0 0
  %469 = vmatpush1.bf16.msra.mxu0 %v157
  %470 = vmatprep.subr.bf16.mxu0 0
  %471 = vmatpush1.bf16.msra.mxu0 %v160
  %472 = vmatprep.subr.bf16.mxu0 0
  %473 = vmatpush1.bf16.msra.mxu0 %v163
  %474 = vmatprep.subr.bf16.mxu0 0
  %475 = vmatpush1.bf16.msra.mxu0 %v166
  %476 = vmatprep.subr.bf16.mxu0 0
  %477 = vmatpush1.bf16.msra.mxu0 %v169
  %478 = vmatprep.subr.bf16.mxu0 0
  %479 = vmatpush1.bf16.msra.mxu0 %v172
  %480 = vmatprep.subr.bf16.mxu0 0
  %481 = vmatpush1.bf16.msra.mxu0 0
  %482 = vmatprep.subr.bf16.mxu0 0
  %483 = vmatpush1.bf16.msra.mxu0 0
  %484 = vmatprep.subr.bf16.mxu0 0
  %485 = vmatpush1.bf16.msra.mxu0 0
  %486 = vmatprep.subr.bf16.mxu0 0
  %487 = vmatpush1.bf16.msra.mxu0 0
  %488 = vmatprep.subr.bf16.mxu0 0
  %489 = vmatpush1.bf16.msra.mxu0 0
  %490 = vmatprep.subr.bf16.mxu0 0
  %491 = vmatpush1.bf16.msra.mxu0 0
  %492 = vmatprep.subr.bf16.mxu0 0
  %493 = vmatpush1.bf16.msra.mxu0 0
  %494 = vmatprep.subr.bf16.mxu0 0
  %495 = vmatpush1.bf16.msra.mxu0 0
  %496 = vmatprep.mubr.bf16.mxu0 0
  %497 = vmatmul.mubr.bf16.gmra.mrb[0].mxu0 %v422
  %v498 = vpop.f32.mrb[0].mxu0
  %v499 = vadd.f32 %v62, %v498
  %v500 = vpop.f32.mrb[0].mxu0
  %v501 = vpop.f32.mrb[0].mxu0
  %v502 = vpop.f32.mrb[0].mxu0
  %503 = vdwg.mxu0
  %v504 = vadd.f32 %v419, %v458
  %v505 = vsub.f32 0.0, %v504
  %v506 = vmul.f32 %v505, 1.442695
  %v507 = vpow.pop %v506
  %v508 = vadd.f32 %v507, 1.0
  %v509 = vrcp.pop %v508
  %v510 = vadd.f32 %v420, %v460
  %v511 = vsub.f32 0.0, %v510
  %v512 = vmul.f32 %v511, 1.442695
  %v513 = vpow.pop %v512
  %v514 = vadd.f32 %v513, 1.0
  %v515 = vrcp.pop %v514
  %v516 = vmul.f32 %v509, %v499
  %v517 = vadd.f32 %v421, %v516
  %v518 = vtanh.pop %v517
  %v519 = vsub.f32 1.0, %v515
  %v520 = vmul.f32 %v519, %v518
  %v521 = vmul.f32 %v515, %v409
  %v522 = vadd.f32 %v520, %v521
  %s523 = scalar_lea.vmem %s3, 16
  %524 = vst.msk [vmem:[%s523] sm:$0xff] %vm297, %v522
  %526 = vrot.lane.b32.xlu0 %v522, 64
  %v527 = vpop.permute.xlu0 %526
  %s529 = scalar_lea.vmem %s4, 40
  %530 = vst.msk [vmem:[%s529] sm:$0xff] %vm297, %v527
  %s531 = scalar_lea.vmem %s0, 72
  %v532 = vld [vmem:[%s531] sm:$0xff]
  %v533 = vld [vmem:[%s531 + $0x8] sm:$0xff]
  %v534 = vld [vmem:[%s531 + $0x10] sm:$0xff]
  %v535 = vpack.c.bf16 %v522, %v522
  %536 = vmatprep.subr.bf16.mxu0 %v150
  %537 = vmatpush1.bf16.msra.mxu0 %v149
  %538 = vmatprep.subr.bf16.mxu0 %v153
  %539 = vmatpush1.bf16.msra.mxu0 %v152
  %540 = vmatprep.subr.bf16.mxu0 %v156
  %541 = vmatpush1.bf16.msra.mxu0 %v155
  %542 = vmatprep.subr.bf16.mxu0 %v159
  %543 = vmatpush1.bf16.msra.mxu0 %v158
  %544 = vmatprep.subr.bf16.mxu0 %v162
  %545 = vmatpush1.bf16.msra.mxu0 %v161
  %546 = vmatprep.subr.bf16.mxu0 %v165
  %547 = vmatpush1.bf16.msra.mxu0 %v164
  %548 = vmatprep.subr.bf16.mxu0 %v168
  %549 = vmatpush1.bf16.msra.mxu0 %v167
  %550 = vmatprep.subr.bf16.mxu0 %v171
  %551 = vmatpush1.bf16.msra.mxu0 %v170
  %552 = vmatprep.subr.bf16.mxu0 0
  %553 = vmatpush1.bf16.msra.mxu0 0
  %554 = vmatprep.subr.bf16.mxu0 0
  %555 = vmatpush1.bf16.msra.mxu0 0
  %556 = vmatprep.subr.bf16.mxu0 0
  %557 = vmatpush1.bf16.msra.mxu0 0
  %558 = vmatprep.subr.bf16.mxu0 0
  %559 = vmatpush1.bf16.msra.mxu0 0
  %560 = vmatprep.subr.bf16.mxu0 0
  %561 = vmatpush1.bf16.msra.mxu0 0
  %562 = vmatprep.subr.bf16.mxu0 0
  %563 = vmatpush1.bf16.msra.mxu0 0
  %564 = vmatprep.subr.bf16.mxu0 0
  %565 = vmatpush1.bf16.msra.mxu0 0
  %566 = vmatprep.subr.bf16.mxu0 0
  %567 = vmatpush1.bf16.msra.mxu0 0
  %568 = vmatprep.mubr.bf16.mxu0 0
  %569 = vmatmul.mubr.bf16.gmra.mrb[0].mxu0 %v535
  %v570 = vpop.f32.mrb[0].mxu0
  %v571 = vadd.f32 %v54, %v570
  %v572 = vpop.f32.mrb[0].mxu0
  %v573 = vadd.f32 %v58, %v572
  %v574 = vpop.f32.mrb[0].mxu0
  %v575 = vpop.f32.mrb[0].mxu0
  %576 = vdwg.mxu0
  %577 = vmatprep.subr.bf16.mxu0 0
  %578 = vmatpush1.bf16.msra.mxu0 %v151
  %579 = vmatprep.subr.bf16.mxu0 0
  %580 = vmatpush1.bf16.msra.mxu0 %v154
  %581 = vmatprep.subr.bf16.mxu0 0
  %582 = vmatpush1.bf16.msra.mxu0 %v157
  %583 = vmatprep.subr.bf16.mxu0 0
  %584 = vmatpush1.bf16.msra.mxu0 %v160
  %585 = vmatprep.subr.bf16.mxu0 0
  %586 = vmatpush1.bf16.msra.mxu0 %v163
  %587 = vmatprep.subr.bf16.mxu0 0
  %588 = vmatpush1.bf16.msra.mxu0 %v166
  %589 = vmatprep.subr.bf16.mxu0 0
  %590 = vmatpush1.bf16.msra.mxu0 %v169
  %591 = vmatprep.subr.bf16.mxu0 0
  %592 = vmatpush1.bf16.msra.mxu0 %v172
  %593 = vmatprep.subr.bf16.mxu0 0
  %594 = vmatpush1.bf16.msra.mxu0 0
  %595 = vmatprep.subr.bf16.mxu0 0
  %596 = vmatpush1.bf16.msra.mxu0 0
  %597 = vmatprep.subr.bf16.mxu0 0
  %598 = vmatpush1.bf16.msra.mxu0 0
  %599 = vmatprep.subr.bf16.mxu0 0
  %600 = vmatpush1.bf16.msra.mxu0 0
  %601 = vmatprep.subr.bf16.mxu0 0
  %602 = vmatpush1.bf16.msra.mxu0 0
  %603 = vmatprep.subr.bf16.mxu0 0
  %604 = vmatpush1.bf16.msra.mxu0 0
  %605 = vmatprep.subr.bf16.mxu0 0
  %606 = vmatpush1.bf16.msra.mxu0 0
  %607 = vmatprep.subr.bf16.mxu0 0
  %608 = vmatpush1.bf16.msra.mxu0 0
  %609 = vmatprep.mubr.bf16.mxu0 0
  %610 = vmatmul.mubr.bf16.gmra.mrb[0].mxu0 %v535
  %v611 = vpop.f32.mrb[0].mxu0
  %v612 = vadd.f32 %v62, %v611
  %v613 = vpop.f32.mrb[0].mxu0
  %v614 = vpop.f32.mrb[0].mxu0
  %v615 = vpop.f32.mrb[0].mxu0
  %616 = vdwg.mxu0
  %v617 = vadd.f32 %v532, %v571
  %v618 = vsub.f32 0.0, %v617
  %v619 = vmul.f32 %v618, 1.442695
  %v620 = vpow.pop %v619
  %v621 = vadd.f32 %v620, 1.0
  %v622 = vrcp.pop %v621
  %v623 = vadd.f32 %v533, %v573
  %v624 = vsub.f32 0.0, %v623
  %v625 = vmul.f32 %v624, 1.442695
  %v626 = vpow.pop %v625
  %v627 = vadd.f32 %v626, 1.0
  %v628 = vrcp.pop %v627
  %v629 = vmul.f32 %v622, %v612
  %v630 = vadd.f32 %v534, %v629
  %v631 = vtanh.pop %v630
  %v632 = vsub.f32 1.0, %v628
  %v633 = vmul.f32 %v632, %v631
  %v634 = vmul.f32 %v628, %v522
  %v635 = vadd.f32 %v633, %v634
  %s636 = scalar_lea.vmem %s3, 24
  %637 = vst.msk [vmem:[%s636] sm:$0xff] %vm297, %v635
  %639 = vrot.lane.b32.xlu0 %v635, 64
  %v640 = vpop.permute.xlu0 %639
  %s642 = scalar_lea.vmem %s4, 32
  %643 = vst.msk [vmem:[%s642] sm:$0xff] %vm297, %v640
  %s644 = scalar_lea.vmem %s0, 96
  %v645 = vld [vmem:[%s644] sm:$0xff]
  %v646 = vld [vmem:[%s644 + $0x8] sm:$0xff]
  %v647 = vld [vmem:[%s644 + $0x10] sm:$0xff]
  %v648 = vpack.c.bf16 %v635, %v635
  %649 = vmatprep.subr.bf16.mxu0 %v150
  %650 = vmatpush1.bf16.msra.mxu0 %v149
  %651 = vmatprep.subr.bf16.mxu0 %v153
  %652 = vmatpush1.bf16.msra.mxu0 %v152
  %653 = vmatprep.subr.bf16.mxu0 %v156
  %654 = vmatpush1.bf16.msra.mxu0 %v155
  %655 = vmatprep.subr.bf16.mxu0 %v159
  %656 = vmatpush1.bf16.msra.mxu0 %v158
  %657 = vmatprep.subr.bf16.mxu0 %v162
  %658 = vmatpush1.bf16.msra.mxu0 %v161
  %659 = vmatprep.subr.bf16.mxu0 %v165
  %660 = vmatpush1.bf16.msra.mxu0 %v164
  %661 = vmatprep.subr.bf16.mxu0 %v168
  %662 = vmatpush1.bf16.msra.mxu0 %v167
  %663 = vmatprep.subr.bf16.mxu0 %v171
  %664 = vmatpush1.bf16.msra.mxu0 %v170
  %665 = vmatprep.subr.bf16.mxu0 0
  %666 = vmatpush1.bf16.msra.mxu0 0
  %667 = vmatprep.subr.bf16.mxu0 0
  %668 = vmatpush1.bf16.msra.mxu0 0
  %669 = vmatprep.subr.bf16.mxu0 0
  %670 = vmatpush1.bf16.msra.mxu0 0
  %671 = vmatprep.subr.bf16.mxu0 0
  %672 = vmatpush1.bf16.msra.mxu0 0
  %673 = vmatprep.subr.bf16.mxu0 0
  %674 = vmatpush1.bf16.msra.mxu0 0
  %675 = vmatprep.subr.bf16.mxu0 0
  %676 = vmatpush1.bf16.msra.mxu0 0
  %677 = vmatprep.subr.bf16.mxu0 0
  %678 = vmatpush1.bf16.msra.mxu0 0
  %679 = vmatprep.subr.bf16.mxu0 0
  %680 = vmatpush1.bf16.msra.mxu0 0
  %681 = vmatprep.mubr.bf16.mxu0 0
  %682 = vmatmul.mubr.bf16.gmra.mrb[0].mxu0 %v648
  %v683 = vpop.f32.mrb[0].mxu0
  %v684 = vadd.f32 %v54, %v683
  %v685 = vpop.f32.mrb[0].mxu0
  %v686 = vadd.f32 %v58, %v685
  %v687 = vpop.f32.mrb[0].mxu0
  %v688 = vpop.f32.mrb[0].mxu0
  %689 = vdwg.mxu0
  %690 = vmatprep.subr.bf16.mxu0 0
  %691 = vmatpush1.bf16.msra.mxu0 %v151
  %692 = vmatprep.subr.bf16.mxu0 0
  %693 = vmatpush1.bf16.msra.mxu0 %v154
  %694 = vmatprep.subr.bf16.mxu0 0
  %695 = vmatpush1.bf16.msra.mxu0 %v157
  %696 = vmatprep.subr.bf16.mxu0 0
  %697 = vmatpush1.bf16.msra.mxu0 %v160
  %698 = vmatprep.subr.bf16.mxu0 0
  %699 = vmatpush1.bf16.msra.mxu0 %v163
  %700 = vmatprep.subr.bf16.mxu0 0
  %701 = vmatpush1.bf16.msra.mxu0 %v166
  %702 = vmatprep.subr.bf16.mxu0 0
  %703 = vmatpush1.bf16.msra.mxu0 %v169
  %704 = vmatprep.subr.bf16.mxu0 0
  %705 = vmatpush1.bf16.msra.mxu0 %v172
  %706 = vmatprep.subr.bf16.mxu0 0
  %707 = vmatpush1.bf16.msra.mxu0 0
  %708 = vmatprep.subr.bf16.mxu0 0
  %709 = vmatpush1.bf16.msra.mxu0 0
  %710 = vmatprep.subr.bf16.mxu0 0
  %711 = vmatpush1.bf16.msra.mxu0 0
  %712 = vmatprep.subr.bf16.mxu0 0
  %713 = vmatpush1.bf16.msra.mxu0 0
  %714 = vmatprep.subr.bf16.mxu0 0
  %715 = vmatpush1.bf16.msra.mxu0 0
  %716 = vmatprep.subr.bf16.mxu0 0
  %717 = vmatpush1.bf16.msra.mxu0 0
  %718 = vmatprep.subr.bf16.mxu0 0
  %719 = vmatpush1.bf16.msra.mxu0 0
  %720 = vmatprep.subr.bf16.mxu0 0
  %721 = vmatpush1.bf16.msra.mxu0 0
  %722 = vmatprep.mubr.bf16.mxu0 0
  %723 = vmatmul.mubr.bf16.gmra.mrb[0].mxu0 %v648
  %v724 = vpop.f32.mrb[0].mxu0
  %v725 = vadd.f32 %v62, %v724
  %v726 = vpop.f32.mrb[0].mxu0
  %v727 = vpop.f32.mrb[0].mxu0
  %v728 = vpop.f32.mrb[0].mxu0
  %729 = vdwg.mxu0
  %v730 = vadd.f32 %v645, %v684
  %v731 = vsub.f32 0.0, %v730
  %v732 = vmul.f32 %v731, 1.442695
  %v733 = vpow.pop %v732
  %v734 = vadd.f32 %v733, 1.0
  %v735 = vrcp.pop %v734
  %v736 = vadd.f32 %v646, %v686
  %v737 = vsub.f32 0.0, %v736
  %v738 = vmul.f32 %v737, 1.442695
  %v739 = vpow.pop %v738
  %v740 = vadd.f32 %v739, 1.0
  %v741 = vrcp.pop %v740
  %v742 = vmul.f32 %v735, %v725
  %v743 = vadd.f32 %v647, %v742
  %v744 = vtanh.pop %v743
  %v745 = vsub.f32 1.0, %v741
  %v746 = vmul.f32 %v745, %v744
  %v747 = vmul.f32 %v741, %v635
  %v748 = vadd.f32 %v746, %v747
  %s749 = scalar_lea.vmem %s3, 32
  %750 = vst.msk [vmem:[%s749] sm:$0xff] %vm297, %v748
  %752 = vrot.lane.b32.xlu0 %v748, 64
  %v753 = vpop.permute.xlu0 %752
  %s755 = scalar_lea.vmem %s4, 24
  %756 = vst.msk [vmem:[%s755] sm:$0xff] %vm297, %v753
  %s757 = scalar_lea.vmem %s0, 120
  %v758 = vld [vmem:[%s757] sm:$0xff]
  %v759 = vld [vmem:[%s757 + $0x8] sm:$0xff]
  %v760 = vld [vmem:[%s757 + $0x10] sm:$0xff]
  %v761 = vpack.c.bf16 %v748, %v748
  %762 = vmatprep.subr.bf16.mxu0 %v150
  %763 = vmatpush1.bf16.msra.mxu0 %v149
  %764 = vmatprep.subr.bf16.mxu0 %v153
  %765 = vmatpush1.bf16.msra.mxu0 %v152
  %766 = vmatprep.subr.bf16.mxu0 %v156
  %767 = vmatpush1.bf16.msra.mxu0 %v155
  %768 = vmatprep.subr.bf16.mxu0 %v159
  %769 = vmatpush1.bf16.msra.mxu0 %v158
  %770 = vmatprep.subr.bf16.mxu0 %v162
  %771 = vmatpush1.bf16.msra.mxu0 %v161
  %772 = vmatprep.subr.bf16.mxu0 %v165
  %773 = vmatpush1.bf16.msra.mxu0 %v164
  %774 = vmatprep.subr.bf16.mxu0 %v168
  %775 = vmatpush1.bf16.msra.mxu0 %v167
  %776 = vmatprep.subr.bf16.mxu0 %v171
  %777 = vmatpush1.bf16.msra.mxu0 %v170
  %778 = vmatprep.subr.bf16.mxu0 0
  %779 = vmatpush1.bf16.msra.mxu0 0
  %780 = vmatprep.subr.bf16.mxu0 0
  %781 = vmatpush1.bf16.msra.mxu0 0
  %782 = vmatprep.subr.bf16.mxu0 0
  %783 = vmatpush1.bf16.msra.mxu0 0
  %784 = vmatprep.subr.bf16.mxu0 0
  %785 = vmatpush1.bf16.msra.mxu0 0
  %786 = vmatprep.subr.bf16.mxu0 0
  %787 = vmatpush1.bf16.msra.mxu0 0
  %788 = vmatprep.subr.bf16.mxu0 0
  %789 = vmatpush1.bf16.msra.mxu0 0
  %790 = vmatprep.subr.bf16.mxu0 0
  %791 = vmatpush1.bf16.msra.mxu0 0
  %792 = vmatprep.subr.bf16.mxu0 0
  %793 = vmatpush1.bf16.msra.mxu0 0
  %794 = vmatprep.mubr.bf16.mxu0 0
  %795 = vmatmul.mubr.bf16.gmra.mrb[0].mxu0 %v761
  %v796 = vpop.f32.mrb[0].mxu0
  %v797 = vadd.f32 %v54, %v796
  %v798 = vpop.f32.mrb[0].mxu0
  %v799 = vadd.f32 %v58, %v798
  %v800 = vpop.f32.mrb[0].mxu0
  %v801 = vpop.f32.mrb[0].mxu0
  %802 = vdwg.mxu0
  %803 = vmatprep.subr.bf16.mxu0 0
  %804 = vmatpush1.bf16.msra.mxu0 %v151
  %805 = vmatprep.subr.bf16.mxu0 0
  %806 = vmatpush1.bf16.msra.mxu0 %v154
  %807 = vmatprep.subr.bf16.mxu0 0
  %808 = vmatpush1.bf16.msra.mxu0 %v157
  %809 = vmatprep.subr.bf16.mxu0 0
  %810 = vmatpush1.bf16.msra.mxu0 %v160
  %811 = vmatprep.subr.bf16.mxu0 0
  %812 = vmatpush1.bf16.msra.mxu0 %v163
  %813 = vmatprep.subr.bf16.mxu0 0
  %814 = vmatpush1.bf16.msra.mxu0 %v166
  %815 = vmatprep.subr.bf16.mxu0 0
  %816 = vmatpush1.bf16.msra.mxu0 %v169
  %817 = vmatprep.subr.bf16.mxu0 0
  %818 = vmatpush1.bf16.msra.mxu0 %v172
  %819 = vmatprep.subr.bf16.mxu0 0
  %820 = vmatpush1.bf16.msra.mxu0 0
  %821 = vmatprep.subr.bf16.mxu0 0
  %822 = vmatpush1.bf16.msra.mxu0 0
  %823 = vmatprep.subr.bf16.mxu0 0
  %824 = vmatpush1.bf16.msra.mxu0 0
  %825 = vmatprep.subr.bf16.mxu0 0
  %826 = vmatpush1.bf16.msra.mxu0 0
  %827 = vmatprep.subr.bf16.mxu0 0
  %828 = vmatpush1.bf16.msra.mxu0 0
  %829 = vmatprep.subr.bf16.mxu0 0
  %830 = vmatpush1.bf16.msra.mxu0 0
  %831 = vmatprep.subr.bf16.mxu0 0
  %832 = vmatpush1.bf16.msra.mxu0 0
  %833 = vmatprep.subr.bf16.mxu0 0
  %834 = vmatpush1.bf16.msra.mxu0 0
  %835 = vmatprep.mubr.bf16.mxu0 0
  %836 = vmatmul.mubr.bf16.gmra.mrb[0].mxu0 %v761
  %v837 = vpop.f32.mrb[0].mxu0
  %v838 = vadd.f32 %v62, %v837
  %v839 = vpop.f32.mrb[0].mxu0
  %v840 = vpop.f32.mrb[0].mxu0
  %v841 = vpop.f32.mrb[0].mxu0
  %842 = vdwg.mxu0
  %v843 = vadd.f32 %v758, %v797
  %v844 = vsub.f32 0.0, %v843
  %v845 = vmul.f32 %v844, 1.442695
  %v846 = vpow.pop %v845
  %v847 = vadd.f32 %v846, 1.0
  %v848 = vrcp.pop %v847
  %v849 = vadd.f32 %v759, %v799
  %v850 = vsub.f32 0.0, %v849
  %v851 = vmul.f32 %v850, 1.442695
  %v852 = vpow.pop %v851
  %v853 = vadd.f32 %v852, 1.0
  %v854 = vrcp.pop %v853
  %v855 = vmul.f32 %v848, %v838
  %v856 = vadd.f32 %v760, %v855
  %v857 = vtanh.pop %v856
  %v858 = vsub.f32 1.0, %v854
  %v859 = vmul.f32 %v858, %v857
  %v860 = vmul.f32 %v854, %v748
  %v861 = vadd.f32 %v859, %v860
  %s862 = scalar_lea.vmem %s3, 40
  %863 = vst.msk [vmem:[%s862] sm:$0xff] %vm297, %v861
  %865 = vrot.lane.b32.xlu0 %v861, 64
  %v866 = vpop.permute.xlu0 %865
  %s868 = scalar_lea.vmem %s4, 16
  %869 = vst.msk [vmem:[%s868] sm:$0xff] %vm297, %v866
  %s870 = scalar_lea.vmem %s0, 144
  %v871 = vld [vmem:[%s870] sm:$0xff]
  %v872 = vld [vmem:[%s870 + $0x8] sm:$0xff]
  %v873 = vld [vmem:[%s870 + $0x10] sm:$0xff]
  %v874 = vpack.c.bf16 %v861, %v861
  %875 = vmatprep.subr.bf16.mxu0 %v150
  %876 = vmatpush1.bf16.msra.mxu0 %v149
  %877 = vmatprep.subr.bf16.mxu0 %v153
  %878 = vmatpush1.bf16.msra.mxu0 %v152
  %879 = vmatprep.subr.bf16.mxu0 %v156
  %880 = vmatpush1.bf16.msra.mxu0 %v155
  %881 = vmatprep.subr.bf16.mxu0 %v159
  %882 = vmatpush1.bf16.msra.mxu0 %v158
  %883 = vmatprep.subr.bf16.mxu0 %v162
  %884 = vmatpush1.bf16.msra.mxu0 %v161
  %885 = vmatprep.subr.bf16.mxu0 %v165
  %886 = vmatpush1.bf16.msra.mxu0 %v164
  %887 = vmatprep.subr.bf16.mxu0 %v168
  %888 = vmatpush1.bf16.msra.mxu0 %v167
  %889 = vmatprep.subr.bf16.mxu0 %v171
  %890 = vmatpush1.bf16.msra.mxu0 %v170
  %891 = vmatprep.subr.bf16.mxu0 0
  %892 = vmatpush1.bf16.msra.mxu0 0
  %893 = vmatprep.subr.bf16.mxu0 0
  %894 = vmatpush1.bf16.msra.mxu0 0
  %895 = vmatprep.subr.bf16.mxu0 0
  %896 = vmatpush1.bf16.msra.mxu0 0
  %897 = vmatprep.subr.bf16.mxu0 0
  %898 = vmatpush1.bf16.msra.mxu0 0
  %899 = vmatprep.subr.bf16.mxu0 0
  %900 = vmatpush1.bf16.msra.mxu0 0
  %901 = vmatprep.subr.bf16.mxu0 0
  %902 = vmatpush1.bf16.msra.mxu0 0
  %903 = vmatprep.subr.bf16.mxu0 0
  %904 = vmatpush1.bf16.msra.mxu0 0
  %905 = vmatprep.subr.bf16.mxu0 0
  %906 = vmatpush1.bf16.msra.mxu0 0
  %907 = vmatprep.mubr.bf16.mxu0 0
  %908 = vmatmul.mubr.bf16.gmra.mrb[0].mxu0 %v874
  %v909 = vpop.f32.mrb[0].mxu0
  %v910 = vadd.f32 %v54, %v909
  %v911 = vpop.f32.mrb[0].mxu0
  %v912 = vadd.f32 %v58, %v911
  %v913 = vpop.f32.mrb[0].mxu0
  %v914 = vpop.f32.mrb[0].mxu0
  %915 = vdwg.mxu0
  %916 = vmatprep.subr.bf16.mxu0 0
  %917 = vmatpush1.bf16.msra.mxu0 %v151
  %918 = vmatprep.subr.bf16.mxu0 0
  %919 = vmatpush1.bf16.msra.mxu0 %v154
  %920 = vmatprep.subr.bf16.mxu0 0
  %921 = vmatpush1.bf16.msra.mxu0 %v157
  %922 = vmatprep.subr.bf16.mxu0 0
  %923 = vmatpush1.bf16.msra.mxu0 %v160
  %924 = vmatprep.subr.bf16.mxu0 0
  %925 = vmatpush1.bf16.msra.mxu0 %v163
  %926 = vmatprep.subr.bf16.mxu0 0
  %927 = vmatpush1.bf16.msra.mxu0 %v166
  %928 = vmatprep.subr.bf16.mxu0 0
  %929 = vmatpush1.bf16.msra.mxu0 %v169
  %930 = vmatprep.subr.bf16.mxu0 0
  %931 = vmatpush1.bf16.msra.mxu0 %v172
  %932 = vmatprep.subr.bf16.mxu0 0
  %933 = vmatpush1.bf16.msra.mxu0 0
  %934 = vmatprep.subr.bf16.mxu0 0
  %935 = vmatpush1.bf16.msra.mxu0 0
  %936 = vmatprep.subr.bf16.mxu0 0
  %937 = vmatpush1.bf16.msra.mxu0 0
  %938 = vmatprep.subr.bf16.mxu0 0
  %939 = vmatpush1.bf16.msra.mxu0 0
  %940 = vmatprep.subr.bf16.mxu0 0
  %941 = vmatpush1.bf16.msra.mxu0 0
  %942 = vmatprep.subr.bf16.mxu0 0
  %943 = vmatpush1.bf16.msra.mxu0 0
  %944 = vmatprep.subr.bf16.mxu0 0
  %945 = vmatpush1.bf16.msra.mxu0 0
  %946 = vmatprep.subr.bf16.mxu0 0
  %947 = vmatpush1.bf16.msra.mxu0 0
  %948 = vmatprep.mubr.bf16.mxu0 0
  %949 = vmatmul.mubr.bf16.gmra.mrb[0].mxu0 %v874
  %v950 = vpop.f32.mrb[0].mxu0
  %v951 = vadd.f32 %v62, %v950
  %v952 = vpop.f32.mrb[0].mxu0
  %v953 = vpop.f32.mrb[0].mxu0
  %v954 = vpop.f32.mrb[0].mxu0
  %955 = vdwg.mxu0
  %v956 = vadd.f32 %v871, %v910
  %v957 = vsub.f32 0.0, %v956
  %v958 = vmul.f32 %v957, 1.442695
  %v959 = vpow.pop %v958
  %v960 = vadd.f32 %v959, 1.0
  %v961 = vrcp.pop %v960
  %v962 = vadd.f32 %v872, %v912
  %v963 = vsub.f32 0.0, %v962
  %v964 = vmul.f32 %v963, 1.442695
  %v965 = vpow.pop %v964
  %v966 = vadd.f32 %v965, 1.0
  %v967 = vrcp.pop %v966
  %v968 = vmul.f32 %v961, %v951
  %v969 = vadd.f32 %v873, %v968
  %v970 = vtanh.pop %v969
  %v971 = vsub.f32 1.0, %v967
  %v972 = vmul.f32 %v971, %v970
  %v973 = vmul.f32 %v967, %v861
  %v974 = vadd.f32 %v972, %v973
  %s975 = scalar_lea.vmem %s3, 48
  %976 = vst.msk [vmem:[%s975] sm:$0xff] %vm297, %v974
  %978 = vrot.lane.b32.xlu0 %v974, 64
  %v979 = vpop.permute.xlu0 %978
  %s981 = scalar_lea.vmem %s4, 8
  %982 = vst.msk [vmem:[%s981] sm:$0xff] %vm297, %v979
  %s983 = scalar_lea.vmem %s0, 168
  %v984 = vld [vmem:[%s983] sm:$0xff]
  %v985 = vld [vmem:[%s983 + $0x8] sm:$0xff]
  %v986 = vld [vmem:[%s983 + $0x10] sm:$0xff]
  %v987 = vpack.c.bf16 %v974, %v974
  %988 = vmatprep.subr.bf16.mxu0 %v150
  %989 = vmatpush1.bf16.msra.mxu0 %v149
  %990 = vmatprep.subr.bf16.mxu0 %v153
  %991 = vmatpush1.bf16.msra.mxu0 %v152
  %992 = vmatprep.subr.bf16.mxu0 %v156
  %993 = vmatpush1.bf16.msra.mxu0 %v155
  %994 = vmatprep.subr.bf16.mxu0 %v159
  %995 = vmatpush1.bf16.msra.mxu0 %v158
  %996 = vmatprep.subr.bf16.mxu0 %v162
  %997 = vmatpush1.bf16.msra.mxu0 %v161
  %998 = vmatprep.subr.bf16.mxu0 %v165
  %999 = vmatpush1.bf16.msra.mxu0 %v164
  %1000 = vmatprep.subr.bf16.mxu0 %v168
  %1001 = vmatpush1.bf16.msra.mxu0 %v167
  %1002 = vmatprep.subr.bf16.mxu0 %v171
  %1003 = vmatpush1.bf16.msra.mxu0 %v170
  %1004 = vmatprep.subr.bf16.mxu0 0
  %1005 = vmatpush1.bf16.msra.mxu0 0
  %1006 = vmatprep.subr.bf16.mxu0 0
  %1007 = vmatpush1.bf16.msra.mxu0 0
  %1008 = vmatprep.subr.bf16.mxu0 0
  %1009 = vmatpush1.bf16.msra.mxu0 0
  %1010 = vmatprep.subr.bf16.mxu0 0
  %1011 = vmatpush1.bf16.msra.mxu0 0
  %1012 = vmatprep.subr.bf16.mxu0 0
  %1013 = vmatpush1.bf16.msra.mxu0 0
  %1014 = vmatprep.subr.bf16.mxu0 0
  %1015 = vmatpush1.bf16.msra.mxu0 0
  %1016 = vmatprep.subr.bf16.mxu0 0
  %1017 = vmatpush1.bf16.msra.mxu0 0
  %1018 = vmatprep.subr.bf16.mxu0 0
  %1019 = vmatpush1.bf16.msra.mxu0 0
  %1020 = vmatprep.mubr.bf16.mxu0 0
  %1021 = vmatmul.mubr.bf16.gmra.mrb[0].mxu0 %v987
  %v1022 = vpop.f32.mrb[0].mxu0
  %v1023 = vadd.f32 %v54, %v1022
  %v1024 = vpop.f32.mrb[0].mxu0
  %v1025 = vadd.f32 %v58, %v1024
  %v1026 = vpop.f32.mrb[0].mxu0
  %v1027 = vpop.f32.mrb[0].mxu0
  %1028 = vdwg.mxu0
  %1029 = vmatprep.subr.bf16.mxu0 0
  %1030 = vmatpush1.bf16.msra.mxu0 %v151
  %1031 = vmatprep.subr.bf16.mxu0 0
  %1032 = vmatpush1.bf16.msra.mxu0 %v154
  %1033 = vmatprep.subr.bf16.mxu0 0
  %1034 = vmatpush1.bf16.msra.mxu0 %v157
  %1035 = vmatprep.subr.bf16.mxu0 0
  %1036 = vmatpush1.bf16.msra.mxu0 %v160
  %1037 = vmatprep.subr.bf16.mxu0 0
  %1038 = vmatpush1.bf16.msra.mxu0 %v163
  %1039 = vmatprep.subr.bf16.mxu0 0
  %1040 = vmatpush1.bf16.msra.mxu0 %v166
  %1041 = vmatprep.subr.bf16.mxu0 0
  %1042 = vmatpush1.bf16.msra.mxu0 %v169
  %1043 = vmatprep.subr.bf16.mxu0 0
  %1044 = vmatpush1.bf16.msra.mxu0 %v172
  %1045 = vmatprep.subr.bf16.mxu0 0
  %1046 = vmatpush1.bf16.msra.mxu0 0
  %1047 = vmatprep.subr.bf16.mxu0 0
  %1048 = vmatpush1.bf16.msra.mxu0 0
  %1049 = vmatprep.subr.bf16.mxu0 0
  %1050 = vmatpush1.bf16.msra.mxu0 0
  %1051 = vmatprep.subr.bf16.mxu0 0
  %1052 = vmatpush1.bf16.msra.mxu0 0
  %1053 = vmatprep.subr.bf16.mxu0 0
  %1054 = vmatpush1.bf16.msra.mxu0 0
  %1055 = vmatprep.subr.bf16.mxu0 0
  %1056 = vmatpush1.bf16.msra.mxu0 0
  %1057 = vmatprep.subr.bf16.mxu0 0
  %1058 = vmatpush1.bf16.msra.mxu0 0
  %1059 = vmatprep.subr.bf16.mxu0 0
  %1060 = vmatpush1.bf16.msra.mxu0 0
  %1061 = vmatprep.mubr.bf16.mxu0 0
  %1062 = vmatmul.mubr.bf16.gmra.mrb[0].mxu0 %v987
  %v1063 = vpop.f32.mrb[0].mxu0
  %v1064 = vadd.f32 %v62, %v1063
  %v1065 = vpop.f32.mrb[0].mxu0
  %v1066 = vpop.f32.mrb[0].mxu0
  %v1067 = vpop.f32.mrb[0].mxu0
  %1068 = vdwg.mxu0
  %v1069 = vadd.f32 %v984, %v1023
  %v1070 = vsub.f32 0.0, %v1069
  %v1071 = vmul.f32 %v1070, 1.442695
  %v1072 = vpow.pop %v1071
  %v1073 = vadd.f32 %v1072, 1.0
  %v1074 = vrcp.pop %v1073
  %v1075 = vadd.f32 %v985, %v1025
  %v1076 = vsub.f32 0.0, %v1075
  %v1077 = vmul.f32 %v1076, 1.442695
  %v1078 = vpow.pop %v1077
  %v1079 = vadd.f32 %v1078, 1.0
  %v1080 = vrcp.pop %v1079
  %v1081 = vmul.f32 %v1074, %v1064
  %v1082 = vadd.f32 %v986, %v1081
  %v1083 = vtanh.pop %v1082
  %v1084 = vsub.f32 1.0, %v1080
  %v1085 = vmul.f32 %v1084, %v1083
  %v1086 = vmul.f32 %v1080, %v974
  %v1087 = vadd.f32 %v1085, %v1086
  %s1088 = scalar_lea.vmem %s3, 56
  %1089 = vst.msk [vmem:[%s1088] sm:$0xff] %vm297, %v1087
  %1091 = vrot.lane.b32.xlu0 %v1087, 64
  %v1092 = vpop.permute.xlu0 %1091
  %1094 = vst.msk [vmem:[%s4] sm:$0xff] %vm297, %v1092
  // Predicated region
  $region14: #{_lambda_.2} parent=0 // pred_check
    _
  $region15: #{_lambda_.2} parent=0 // pred_check_branch
    %1096 = sbr.rel (0) target = $region17
  $region16: #{_lambda_.2} parent=0 // pred_region
    _
  $region17: #{_lambda_.2} parent=0 // pred_fallthru
    _
  // Predicated region
  $region18: #{_lambda_.2} parent=0 // pred_check
    _
  $region19: #{_lambda_.2} parent=0 // pred_check_branch
    %1098 = sbr.rel (0) target = $region21
  $region20: #{_lambda_.2} parent=0 // pred_region
    _
  $region21: #{_lambda_.2} parent=0 // pred_fallthru
    _
  // Predicated region
  $region22: #{_lambda_.2} parent=0 // pred_check
    _
  $region23: #{_lambda_.2} parent=0 // pred_check_branch
    %1100 = sbr.rel (0) target = $region25
  $region24: #{_lambda_.2} parent=0 // pred_region
    _
  $region25: #{_lambda_.2} parent=0 // pred_fallthru
    _
  // Predicated region
  $region26: #{_lambda_.2} parent=0 // pred_check
    _
  $region27: #{_lambda_.2} parent=0 // pred_check_branch
    %1102 = sbr.rel (0) target = $region29
  $region28: #{_lambda_.2} parent=0 // pred_region
    _
  $region29: #{_lambda_.2} parent=0 // pred_fallthru
    _

// kernel: _lambda_.3
$region0: #{_lambda_.3}
  #allocation0 [shape = 'u32[]', space=smem, size = 0x4, offset = 0x4, fixed_abs, tag = 'smem constant byte address 0x4 - core index']
  #allocation1 [shape = 'u32[144,128]{1,0:T(1,128)}', space=vmem, size = 0x12000, scoped, tag = 'internal scratch']
  #allocation2 [shape = 'f32[8,8,64]{2,1,0:T(8,128)}', space=vmem, size = 0x8000, scoped, tag = 'scratch operand']
  #allocation3 [shape = 'f32[8,8,64]{2,1,0:T(8,128)}', space=vmem, size = 0x8000, scoped, tag = 'scratch operand']
  %s0 = inlined_call_operand.vmem [shape: f32[8,8,384], index: 0, kind: input, shape index: {}]
  %s1 = inlined_call_operand.vmem [shape: bf16[128,384], index: 1, kind: input, shape index: {}]
  %s2 = inlined_call_operand.vmem [shape: f32[1,384], index: 2, kind: input, shape index: {}]
  %s3 = inlined_call_operand.vmem [shape: f32[2,64], index: 3, kind: input, shape index: {}]
  %s4 = inlined_call_operand.vmem [shape: f32[2,64], index: 4, kind: input, shape index: {}]
  %s5 = inlined_call_operand.vmem [shape: f32[2], index: 5, kind: input, shape index: {}]
  %s6 = inlined_call_operand.vmem [shape: f32[2,8,8], index: 6, kind: output, shape index: {}]
  %s7 = sld [smem:[#allocation0]]
  $region38: #{_lambda_.3} parent=0
    _
  %s9 = ssub.s32 1, %s7
  %s10 = scalar_select 0, %s9, %s7
  $region1: #{_lambda_.3} parent=0
    #allocation4 [shape = 'u8[512]{0}', space=smem, size = 0x200, scoped, tag = 'input window, operand 5, single buffered']
    #allocation5 [shape = 's32[1]{0}', space=sflag, size = 0x4, scoped, tag = 'scoped memory for _lambda_.3']
    %11 = vsyncpa [#allocation5], 0
    // Predicated region
    $region2: #{_lambda_.3} parent=1 // pred_check
      _
    $region3: #{_lambda_.3} parent=1 // pred_check_branch
      %13 = sbr.rel (0) target = $region5
    $region4: #{_lambda_.3} parent=1 // pred_region
      _
    $region5: #{_lambda_.3} parent=1 // pred_fallthru
      _
    // Predicated region
    $region6: #{_lambda_.3} parent=1 // pred_check
      _
    $region7: #{_lambda_.3} parent=1 // pred_check_branch
      %15 = sbr.rel (0) target = $region9
    $region8: #{_lambda_.3} parent=1 // pred_region
      _
    $region9: #{_lambda_.3} parent=1 // pred_fallthru
      _
    // Predicated region
    $region10: #{_lambda_.3} parent=1 // pred_check
      _
    $region11: #{_lambda_.3} parent=1 // pred_check_branch
      %17 = sbr.rel (0) target = $region13
    $region12: #{_lambda_.3} parent=1 // pred_region
      _
    $region13: #{_lambda_.3} parent=1 // pred_fallthru
      _
    // Predicated region
    $region14: #{_lambda_.3} parent=1 // pred_check
      _
    $region15: #{_lambda_.3} parent=1 // pred_check_branch
      %19 = sbr.rel (0) target = $region17
    $region16: #{_lambda_.3} parent=1 // pred_region
      _
    $region17: #{_lambda_.3} parent=1 // pred_fallthru
      _
    // Predicated region
    $region18: #{_lambda_.3} parent=1 // pred_check
      _
    $region19: #{_lambda_.3} parent=1 // pred_check_branch
      %21 = sbr.rel (0) target = $region21
    $region20: #{_lambda_.3} parent=1 // pred_region
      _
    $region21: #{_lambda_.3} parent=1 // pred_fallthru
      _
    // Predicated region
    $region22: #{_lambda_.3} parent=1 // pred_check
      _
    $region23: #{_lambda_.3} parent=1 // pred_check_branch
      %23 = sbr.rel (0) target = $region25
    $region24: #{_lambda_.3} parent=1 // pred_region
      %s25 = ssub.s32 16, 16
      %26 = vsyncadd [#allocation5], %s25
      %s28 = sshll.u32 %s5, 4
      %s29 = int_to_ptr.vmem [resolvable:$true] %s28
      %31 = dma.vmem_to_smem %s29, 16, [#allocation4], [#allocation5]
    $region25: #{_lambda_.3} parent=1 // pred_fallthru
      _
    // Predicated region
    $region26: #{_lambda_.3} parent=1 // pred_check
      _
    $region27: #{_lambda_.3} parent=1 // pred_check_branch
      %33 = sbr.rel (0) target = $region29
    $region28: #{_lambda_.3} parent=1 // pred_region
      %34 = dma.done [#allocation5], 16
    $region29: #{_lambda_.3} parent=1 // pred_fallthru
      _
    %35 = sfence
    %v37 = vld [vmem:[%s1] sm:$0xff]
    %v38 = vld [vmem:[%s1 + $0x8] sm:$0xf]
    %v39 = vld [vmem:[%s1 + $0xc] sm:$0xff]
    %v40 = vld [vmem:[%s1 + $0x14] sm:$0xf]
    %v41 = vld [vmem:[%s1 + $0x18] sm:$0xff]
    %v42 = vld [vmem:[%s1 + $0x20] sm:$0xf]
    %v43 = vld [vmem:[%s1 + $0x24] sm:$0xff]
    %v44 = vld [vmem:[%s1 + $0x2c] sm:$0xf]
    %v45 = vld [vmem:[%s1 + $0x30] sm:$0xff]
    %v46 = vld [vmem:[%s1 + $0x38] sm:$0xf]
    %v47 = vld [vmem:[%s1 + $0x3c] sm:$0xff]
    %v48 = vld [vmem:[%s1 + $0x44] sm:$0xf]
    %v49 = vld [vmem:[%s1 + $0x48] sm:$0xff]
    %v50 = vld [vmem:[%s1 + $0x50] sm:$0xf]
    %v51 = vld [vmem:[%s1 + $0x54] sm:$0xff]
    %v52 = vld [vmem:[%s1 + $0x5c] sm:$0xf]
    %v53 = vld [vmem:[%s1 + $0x60] sm:$0xff]
    %v54 = vld [vmem:[%s1 + $0x68] sm:$0xf]
    %v55 = vld [vmem:[%s1 + $0x6c] sm:$0xff]
    %v56 = vld [vmem:[%s1 + $0x74] sm:$0xf]
    %v57 = vld [vmem:[%s1 + $0x78] sm:$0xff]
    %v58 = vld [vmem:[%s1 + $0x80] sm:$0xf]
    %v59 = vld [vmem:[%s1 + $0x84] sm:$0xff]
    %v60 = vld [vmem:[%s1 + $0x8c] sm:$0xf]
    %v61 = vld [vmem:[%s1 + $0x90] sm:$0xff]
    %v62 = vld [vmem:[%s1 + $0x98] sm:$0xf]
    %v63 = vld [vmem:[%s1 + $0x9c] sm:$0xff]
    %v64 = vld [vmem:[%s1 + $0xa4] sm:$0xf]
    %v65 = vld [vmem:[%s1 + $0xa8] sm:$0xff]
    %v66 = vld [vmem:[%s1 + $0xb0] sm:$0xf]
    %v67 = vld [vmem:[%s1 + $0xb4] sm:$0xff]
    %v68 = vld [vmem:[%s1 + $0xbc] sm:$0xf]
    %v69 = vld [vmem:[%s2] sm:$0x7]
    %v71 = vlaneseq
    %v72 = vshrl.u32 %v71, 7
    %v73 = vsub.s32 0, %v72
    %v74 = vrot.slane %v69, %v73
    %v75 = vlaneseq
    %v76 = vshrl.u32 %v75, 7
    %v77 = vsub.s32 1, %v76
    %v78 = vrot.slane %v69, %v77
    %v79 = vlaneseq
    %v80 = vshrl.u32 %v79, 7
    %v81 = vsub.s32 2, %v80
    %v82 = vrot.slane %v69, %v81
    %v86 = vld [vmem:[%s0] sm:$0xff]
    %v87 = vld [vmem:[%s0 + $0x8] sm:$0xff]
    %v88 = vld [vmem:[%s0 + $0x10] sm:$0xff]
    %v121 = vunpack.c.l.b16 %v37
    %v122 = vunpack.c.h.b16 %v37
    %v123 = vunpack.c.l.b16 %v38
    %v124 = vunpack.c.l.b16 %v39
    %v125 = vunpack.c.h.b16 %v39
    %v126 = vunpack.c.l.b16 %v40
    %v127 = vunpack.c.l.b16 %v41
    %v128 = vunpack.c.h.b16 %v41
    %v129 = vunpack.c.l.b16 %v42
    %v130 = vunpack.c.l.b16 %v43
    %v131 = vunpack.c.h.b16 %v43
    %v132 = vunpack.c.l.b16 %v44
    %v133 = vunpack.c.l.b16 %v45
    %v134 = vunpack.c.h.b16 %v45
    %v135 = vunpack.c.l.b16 %v46
    %v136 = vunpack.c.l.b16 %v47
    %v137 = vunpack.c.h.b16 %v47
    %v138 = vunpack.c.l.b16 %v48
    %v139 = vunpack.c.l.b16 %v49
    %v140 = vunpack.c.h.b16 %v49
    %v141 = vunpack.c.l.b16 %v50
    %v142 = vunpack.c.l.b16 %v51
    %v143 = vunpack.c.h.b16 %v51
    %v144 = vunpack.c.l.b16 %v52
    %v145 = vunpack.c.l.b16 %v53
    %v146 = vunpack.c.h.b16 %v53
    %v147 = vunpack.c.l.b16 %v54
    %v148 = vunpack.c.l.b16 %v55
    %v149 = vunpack.c.h.b16 %v55
    %v150 = vunpack.c.l.b16 %v56
    %v151 = vunpack.c.l.b16 %v57
    %v152 = vunpack.c.h.b16 %v57
    %v153 = vunpack.c.l.b16 %v58
    %v154 = vunpack.c.l.b16 %v59
    %v155 = vunpack.c.h.b16 %v59
    %v156 = vunpack.c.l.b16 %v60
    %v157 = vunpack.c.l.b16 %v61
    %v158 = vunpack.c.h.b16 %v61
    %v159 = vunpack.c.l.b16 %v62
    %v160 = vunpack.c.l.b16 %v63
    %v161 = vunpack.c.h.b16 %v63
    %v162 = vunpack.c.l.b16 %v64
    %v163 = vunpack.c.l.b16 %v65
    %v164 = vunpack.c.h.b16 %v65
    %v165 = vunpack.c.l.b16 %v66
    %v166 = vunpack.c.l.b16 %v67
    %v167 = vunpack.c.h.b16 %v67
    %v168 = vunpack.c.l.b16 %v68
    %v169 = vpack.c.b16 %v124, %v121
    %v170 = vpack.c.b16 %v125, %v122
    %v171 = vpack.c.b16 %v126, %v123
    %v172 = vpack.c.b16 %v130, %v127
    %v173 = vpack.c.b16 %v131, %v128
    %v174 = vpack.c.b16 %v132, %v129
    %v175 = vpack.c.b16 %v136, %v133
    %v176 = vpack.c.b16 %v137, %v134
    %v177 = vpack.c.b16 %v138, %v135
    %v178 = vpack.c.b16 %v142, %v139
    %v179 = vpack.c.b16 %v143, %v140
    %v180 = vpack.c.b16 %v144, %v141
    %v181 = vpack.c.b16 %v148, %v145
    %v182 = vpack.c.b16 %v149, %v146
    %v183 = vpack.c.b16 %v150, %v147
    %v184 = vpack.c.b16 %v154, %v151
    %v185 = vpack.c.b16 %v155, %v152
    %v186 = vpack.c.b16 %v156, %v153
    %v187 = vpack.c.b16 %v160, %v157
    %v188 = vpack.c.b16 %v161, %v158
    %v189 = vpack.c.b16 %v162, %v159
    %v190 = vpack.c.b16 %v166, %v163
    %v191 = vpack.c.b16 %v167, %v164
    %v192 = vpack.c.b16 %v168, %v165
    %217 = vmatprep.subr.bf16.mxu0 %v170
    %218 = vmatpush1.bf16.msra.mxu0 %v169
    %219 = vmatprep.subr.bf16.mxu0 %v173
    %220 = vmatpush1.bf16.msra.mxu0 %v172
    %221 = vmatprep.subr.bf16.mxu0 %v176
    %222 = vmatpush1.bf16.msra.mxu0 %v175
    %223 = vmatprep.subr.bf16.mxu0 %v179
    %224 = vmatpush1.bf16.msra.mxu0 %v178
    %225 = vmatprep.subr.bf16.mxu0 %v182
    %226 = vmatpush1.bf16.msra.mxu0 %v181
    %227 = vmatprep.subr.bf16.mxu0 %v185
    %228 = vmatpush1.bf16.msra.mxu0 %v184
    %229 = vmatprep.subr.bf16.mxu0 %v188
    %230 = vmatpush1.bf16.msra.mxu0 %v187
    %231 = vmatprep.subr.bf16.mxu0 %v191
    %232 = vmatpush1.bf16.msra.mxu0 %v190
    %233 = vmatprep.subr.bf16.mxu0 0
    %234 = vmatpush1.bf16.msra.mxu0 0
    %235 = vmatprep.subr.bf16.mxu0 0
    %236 = vmatpush1.bf16.msra.mxu0 0
    %237 = vmatprep.subr.bf16.mxu0 0
    %238 = vmatpush1.bf16.msra.mxu0 0
    %239 = vmatprep.subr.bf16.mxu0 0
    %240 = vmatpush1.bf16.msra.mxu0 0
    %241 = vmatprep.subr.bf16.mxu0 0
    %242 = vmatpush1.bf16.msra.mxu0 0
    %243 = vmatprep.subr.bf16.mxu0 0
    %244 = vmatpush1.bf16.msra.mxu0 0
    %245 = vmatprep.subr.bf16.mxu0 0
    %246 = vmatpush1.bf16.msra.mxu0 0
    %247 = vmatprep.subr.bf16.mxu0 0
    %248 = vmatpush1.bf16.msra.mxu0 0
    %249 = vmatprep.mubr.bf16.mxu0 0
    %250 = vmatmul.mubr.bf16.gmra.mrb[0].mxu0 0
    %v251 = vpop.f32.mrb[0].mxu0
    %v252 = vadd.f32 %v74, %v251
    %v253 = vpop.f32.mrb[0].mxu0
    %v254 = vadd.f32 %v78, %v253
    %v255 = vpop.f32.mrb[0].mxu0
    %v256 = vpop.f32.mrb[0].mxu0
    %257 = vdwg.mxu0
    %258 = vmatprep.subr.bf16.mxu0 0
    %259 = vmatpush1.bf16.msra.mxu0 %v171
    %260 = vmatprep.subr.bf16.mxu0 0
    %261 = vmatpush1.bf16.msra.mxu0 %v174
    %262 = vmatprep.subr.bf16.mxu0 0
    %263 = vmatpush1.bf16.msra.mxu0 %v177
    %264 = vmatprep.subr.bf16.mxu0 0
    %265 = vmatpush1.bf16.msra.mxu0 %v180
    %266 = vmatprep.subr.bf16.mxu0 0
    %267 = vmatpush1.bf16.msra.mxu0 %v183
    %268 = vmatprep.subr.bf16.mxu0 0
    %269 = vmatpush1.bf16.msra.mxu0 %v186
    %270 = vmatprep.subr.bf16.mxu0 0
    %271 = vmatpush1.bf16.msra.mxu0 %v189
    %272 = vmatprep.subr.bf16.mxu0 0
    %273 = vmatpush1.bf16.msra.mxu0 %v192
    %274 = vmatprep.subr.bf16.mxu0 0
    %275 = vmatpush1.bf16.msra.mxu0 0
    %276 = vmatprep.subr.bf16.mxu0 0
    %277 = vmatpush1.bf16.msra.mxu0 0
    %278 = vmatprep.subr.bf16.mxu0 0
    %279 = vmatpush1.bf16.msra.mxu0 0
    %280 = vmatprep.subr.bf16.mxu0 0
    %281 = vmatpush1.bf16.msra.mxu0 0
    %282 = vmatprep.subr.bf16.mxu0 0
    %283 = vmatpush1.bf16.msra.mxu0 0
    %284 = vmatprep.subr.bf16.mxu0 0
    %285 = vmatpush1.bf16.msra.mxu0 0
    %286 = vmatprep.subr.bf16.mxu0 0
    %287 = vmatpush1.bf16.msra.mxu0 0
    %288 = vmatprep.subr.bf16.mxu0 0
    %289 = vmatpush1.bf16.msra.mxu0 0
    %290 = vmatprep.mubr.bf16.mxu0 0
    %291 = vmatmul.mubr.bf16.gmra.mrb[0].mxu0 0
    %v292 = vpop.f32.mrb[0].mxu0
    %v293 = vadd.f32 %v82, %v292
    %v294 = vpop.f32.mrb[0].mxu0
    %v295 = vpop.f32.mrb[0].mxu0
    %v296 = vpop.f32.mrb[0].mxu0
    %297 = vdwg.mxu0
    %v298 = vadd.f32 %v86, %v252
    %v299 = vsub.f32 0.0, %v298
    %v300 = vmul.f32 %v299, 1.442695
    %v301 = vpow.pop %v300
    %v302 = vadd.f32 %v301, 1.0
    %v303 = vrcp.pop %v302
    %v304 = vadd.f32 %v87, %v254
    %v305 = vsub.f32 0.0, %v304
    %v306 = vmul.f32 %v305, 1.442695
    %v307 = vpow.pop %v306
    %v308 = vadd.f32 %v307, 1.0
    %v309 = vrcp.pop %v308
    %v310 = vmul.f32 %v303, %v293
    %v311 = vadd.f32 %v88, %v310
    %v312 = vtanh.pop %v311
    %v313 = vsub.f32 1.0, %v309
    %v314 = vmul.f32 %v313, %v312
    %v315 = vmul.f32 %v309, 0.0
    %v316 = vadd.f32 %v314, %v315
    %vm317 = vcmask 523264
    %318 = vst.msk [vmem:[#allocation2] sm:$0xff] %vm317, %v316
    %320 = vrot.lane.b32.xlu0 %v316, 64
    %v321 = vpop.permute.xlu0 %320
    %s323 = scalar_lea.vmem [#allocation3], 56
    %324 = vst.msk [vmem:[%s323] sm:$0xff] %vm317, %v321
    %s325 = scalar_lea.vmem %s0, 24
    %v326 = vld [vmem:[%s325] sm:$0xff]
    %v327 = vld [vmem:[%s325 + $0x8] sm:$0xff]
    %v328 = vld [vmem:[%s325 + $0x10] sm:$0xff]
    %v329 = vpack.c.bf16 %v316, %v316
    %330 = vmatprep.subr.bf16.mxu0 %v170
    %331 = vmatpush1.bf16.msra.mxu0 %v169
    %332 = vmatprep.subr.bf16.mxu0 %v173
    %333 = vmatpush1.bf16.msra.mxu0 %v172
    %334 = vmatprep.subr.bf16.mxu0 %v176
    %335 = vmatpush1.bf16.msra.mxu0 %v175
    %336 = vmatprep.subr.bf16.mxu0 %v179
    %337 = vmatpush1.bf16.msra.mxu0 %v178
    %338 = vmatprep.subr.bf16.mxu0 %v182
    %339 = vmatpush1.bf16.msra.mxu0 %v181
    %340 = vmatprep.subr.bf16.mxu0 %v185
    %341 = vmatpush1.bf16.msra.mxu0 %v184
    %342 = vmatprep.subr.bf16.mxu0 %v188
    %343 = vmatpush1.bf16.msra.mxu0 %v187
    %344 = vmatprep.subr.bf16.mxu0 %v191
    %345 = vmatpush1.bf16.msra.mxu0 %v190
    %346 = vmatprep.subr.bf16.mxu0 0
    %347 = vmatpush1.bf16.msra.mxu0 0
    %348 = vmatprep.subr.bf16.mxu0 0
    %349 = vmatpush1.bf16.msra.mxu0 0
    %350 = vmatprep.subr.bf16.mxu0 0
    %351 = vmatpush1.bf16.msra.mxu0 0
    %352 = vmatprep.subr.bf16.mxu0 0
    %353 = vmatpush1.bf16.msra.mxu0 0
    %354 = vmatprep.subr.bf16.mxu0 0
    %355 = vmatpush1.bf16.msra.mxu0 0
    %356 = vmatprep.subr.bf16.mxu0 0
    %357 = vmatpush1.bf16.msra.mxu0 0
    %358 = vmatprep.subr.bf16.mxu0 0
    %359 = vmatpush1.bf16.msra.mxu0 0
    %360 = vmatprep.subr.bf16.mxu0 0
    %361 = vmatpush1.bf16.msra.mxu0 0
    %362 = vmatprep.mubr.bf16.mxu0 0
    %363 = vmatmul.mubr.bf16.gmra.mrb[0].mxu0 %v329
    %v364 = vpop.f32.mrb[0].mxu0
    %v365 = vadd.f32 %v74, %v364
    %v366 = vpop.f32.mrb[0].mxu0
    %v367 = vadd.f32 %v78, %v366
    %v368 = vpop.f32.mrb[0].mxu0
    %v369 = vpop.f32.mrb[0].mxu0
    %370 = vdwg.mxu0
    %371 = vmatprep.subr.bf16.mxu0 0
    %372 = vmatpush1.bf16.msra.mxu0 %v171
    %373 = vmatprep.subr.bf16.mxu0 0
    %374 = vmatpush1.bf16.msra.mxu0 %v174
    %375 = vmatprep.subr.bf16.mxu0 0
    %376 = vmatpush1.bf16.msra.mxu0 %v177
    %377 = vmatprep.subr.bf16.mxu0 0
    %378 = vmatpush1.bf16.msra.mxu0 %v180
    %379 = vmatprep.subr.bf16.mxu0 0
    %380 = vmatpush1.bf16.msra.mxu0 %v183
    %381 = vmatprep.subr.bf16.mxu0 0
    %382 = vmatpush1.bf16.msra.mxu0 %v186
    %383 = vmatprep.subr.bf16.mxu0 0
    %384 = vmatpush1.bf16.msra.mxu0 %v189
    %385 = vmatprep.subr.bf16.mxu0 0
    %386 = vmatpush1.bf16.msra.mxu0 %v192
    %387 = vmatprep.subr.bf16.mxu0 0
    %388 = vmatpush1.bf16.msra.mxu0 0
    %389 = vmatprep.subr.bf16.mxu0 0
    %390 = vmatpush1.bf16.msra.mxu0 0
    %391 = vmatprep.subr.bf16.mxu0 0
    %392 = vmatpush1.bf16.msra.mxu0 0
    %393 = vmatprep.subr.bf16.mxu0 0
    %394 = vmatpush1.bf16.msra.mxu0 0
    %395 = vmatprep.subr.bf16.mxu0 0
    %396 = vmatpush1.bf16.msra.mxu0 0
    %397 = vmatprep.subr.bf16.mxu0 0
    %398 = vmatpush1.bf16.msra.mxu0 0
    %399 = vmatprep.subr.bf16.mxu0 0
    %400 = vmatpush1.bf16.msra.mxu0 0
    %401 = vmatprep.subr.bf16.mxu0 0
    %402 = vmatpush1.bf16.msra.mxu0 0
    %403 = vmatprep.mubr.bf16.mxu0 0
    %404 = vmatmul.mubr.bf16.gmra.mrb[0].mxu0 %v329
    %v405 = vpop.f32.mrb[0].mxu0
    %v406 = vadd.f32 %v82, %v405
    %v407 = vpop.f32.mrb[0].mxu0
    %v408 = vpop.f32.mrb[0].mxu0
    %v409 = vpop.f32.mrb[0].mxu0
    %410 = vdwg.mxu0
    %v411 = vadd.f32 %v326, %v365
    %v412 = vsub.f32 0.0, %v411
    %v413 = vmul.f32 %v412, 1.442695
    %v414 = vpow.pop %v413
    %v415 = vadd.f32 %v414, 1.0
    %v416 = vrcp.pop %v415
    %v417 = vadd.f32 %v327, %v367
    %v418 = vsub.f32 0.0, %v417
    %v419 = vmul.f32 %v418, 1.442695
    %v420 = vpow.pop %v419
    %v421 = vadd.f32 %v420, 1.0
    %v422 = vrcp.pop %v421
    %v423 = vmul.f32 %v416, %v406
    %v424 = vadd.f32 %v328, %v423
    %v425 = vtanh.pop %v424
    %v426 = vsub.f32 1.0, %v422
    %v427 = vmul.f32 %v426, %v425
    %v428 = vmul.f32 %v422, %v316
    %v429 = vadd.f32 %v427, %v428
    %s430 = scalar_lea.vmem [#allocation2], 8
    %431 = vst.msk [vmem:[%s430] sm:$0xff] %vm317, %v429
    %433 = vrot.lane.b32.xlu0 %v429, 64
    %v434 = vpop.permute.xlu0 %433
    %s436 = scalar_lea.vmem [#allocation3], 48
    %437 = vst.msk [vmem:[%s436] sm:$0xff] %vm317, %v434
    %s438 = scalar_lea.vmem %s0, 48
    %v439 = vld [vmem:[%s438] sm:$0xff]
    %v440 = vld [vmem:[%s438 + $0x8] sm:$0xff]
    %v441 = vld [vmem:[%s438 + $0x10] sm:$0xff]
    %v442 = vpack.c.bf16 %v429, %v429
    %443 = vmatprep.subr.bf16.mxu0 %v170
    %444 = vmatpush1.bf16.msra.mxu0 %v169
    %445 = vmatprep.subr.bf16.mxu0 %v173
    %446 = vmatpush1.bf16.msra.mxu0 %v172
    %447 = vmatprep.subr.bf16.mxu0 %v176
    %448 = vmatpush1.bf16.msra.mxu0 %v175
    %449 = vmatprep.subr.bf16.mxu0 %v179
    %450 = vmatpush1.bf16.msra.mxu0 %v178
    %451 = vmatprep.subr.bf16.mxu0 %v182
    %452 = vmatpush1.bf16.msra.mxu0 %v181
    %453 = vmatprep.subr.bf16.mxu0 %v185
    %454 = vmatpush1.bf16.msra.mxu0 %v184
    %455 = vmatprep.subr.bf16.mxu0 %v188
    %456 = vmatpush1.bf16.msra.mxu0 %v187
    %457 = vmatprep.subr.bf16.mxu0 %v191
    %458 = vmatpush1.bf16.msra.mxu0 %v190
    %459 = vmatprep.subr.bf16.mxu0 0
    %460 = vmatpush1.bf16.msra.mxu0 0
    %461 = vmatprep.subr.bf16.mxu0 0
    %462 = vmatpush1.bf16.msra.mxu0 0
    %463 = vmatprep.subr.bf16.mxu0 0
    %464 = vmatpush1.bf16.msra.mxu0 0
    %465 = vmatprep.subr.bf16.mxu0 0
    %466 = vmatpush1.bf16.msra.mxu0 0
    %467 = vmatprep.subr.bf16.mxu0 0
    %468 = vmatpush1.bf16.msra.mxu0 0
    %469 = vmatprep.subr.bf16.mxu0 0
    %470 = vmatpush1.bf16.msra.mxu0 0
    %471 = vmatprep.subr.bf16.mxu0 0
    %472 = vmatpush1.bf16.msra.mxu0 0
    %473 = vmatprep.subr.bf16.mxu0 0
    %474 = vmatpush1.bf16.msra.mxu0 0
    %475 = vmatprep.mubr.bf16.mxu0 0
    %476 = vmatmul.mubr.bf16.gmra.mrb[0].mxu0 %v442
    %v477 = vpop.f32.mrb[0].mxu0
    %v478 = vadd.f32 %v74, %v477
    %v479 = vpop.f32.mrb[0].mxu0
    %v480 = vadd.f32 %v78, %v479
    %v481 = vpop.f32.mrb[0].mxu0
    %v482 = vpop.f32.mrb[0].mxu0
    %483 = vdwg.mxu0
    %484 = vmatprep.subr.bf16.mxu0 0
    %485 = vmatpush1.bf16.msra.mxu0 %v171
    %486 = vmatprep.subr.bf16.mxu0 0
    %487 = vmatpush1.bf16.msra.mxu0 %v174
    %488 = vmatprep.subr.bf16.mxu0 0
    %489 = vmatpush1.bf16.msra.mxu0 %v177
    %490 = vmatprep.subr.bf16.mxu0 0
    %491 = vmatpush1.bf16.msra.mxu0 %v180
    %492 = vmatprep.subr.bf16.mxu0 0
    %493 = vmatpush1.bf16.msra.mxu0 %v183
    %494 = vmatprep.subr.bf16.mxu0 0
    %495 = vmatpush1.bf16.msra.mxu0 %v186
    %496 = vmatprep.subr.bf16.mxu0 0
    %497 = vmatpush1.bf16.msra.mxu0 %v189
    %498 = vmatprep.subr.bf16.mxu0 0
    %499 = vmatpush1.bf16.msra.mxu0 %v192
    %500 = vmatprep.subr.bf16.mxu0 0
    %501 = vmatpush1.bf16.msra.mxu0 0
    %502 = vmatprep.subr.bf16.mxu0 0
    %503 = vmatpush1.bf16.msra.mxu0 0
    %504 = vmatprep.subr.bf16.mxu0 0
    %505 = vmatpush1.bf16.msra.mxu0 0
    %506 = vmatprep.subr.bf16.mxu0 0
    %507 = vmatpush1.bf16.msra.mxu0 0
    %508 = vmatprep.subr.bf16.mxu0 0
    %509 = vmatpush1.bf16.msra.mxu0 0
    %510 = vmatprep.subr.bf16.mxu0 0
    %511 = vmatpush1.bf16.msra.mxu0 0
    %512 = vmatprep.subr.bf16.mxu0 0
    %513 = vmatpush1.bf16.msra.mxu0 0
    %514 = vmatprep.subr.bf16.mxu0 0
    %515 = vmatpush1.bf16.msra.mxu0 0
    %516 = vmatprep.mubr.bf16.mxu0 0
    %517 = vmatmul.mubr.bf16.gmra.mrb[0].mxu0 %v442
    %v518 = vpop.f32.mrb[0].mxu0
    %v519 = vadd.f32 %v82, %v518
    %v520 = vpop.f32.mrb[0].mxu0
    %v521 = vpop.f32.mrb[0].mxu0
    %v522 = vpop.f32.mrb[0].mxu0
    %523 = vdwg.mxu0
    %v524 = vadd.f32 %v439, %v478
    %v525 = vsub.f32 0.0, %v524
    %v526 = vmul.f32 %v525, 1.442695
    %v527 = vpow.pop %v526
    %v528 = vadd.f32 %v527, 1.0
    %v529 = vrcp.pop %v528
    %v530 = vadd.f32 %v440, %v480
    %v531 = vsub.f32 0.0, %v530
    %v532 = vmul.f32 %v531, 1.442695
    %v533 = vpow.pop %v532
    %v534 = vadd.f32 %v533, 1.0
    %v535 = vrcp.pop %v534
    %v536 = vmul.f32 %v529, %v519
    %v537 = vadd.f32 %v441, %v536
    %v538 = vtanh.pop %v537
    %v539 = vsub.f32 1.0, %v535
    %v540 = vmul.f32 %v539, %v538
    %v541 = vmul.f32 %v535, %v429
    %v542 = vadd.f32 %v540, %v541
    %s543 = scalar_lea.vmem [#allocation2], 16
    %544 = vst.msk [vmem:[%s543] sm:$0xff] %vm317, %v542
    %546 = vrot.lane.b32.xlu0 %v542, 64
    %v547 = vpop.permute.xlu0 %546
    %s549 = scalar_lea.vmem [#allocation3], 40
    %550 = vst.msk [vmem:[%s549] sm:$0xff] %vm317, %v547
    %s551 = scalar_lea.vmem %s0, 72
    %v552 = vld [vmem:[%s551] sm:$0xff]
    %v553 = vld [vmem:[%s551 + $0x8] sm:$0xff]
    %v554 = vld [vmem:[%s551 + $0x10] sm:$0xff]
    %v555 = vpack.c.bf16 %v542, %v542
    %556 = vmatprep.subr.bf16.mxu0 %v170
    %557 = vmatpush1.bf16.msra.mxu0 %v169
    %558 = vmatprep.subr.bf16.mxu0 %v173
    %559 = vmatpush1.bf16.msra.mxu0 %v172
    %560 = vmatprep.subr.bf16.mxu0 %v176
    %561 = vmatpush1.bf16.msra.mxu0 %v175
    %562 = vmatprep.subr.bf16.mxu0 %v179
    %563 = vmatpush1.bf16.msra.mxu0 %v178
    %564 = vmatprep.subr.bf16.mxu0 %v182
    %565 = vmatpush1.bf16.msra.mxu0 %v181
    %566 = vmatprep.subr.bf16.mxu0 %v185
    %567 = vmatpush1.bf16.msra.mxu0 %v184
    %568 = vmatprep.subr.bf16.mxu0 %v188
    %569 = vmatpush1.bf16.msra.mxu0 %v187
    %570 = vmatprep.subr.bf16.mxu0 %v191
    %571 = vmatpush1.bf16.msra.mxu0 %v190
    %572 = vmatprep.subr.bf16.mxu0 0
    %573 = vmatpush1.bf16.msra.mxu0 0
    %574 = vmatprep.subr.bf16.mxu0 0
    %575 = vmatpush1.bf16.msra.mxu0 0
    %576 = vmatprep.subr.bf16.mxu0 0
    %577 = vmatpush1.bf16.msra.mxu0 0
    %578 = vmatprep.subr.bf16.mxu0 0
    %579 = vmatpush1.bf16.msra.mxu0 0
    %580 = vmatprep.subr.bf16.mxu0 0
    %581 = vmatpush1.bf16.msra.mxu0 0
    %582 = vmatprep.subr.bf16.mxu0 0
    %583 = vmatpush1.bf16.msra.mxu0 0
    %584 = vmatprep.subr.bf16.mxu0 0
    %585 = vmatpush1.bf16.msra.mxu0 0
    %586 = vmatprep.subr.bf16.mxu0 0
    %587 = vmatpush1.bf16.msra.mxu0 0
    %588 = vmatprep.mubr.bf16.mxu0 0
    %589 = vmatmul.mubr.bf16.gmra.mrb[0].mxu0 %v555
    %v590 = vpop.f32.mrb[0].mxu0
    %v591 = vadd.f32 %v74, %v590
    %v592 = vpop.f32.mrb[0].mxu0
    %v593 = vadd.f32 %v78, %v592
    %v594 = vpop.f32.mrb[0].mxu0
    %v595 = vpop.f32.mrb[0].mxu0
    %596 = vdwg.mxu0
    %597 = vmatprep.subr.bf16.mxu0 0
    %598 = vmatpush1.bf16.msra.mxu0 %v171
    %599 = vmatprep.subr.bf16.mxu0 0
    %600 = vmatpush1.bf16.msra.mxu0 %v174
    %601 = vmatprep.subr.bf16.mxu0 0
    %602 = vmatpush1.bf16.msra.mxu0 %v177
    %603 = vmatprep.subr.bf16.mxu0 0
    %604 = vmatpush1.bf16.msra.mxu0 %v180
    %605 = vmatprep.subr.bf16.mxu0 0
    %606 = vmatpush1.bf16.msra.mxu0 %v183
    %607 = vmatprep.subr.bf16.mxu0 0
    %608 = vmatpush1.bf16.msra.mxu0 %v186
    %609 = vmatprep.subr.bf16.mxu0 0
    %610 = vmatpush1.bf16.msra.mxu0 %v189
    %611 = vmatprep.subr.bf16.mxu0 0
    %612 = vmatpush1.bf16.msra.mxu0 %v192
    %613 = vmatprep.subr.bf16.mxu0 0
    %614 = vmatpush1.bf16.msra.mxu0 0
    %615 = vmatprep.subr.bf16.mxu0 0
    %616 = vmatpush1.bf16.msra.mxu0 0
    %617 = vmatprep.subr.bf16.mxu0 0
    %618 = vmatpush1.bf16.msra.mxu0 0
    %619 = vmatprep.subr.bf16.mxu0 0
    %620 = vmatpush1.bf16.msra.mxu0 0
    %621 = vmatprep.subr.bf16.mxu0 0
    %622 = vmatpush1.bf16.msra.mxu0 0
    %623 = vmatprep.subr.bf16.mxu0 0
    %624 = vmatpush1.bf16.msra.mxu0 0
    %625 = vmatprep.subr.bf16.mxu0 0
    %626 = vmatpush1.bf16.msra.mxu0 0
    %627 = vmatprep.subr.bf16.mxu0 0
    %628 = vmatpush1.bf16.msra.mxu0 0
    %629 = vmatprep.mubr.bf16.mxu0 0
    %630 = vmatmul.mubr.bf16.gmra.mrb[0].mxu0 %v555
    %v631 = vpop.f32.mrb[0].mxu0
    %v632 = vadd.f32 %v82, %v631
    %v633 = vpop.f32.mrb[0].mxu0
    %v634 = vpop.f32.mrb[0].mxu0
    %v635 = vpop.f32.mrb[0].mxu0
    %636 = vdwg.mxu0
    %v637 = vadd.f32 %v552, %v591
    %v638 = vsub.f32 0.0, %v637
    %v639 = vmul.f32 %v638, 1.442695
    %v640 = vpow.pop %v639
    %v641 = vadd.f32 %v640, 1.0
    %v642 = vrcp.pop %v641
    %v643 = vadd.f32 %v553, %v593
    %v644 = vsub.f32 0.0, %v643
    %v645 = vmul.f32 %v644, 1.442695
    %v646 = vpow.pop %v645
    %v647 = vadd.f32 %v646, 1.0
    %v648 = vrcp.pop %v647
    %v649 = vmul.f32 %v642, %v632
    %v650 = vadd.f32 %v554, %v649
    %v651 = vtanh.pop %v650
    %v652 = vsub.f32 1.0, %v648
    %v653 = vmul.f32 %v652, %v651
    %v654 = vmul.f32 %v648, %v542
    %v655 = vadd.f32 %v653, %v654
    %s656 = scalar_lea.vmem [#allocation2], 24
    %657 = vst.msk [vmem:[%s656] sm:$0xff] %vm317, %v655
    %659 = vrot.lane.b32.xlu0 %v655, 64
    %v660 = vpop.permute.xlu0 %659
    %s662 = scalar_lea.vmem [#allocation3], 32
    %663 = vst.msk [vmem:[%s662] sm:$0xff] %vm317, %v660
    %s664 = scalar_lea.vmem %s0, 96
    %v665 = vld [vmem:[%s664] sm:$0xff]
    %v666 = vld [vmem:[%s664 + $0x8] sm:$0xff]
    %v667 = vld [vmem:[%s664 + $0x10] sm:$0xff]
    %v668 = vpack.c.bf16 %v655, %v655
    %669 = vmatprep.subr.bf16.mxu0 %v170
    %670 = vmatpush1.bf16.msra.mxu0 %v169
    %671 = vmatprep.subr.bf16.mxu0 %v173
    %672 = vmatpush1.bf16.msra.mxu0 %v172
    %673 = vmatprep.subr.bf16.mxu0 %v176
    %674 = vmatpush1.bf16.msra.mxu0 %v175
    %675 = vmatprep.subr.bf16.mxu0 %v179
    %676 = vmatpush1.bf16.msra.mxu0 %v178
    %677 = vmatprep.subr.bf16.mxu0 %v182
    %678 = vmatpush1.bf16.msra.mxu0 %v181
    %679 = vmatprep.subr.bf16.mxu0 %v185
    %680 = vmatpush1.bf16.msra.mxu0 %v184
    %681 = vmatprep.subr.bf16.mxu0 %v188
    %682 = vmatpush1.bf16.msra.mxu0 %v187
    %683 = vmatprep.subr.bf16.mxu0 %v191
    %684 = vmatpush1.bf16.msra.mxu0 %v190
    %685 = vmatprep.subr.bf16.mxu0 0
    %686 = vmatpush1.bf16.msra.mxu0 0
    %687 = vmatprep.subr.bf16.mxu0 0
    %688 = vmatpush1.bf16.msra.mxu0 0
    %689 = vmatprep.subr.bf16.mxu0 0
    %690 = vmatpush1.bf16.msra.mxu0 0
    %691 = vmatprep.subr.bf16.mxu0 0
    %692 = vmatpush1.bf16.msra.mxu0 0
    %693 = vmatprep.subr.bf16.mxu0 0
    %694 = vmatpush1.bf16.msra.mxu0 0
    %695 = vmatprep.subr.bf16.mxu0 0
    %696 = vmatpush1.bf16.msra.mxu0 0
    %697 = vmatprep.subr.bf16.mxu0 0
    %698 = vmatpush1.bf16.msra.mxu0 0
    %699 = vmatprep.subr.bf16.mxu0 0
    %700 = vmatpush1.bf16.msra.mxu0 0
    %701 = vmatprep.mubr.bf16.mxu0 0
    %702 = vmatmul.mubr.bf16.gmra.mrb[0].mxu0 %v668
    %v703 = vpop.f32.mrb[0].mxu0
    %v704 = vadd.f32 %v74, %v703
    %v705 = vpop.f32.mrb[0].mxu0
    %v706 = vadd.f32 %v78, %v705
    %v707 = vpop.f32.mrb[0].mxu0
    %v708 = vpop.f32.mrb[0].mxu0
    %709 = vdwg.mxu0
    %710 = vmatprep.subr.bf16.mxu0 0
    %711 = vmatpush1.bf16.msra.mxu0 %v171
    %712 = vmatprep.subr.bf16.mxu0 0
    %713 = vmatpush1.bf16.msra.mxu0 %v174
    %714 = vmatprep.subr.bf16.mxu0 0
    %715 = vmatpush1.bf16.msra.mxu0 %v177
    %716 = vmatprep.subr.bf16.mxu0 0
    %717 = vmatpush1.bf16.msra.mxu0 %v180
    %718 = vmatprep.subr.bf16.mxu0 0
    %719 = vmatpush1.bf16.msra.mxu0 %v183
    %720 = vmatprep.subr.bf16.mxu0 0
    %721 = vmatpush1.bf16.msra.mxu0 %v186
    %722 = vmatprep.subr.bf16.mxu0 0
    %723 = vmatpush1.bf16.msra.mxu0 %v189
    %724 = vmatprep.subr.bf16.mxu0 0
    %725 = vmatpush1.bf16.msra.mxu0 %v192
    %726 = vmatprep.subr.bf16.mxu0 0
    %727 = vmatpush1.bf16.msra.mxu0 0
    %728 = vmatprep.subr.bf16.mxu0 0
    %729 = vmatpush1.bf16.msra.mxu0 0
    %730 = vmatprep.subr.bf16.mxu0 0
    %731 = vmatpush1.bf16.msra.mxu0 0
    %732 = vmatprep.subr.bf16.mxu0 0
    %733 = vmatpush1.bf16.msra.mxu0 0
    %734 = vmatprep.subr.bf16.mxu0 0
    %735 = vmatpush1.bf16.msra.mxu0 0
    %736 = vmatprep.subr.bf16.mxu0 0
    %737 = vmatpush1.bf16.msra.mxu0 0
    %738 = vmatprep.subr.bf16.mxu0 0
    %739 = vmatpush1.bf16.msra.mxu0 0
    %740 = vmatprep.subr.bf16.mxu0 0
    %741 = vmatpush1.bf16.msra.mxu0 0
    %742 = vmatprep.mubr.bf16.mxu0 0
    %743 = vmatmul.mubr.bf16.gmra.mrb[0].mxu0 %v668
    %v744 = vpop.f32.mrb[0].mxu0
    %v745 = vadd.f32 %v82, %v744
    %v746 = vpop.f32.mrb[0].mxu0
    %v747 = vpop.f32.mrb[0].mxu0
    %v748 = vpop.f32.mrb[0].mxu0
    %749 = vdwg.mxu0
    %v750 = vadd.f32 %v665, %v704
    %v751 = vsub.f32 0.0, %v750
    %v752 = vmul.f32 %v751, 1.442695
    %v753 = vpow.pop %v752
    %v754 = vadd.f32 %v753, 1.0
    %v755 = vrcp.pop %v754
    %v756 = vadd.f32 %v666, %v706
    %v757 = vsub.f32 0.0, %v756
    %v758 = vmul.f32 %v757, 1.442695
    %v759 = vpow.pop %v758
    %v760 = vadd.f32 %v759, 1.0
    %v761 = vrcp.pop %v760
    %v762 = vmul.f32 %v755, %v745
    %v763 = vadd.f32 %v667, %v762
    %v764 = vtanh.pop %v763
    %v765 = vsub.f32 1.0, %v761
    %v766 = vmul.f32 %v765, %v764
    %v767 = vmul.f32 %v761, %v655
    %v768 = vadd.f32 %v766, %v767
    %s769 = scalar_lea.vmem [#allocation2], 32
    %770 = vst.msk [vmem:[%s769] sm:$0xff] %vm317, %v768
    %772 = vrot.lane.b32.xlu0 %v768, 64
    %v773 = vpop.permute.xlu0 %772
    %s775 = scalar_lea.vmem [#allocation3], 24
    %776 = vst.msk [vmem:[%s775] sm:$0xff] %vm317, %v773
    %s777 = scalar_lea.vmem %s0, 120
    %v778 = vld [vmem:[%s777] sm:$0xff]
    %v779 = vld [vmem:[%s777 + $0x8] sm:$0xff]
    %v780 = vld [vmem:[%s777 + $0x10] sm:$0xff]
    %v781 = vpack.c.bf16 %v768, %v768
    %782 = vmatprep.subr.bf16.mxu0 %v170
    %783 = vmatpush1.bf16.msra.mxu0 %v169
    %784 = vmatprep.subr.bf16.mxu0 %v173
    %785 = vmatpush1.bf16.msra.mxu0 %v172
    %786 = vmatprep.subr.bf16.mxu0 %v176
    %787 = vmatpush1.bf16.msra.mxu0 %v175
    %788 = vmatprep.subr.bf16.mxu0 %v179
    %789 = vmatpush1.bf16.msra.mxu0 %v178
    %790 = vmatprep.subr.bf16.mxu0 %v182
    %791 = vmatpush1.bf16.msra.mxu0 %v181
    %792 = vmatprep.subr.bf16.mxu0 %v185
    %793 = vmatpush1.bf16.msra.mxu0 %v184
    %794 = vmatprep.subr.bf16.mxu0 %v188
    %795 = vmatpush1.bf16.msra.mxu0 %v187
    %796 = vmatprep.subr.bf16.mxu0 %v191
    %797 = vmatpush1.bf16.msra.mxu0 %v190
    %798 = vmatprep.subr.bf16.mxu0 0
    %799 = vmatpush1.bf16.msra.mxu0 0
    %800 = vmatprep.subr.bf16.mxu0 0
    %801 = vmatpush1.bf16.msra.mxu0 0
    %802 = vmatprep.subr.bf16.mxu0 0
    %803 = vmatpush1.bf16.msra.mxu0 0
    %804 = vmatprep.subr.bf16.mxu0 0
    %805 = vmatpush1.bf16.msra.mxu0 0
    %806 = vmatprep.subr.bf16.mxu0 0
    %807 = vmatpush1.bf16.msra.mxu0 0
    %808 = vmatprep.subr.bf16.mxu0 0
    %809 = vmatpush1.bf16.msra.mxu0 0
    %810 = vmatprep.subr.bf16.mxu0 0
    %811 = vmatpush1.bf16.msra.mxu0 0
    %812 = vmatprep.subr.bf16.mxu0 0
    %813 = vmatpush1.bf16.msra.mxu0 0
    %814 = vmatprep.mubr.bf16.mxu0 0
    %815 = vmatmul.mubr.bf16.gmra.mrb[0].mxu0 %v781
    %v816 = vpop.f32.mrb[0].mxu0
    %v817 = vadd.f32 %v74, %v816
    %v818 = vpop.f32.mrb[0].mxu0
    %v819 = vadd.f32 %v78, %v818
    %v820 = vpop.f32.mrb[0].mxu0
    %v821 = vpop.f32.mrb[0].mxu0
    %822 = vdwg.mxu0
    %823 = vmatprep.subr.bf16.mxu0 0
    %824 = vmatpush1.bf16.msra.mxu0 %v171
    %825 = vmatprep.subr.bf16.mxu0 0
    %826 = vmatpush1.bf16.msra.mxu0 %v174
    %827 = vmatprep.subr.bf16.mxu0 0
    %828 = vmatpush1.bf16.msra.mxu0 %v177
    %829 = vmatprep.subr.bf16.mxu0 0
    %830 = vmatpush1.bf16.msra.mxu0 %v180
    %831 = vmatprep.subr.bf16.mxu0 0
    %832 = vmatpush1.bf16.msra.mxu0 %v183
    %833 = vmatprep.subr.bf16.mxu0 0
    %834 = vmatpush1.bf16.msra.mxu0 %v186
    %835 = vmatprep.subr.bf16.mxu0 0
    %836 = vmatpush1.bf16.msra.mxu0 %v189
    %837 = vmatprep.subr.bf16.mxu0 0
    %838 = vmatpush1.bf16.msra.mxu0 %v192
    %839 = vmatprep.subr.bf16.mxu0 0
    %840 = vmatpush1.bf16.msra.mxu0 0
    %841 = vmatprep.subr.bf16.mxu0 0
    %842 = vmatpush1.bf16.msra.mxu0 0
    %843 = vmatprep.subr.bf16.mxu0 0
    %844 = vmatpush1.bf16.msra.mxu0 0
    %845 = vmatprep.subr.bf16.mxu0 0
    %846 = vmatpush1.bf16.msra.mxu0 0
    %847 = vmatprep.subr.bf16.mxu0 0
    %848 = vmatpush1.bf16.msra.mxu0 0
    %849 = vmatprep.subr.bf16.mxu0 0
    %850 = vmatpush1.bf16.msra.mxu0 0
    %851 = vmatprep.subr.bf16.mxu0 0
    %852 = vmatpush1.bf16.msra.mxu0 0
    %853 = vmatprep.subr.bf16.mxu0 0
    %854 = vmatpush1.bf16.msra.mxu0 0
    %855 = vmatprep.mubr.bf16.mxu0 0
    %856 = vmatmul.mubr.bf16.gmra.mrb[0].mxu0 %v781
    %v857 = vpop.f32.mrb[0].mxu0
    %v858 = vadd.f32 %v82, %v857
    %v859 = vpop.f32.mrb[0].mxu0
    %v860 = vpop.f32.mrb[0].mxu0
    %v861 = vpop.f32.mrb[0].mxu0
    %862 = vdwg.mxu0
    %v863 = vadd.f32 %v778, %v817
    %v864 = vsub.f32 0.0, %v863
    %v865 = vmul.f32 %v864, 1.442695
    %v866 = vpow.pop %v865
    %v867 = vadd.f32 %v866, 1.0
    %v868 = vrcp.pop %v867
    %v869 = vadd.f32 %v779, %v819
    %v870 = vsub.f32 0.0, %v869
    %v871 = vmul.f32 %v870, 1.442695
    %v872 = vpow.pop %v871
    %v873 = vadd.f32 %v872, 1.0
    %v874 = vrcp.pop %v873
    %v875 = vmul.f32 %v868, %v858
    %v876 = vadd.f32 %v780, %v875
    %v877 = vtanh.pop %v876
    %v878 = vsub.f32 1.0, %v874
    %v879 = vmul.f32 %v878, %v877
    %v880 = vmul.f32 %v874, %v768
    %v881 = vadd.f32 %v879, %v880
    %s882 = scalar_lea.vmem [#allocation2], 40
    %883 = vst.msk [vmem:[%s882] sm:$0xff] %vm317, %v881
    %885 = vrot.lane.b32.xlu0 %v881, 64
    %v886 = vpop.permute.xlu0 %885
    %s888 = scalar_lea.vmem [#allocation3], 16
    %889 = vst.msk [vmem:[%s888] sm:$0xff] %vm317, %v886
    %s890 = scalar_lea.vmem %s0, 144
    %v891 = vld [vmem:[%s890] sm:$0xff]
    %v892 = vld [vmem:[%s890 + $0x8] sm:$0xff]
    %v893 = vld [vmem:[%s890 + $0x10] sm:$0xff]
    %v894 = vpack.c.bf16 %v881, %v881
    %895 = vmatprep.subr.bf16.mxu0 %v170
    %896 = vmatpush1.bf16.msra.mxu0 %v169
    %897 = vmatprep.subr.bf16.mxu0 %v173
    %898 = vmatpush1.bf16.msra.mxu0 %v172
    %899 = vmatprep.subr.bf16.mxu0 %v176
    %900 = vmatpush1.bf16.msra.mxu0 %v175
    %901 = vmatprep.subr.bf16.mxu0 %v179
    %902 = vmatpush1.bf16.msra.mxu0 %v178
    %903 = vmatprep.subr.bf16.mxu0 %v182
    %904 = vmatpush1.bf16.msra.mxu0 %v181
    %905 = vmatprep.subr.bf16.mxu0 %v185
    %906 = vmatpush1.bf16.msra.mxu0 %v184
    %907 = vmatprep.subr.bf16.mxu0 %v188
    %908 = vmatpush1.bf16.msra.mxu0 %v187
    %909 = vmatprep.subr.bf16.mxu0 %v191
    %910 = vmatpush1.bf16.msra.mxu0 %v190
    %911 = vmatprep.subr.bf16.mxu0 0
    %912 = vmatpush1.bf16.msra.mxu0 0
    %913 = vmatprep.subr.bf16.mxu0 0
    %914 = vmatpush1.bf16.msra.mxu0 0
    %915 = vmatprep.subr.bf16.mxu0 0
    %916 = vmatpush1.bf16.msra.mxu0 0
    %917 = vmatprep.subr.bf16.mxu0 0
    %918 = vmatpush1.bf16.msra.mxu0 0
    %919 = vmatprep.subr.bf16.mxu0 0
    %920 = vmatpush1.bf16.msra.mxu0 0
    %921 = vmatprep.subr.bf16.mxu0 0
    %922 = vmatpush1.bf16.msra.mxu0 0
    %923 = vmatprep.subr.bf16.mxu0 0
    %924 = vmatpush1.bf16.msra.mxu0 0
    %925 = vmatprep.subr.bf16.mxu0 0
    %926 = vmatpush1.bf16.msra.mxu0 0
    %927 = vmatprep.mubr.bf16.mxu0 0
    %928 = vmatmul.mubr.bf16.gmra.mrb[0].mxu0 %v894
    %v929 = vpop.f32.mrb[0].mxu0
    %v930 = vadd.f32 %v74, %v929
    %v931 = vpop.f32.mrb[0].mxu0
    %v932 = vadd.f32 %v78, %v931
    %v933 = vpop.f32.mrb[0].mxu0
    %v934 = vpop.f32.mrb[0].mxu0
    %935 = vdwg.mxu0
    %936 = vmatprep.subr.bf16.mxu0 0
    %937 = vmatpush1.bf16.msra.mxu0 %v171
    %938 = vmatprep.subr.bf16.mxu0 0
    %939 = vmatpush1.bf16.msra.mxu0 %v174
    %940 = vmatprep.subr.bf16.mxu0 0
    %941 = vmatpush1.bf16.msra.mxu0 %v177
    %942 = vmatprep.subr.bf16.mxu0 0
    %943 = vmatpush1.bf16.msra.mxu0 %v180
    %944 = vmatprep.subr.bf16.mxu0 0
    %945 = vmatpush1.bf16.msra.mxu0 %v183
    %946 = vmatprep.subr.bf16.mxu0 0
    %947 = vmatpush1.bf16.msra.mxu0 %v186
    %948 = vmatprep.subr.bf16.mxu0 0
    %949 = vmatpush1.bf16.msra.mxu0 %v189
    %950 = vmatprep.subr.bf16.mxu0 0
    %951 = vmatpush1.bf16.msra.mxu0 %v192
    %952 = vmatprep.subr.bf16.mxu0 0
    %953 = vmatpush1.bf16.msra.mxu0 0
    %954 = vmatprep.subr.bf16.mxu0 0
    %955 = vmatpush1.bf16.msra.mxu0 0
    %956 = vmatprep.subr.bf16.mxu0 0
    %957 = vmatpush1.bf16.msra.mxu0 0
    %958 = vmatprep.subr.bf16.mxu0 0
    %959 = vmatpush1.bf16.msra.mxu0 0
    %960 = vmatprep.subr.bf16.mxu0 0
    %961 = vmatpush1.bf16.msra.mxu0 0
    %962 = vmatprep.subr.bf16.mxu0 0
    %963 = vmatpush1.bf16.msra.mxu0 0
    %964 = vmatprep.subr.bf16.mxu0 0
    %965 = vmatpush1.bf16.msra.mxu0 0
    %966 = vmatprep.subr.bf16.mxu0 0
    %967 = vmatpush1.bf16.msra.mxu0 0
    %968 = vmatprep.mubr.bf16.mxu0 0
    %969 = vmatmul.mubr.bf16.gmra.mrb[0].mxu0 %v894
    %v970 = vpop.f32.mrb[0].mxu0
    %v971 = vadd.f32 %v82, %v970
    %v972 = vpop.f32.mrb[0].mxu0
    %v973 = vpop.f32.mrb[0].mxu0
    %v974 = vpop.f32.mrb[0].mxu0
    %975 = vdwg.mxu0
    %v976 = vadd.f32 %v891, %v930
    %v977 = vsub.f32 0.0, %v976
    %v978 = vmul.f32 %v977, 1.442695
    %v979 = vpow.pop %v978
    %v980 = vadd.f32 %v979, 1.0
    %v981 = vrcp.pop %v980
    %v982 = vadd.f32 %v892, %v932
    %v983 = vsub.f32 0.0, %v982
    %v984 = vmul.f32 %v983, 1.442695
    %v985 = vpow.pop %v984
    %v986 = vadd.f32 %v985, 1.0
    %v987 = vrcp.pop %v986
    %v988 = vmul.f32 %v981, %v971
    %v989 = vadd.f32 %v893, %v988
    %v990 = vtanh.pop %v989
    %v991 = vsub.f32 1.0, %v987
    %v992 = vmul.f32 %v991, %v990
    %v993 = vmul.f32 %v987, %v881
    %v994 = vadd.f32 %v992, %v993
    %s995 = scalar_lea.vmem [#allocation2], 48
    %996 = vst.msk [vmem:[%s995] sm:$0xff] %vm317, %v994
    %998 = vrot.lane.b32.xlu0 %v994, 64
    %v999 = vpop.permute.xlu0 %998
    %s1001 = scalar_lea.vmem [#allocation3], 8
    %1002 = vst.msk [vmem:[%s1001] sm:$0xff] %vm317, %v999
    %s1003 = scalar_lea.vmem %s0, 168
    %v1004 = vld [vmem:[%s1003] sm:$0xff]
    %v1005 = vld [vmem:[%s1003 + $0x8] sm:$0xff]
    %v1006 = vld [vmem:[%s1003 + $0x10] sm:$0xff]
    %v1007 = vpack.c.bf16 %v994, %v994
    %1008 = vmatprep.subr.bf16.mxu0 %v170
    %1009 = vmatpush1.bf16.msra.mxu0 %v169
    %1010 = vmatprep.subr.bf16.mxu0 %v173
    %1011 = vmatpush1.bf16.msra.mxu0 %v172
    %1012 = vmatprep.subr.bf16.mxu0 %v176
    %1013 = vmatpush1.bf16.msra.mxu0 %v175
    %1014 = vmatprep.subr.bf16.mxu0 %v179
    %1015 = vmatpush1.bf16.msra.mxu0 %v178
    %1016 = vmatprep.subr.bf16.mxu0 %v182
    %1017 = vmatpush1.bf16.msra.mxu0 %v181
    %1018 = vmatprep.subr.bf16.mxu0 %v185
    %1019 = vmatpush1.bf16.msra.mxu0 %v184
    %1020 = vmatprep.subr.bf16.mxu0 %v188
    %1021 = vmatpush1.bf16.msra.mxu0 %v187
    %1022 = vmatprep.subr.bf16.mxu0 %v191
    %1023 = vmatpush1.bf16.msra.mxu0 %v190
    %1024 = vmatprep.subr.bf16.mxu0 0
    %1025 = vmatpush1.bf16.msra.mxu0 0
    %1026 = vmatprep.subr.bf16.mxu0 0
    %1027 = vmatpush1.bf16.msra.mxu0 0
    %1028 = vmatprep.subr.bf16.mxu0 0
    %1029 = vmatpush1.bf16.msra.mxu0 0
    %1030 = vmatprep.subr.bf16.mxu0 0
    %1031 = vmatpush1.bf16.msra.mxu0 0
    %1032 = vmatprep.subr.bf16.mxu0 0
    %1033 = vmatpush1.bf16.msra.mxu0 0
    %1034 = vmatprep.subr.bf16.mxu0 0
    %1035 = vmatpush1.bf16.msra.mxu0 0
    %1036 = vmatprep.subr.bf16.mxu0 0
    %1037 = vmatpush1.bf16.msra.mxu0 0
    %1038 = vmatprep.subr.bf16.mxu0 0
    %1039 = vmatpush1.bf16.msra.mxu0 0
    %1040 = vmatprep.mubr.bf16.mxu0 0
    %1041 = vmatmul.mubr.bf16.gmra.mrb[0].mxu0 %v1007
    %v1042 = vpop.f32.mrb[0].mxu0
    %v1043 = vadd.f32 %v74, %v1042
    %v1044 = vpop.f32.mrb[0].mxu0
    %v1045 = vadd.f32 %v78, %v1044
    %v1046 = vpop.f32.mrb[0].mxu0
    %v1047 = vpop.f32.mrb[0].mxu0
    %1048 = vdwg.mxu0
    %1049 = vmatprep.subr.bf16.mxu0 0
    %1050 = vmatpush1.bf16.msra.mxu0 %v171
    %1051 = vmatprep.subr.bf16.mxu0 0
    %1052 = vmatpush1.bf16.msra.mxu0 %v174
    %1053 = vmatprep.subr.bf16.mxu0 0
    %1054 = vmatpush1.bf16.msra.mxu0 %v177
    %1055 = vmatprep.subr.bf16.mxu0 0
    %1056 = vmatpush1.bf16.msra.mxu0 %v180
    %1057 = vmatprep.subr.bf16.mxu0 0
    %1058 = vmatpush1.bf16.msra.mxu0 %v183
    %1059 = vmatprep.subr.bf16.mxu0 0
    %1060 = vmatpush1.bf16.msra.mxu0 %v186
    %1061 = vmatprep.subr.bf16.mxu0 0
    %1062 = vmatpush1.bf16.msra.mxu0 %v189
    %1063 = vmatprep.subr.bf16.mxu0 0
    %1064 = vmatpush1.bf16.msra.mxu0 %v192
    %1065 = vmatprep.subr.bf16.mxu0 0
    %1066 = vmatpush1.bf16.msra.mxu0 0
    %1067 = vmatprep.subr.bf16.mxu0 0
    %1068 = vmatpush1.bf16.msra.mxu0 0
    %1069 = vmatprep.subr.bf16.mxu0 0
    %1070 = vmatpush1.bf16.msra.mxu0 0
    %1071 = vmatprep.subr.bf16.mxu0 0
    %1072 = vmatpush1.bf16.msra.mxu0 0
    %1073 = vmatprep.subr.bf16.mxu0 0
    %1074 = vmatpush1.bf16.msra.mxu0 0
    %1075 = vmatprep.subr.bf16.mxu0 0
    %1076 = vmatpush1.bf16.msra.mxu0 0
    %1077 = vmatprep.subr.bf16.mxu0 0
    %1078 = vmatpush1.bf16.msra.mxu0 0
    %1079 = vmatprep.subr.bf16.mxu0 0
    %1080 = vmatpush1.bf16.msra.mxu0 0
    %1081 = vmatprep.mubr.bf16.mxu0 0
    %1082 = vmatmul.mubr.bf16.gmra.mrb[0].mxu0 %v1007
    %v1083 = vpop.f32.mrb[0].mxu0
    %v1084 = vadd.f32 %v82, %v1083
    %v1085 = vpop.f32.mrb[0].mxu0
    %v1086 = vpop.f32.mrb[0].mxu0
    %v1087 = vpop.f32.mrb[0].mxu0
    %1088 = vdwg.mxu0
    %v1089 = vadd.f32 %v1004, %v1043
    %v1090 = vsub.f32 0.0, %v1089
    %v1091 = vmul.f32 %v1090, 1.442695
    %v1092 = vpow.pop %v1091
    %v1093 = vadd.f32 %v1092, 1.0
    %v1094 = vrcp.pop %v1093
    %v1095 = vadd.f32 %v1005, %v1045
    %v1096 = vsub.f32 0.0, %v1095
    %v1097 = vmul.f32 %v1096, 1.442695
    %v1098 = vpow.pop %v1097
    %v1099 = vadd.f32 %v1098, 1.0
    %v1100 = vrcp.pop %v1099
    %v1101 = vmul.f32 %v1094, %v1084
    %v1102 = vadd.f32 %v1006, %v1101
    %v1103 = vtanh.pop %v1102
    %v1104 = vsub.f32 1.0, %v1100
    %v1105 = vmul.f32 %v1104, %v1103
    %v1106 = vmul.f32 %v1100, %v994
    %v1107 = vadd.f32 %v1105, %v1106
    %s1108 = scalar_lea.vmem [#allocation2], 56
    %1109 = vst.msk [vmem:[%s1108] sm:$0xff] %vm317, %v1107
    %1111 = vrot.lane.b32.xlu0 %v1107, 64
    %v1112 = vpop.permute.xlu0 %1111
    %1114 = vst.msk [vmem:[#allocation3] sm:$0xff] %vm317, %v1112
    %v1115 = vld [vmem:[#allocation2] sm:$0xff]
    %v1116 = vld [vmem:[#allocation2 + $0x8] sm:$0xff]
    %v1117 = vld [vmem:[#allocation2 + $0x10] sm:$0xff]
    %v1118 = vld [vmem:[#allocation2 + $0x18] sm:$0xff]
    %v1119 = vld [vmem:[#allocation2 + $0x20] sm:$0xff]
    %v1120 = vld [vmem:[#allocation2 + $0x28] sm:$0xff]
    %v1121 = vld [vmem:[#allocation2 + $0x30] sm:$0xff]
    %v1122 = vld [vmem:[#allocation2 + $0x38] sm:$0xff]
    %v1123 = vld [vmem:[#allocation3] sm:$0xff]
    %v1124 = vld [vmem:[#allocation3 + $0x8] sm:$0xff]
    %v1125 = vld [vmem:[#allocation3 + $0x10] sm:$0xff]
    %v1126 = vld [vmem:[#allocation3 + $0x18] sm:$0xff]
    %v1127 = vld [vmem:[#allocation3 + $0x20] sm:$0xff]
    %v1128 = vld [vmem:[#allocation3 + $0x28] sm:$0xff]
    %v1129 = vld [vmem:[#allocation3 + $0x30] sm:$0xff]
    %v1130 = vld [vmem:[#allocation3 + $0x38] sm:$0xff]
    %v1131 = vld [vmem:[%s3] sm:$0x3]
    %v1132 = vld [vmem:[%s4] sm:$0x3]
    %v1133 = vlaneseq
    %v1134 = vshrl.u32 %v1133, 7
    %v1135 = vsub.s32 0, %v1134
    %v1136 = vrot.slane %v1131, %v1135
    %v1137 = vmul.f32 %v1115, %v1136
    %v1138 = vmul.f32 %v1116, %v1136
    %v1139 = vmul.f32 %v1117, %v1136
    %v1140 = vmul.f32 %v1118, %v1136
    %v1141 = vmul.f32 %v1119, %v1136
    %v1142 = vmul.f32 %v1120, %v1136
    %v1143 = vmul.f32 %v1121, %v1136
    %v1144 = vmul.f32 %v1122, %v1136
    %v1145 = vsel %vm317, %v1137, 0.0
    %1146 = vadd.xlane.f32.xlu0 %v1145
    %v1147 = vpop.xlane.xlu0 %1146
    %v1148 = vsel %vm317, %v1138, 0.0
    %1149 = vadd.xlane.f32.xlu0 %v1148
    %v1150 = vpop.xlane.xlu0 %1149
    %v1151 = vsel %vm317, %v1139, 0.0
    %1152 = vadd.xlane.f32.xlu0 %v1151
    %v1153 = vpop.xlane.xlu0 %1152
    %v1154 = vsel %vm317, %v1140, 0.0
    %1155 = vadd.xlane.f32.xlu0 %v1154
    %v1156 = vpop.xlane.xlu0 %1155
    %v1157 = vsel %vm317, %v1141, 0.0
    %1158 = vadd.xlane.f32.xlu0 %v1157
    %v1159 = vpop.xlane.xlu0 %1158
    %v1160 = vsel %vm317, %v1142, 0.0
    %1161 = vadd.xlane.f32.xlu0 %v1160
    %v1162 = vpop.xlane.xlu0 %1161
    %v1163 = vsel %vm317, %v1143, 0.0
    %1164 = vadd.xlane.f32.xlu0 %v1163
    %v1165 = vpop.xlane.xlu0 %1164
    %v1166 = vsel %vm317, %v1144, 0.0
    %1167 = vadd.xlane.f32.xlu0 %v1166
    %v1168 = vpop.xlane.xlu0 %1167
    %v1169 = vlaneseq
    %v1170 = vshrl.u32 %v1169, 7
    %v1171 = vsub.s32 0, %v1170
    %v1172 = vrot.slane %v1132, %v1171
    %v1173 = vmul.f32 %v1123, %v1172
    %v1174 = vmul.f32 %v1124, %v1172
    %v1175 = vmul.f32 %v1125, %v1172
    %v1176 = vmul.f32 %v1126, %v1172
    %v1177 = vmul.f32 %v1127, %v1172
    %v1178 = vmul.f32 %v1128, %v1172
    %v1179 = vmul.f32 %v1129, %v1172
    %v1180 = vmul.f32 %v1130, %v1172
    %v1181 = vsel %vm317, %v1173, 0.0
    %1182 = vadd.xlane.f32.xlu0 %v1181
    %v1183 = vpop.xlane.xlu0 %1182
    %v1184 = vsel %vm317, %v1174, 0.0
    %1185 = vadd.xlane.f32.xlu0 %v1184
    %v1186 = vpop.xlane.xlu0 %1185
    %v1187 = vsel %vm317, %v1175, 0.0
    %1188 = vadd.xlane.f32.xlu0 %v1187
    %v1189 = vpop.xlane.xlu0 %1188
    %v1190 = vsel %vm317, %v1176, 0.0
    %1191 = vadd.xlane.f32.xlu0 %v1190
    %v1192 = vpop.xlane.xlu0 %1191
    %v1193 = vsel %vm317, %v1177, 0.0
    %1194 = vadd.xlane.f32.xlu0 %v1193
    %v1195 = vpop.xlane.xlu0 %1194
    %v1196 = vsel %vm317, %v1178, 0.0
    %1197 = vadd.xlane.f32.xlu0 %v1196
    %v1198 = vpop.xlane.xlu0 %1197
    %v1199 = vsel %vm317, %v1179, 0.0
    %1200 = vadd.xlane.f32.xlu0 %v1199
    %v1201 = vpop.xlane.xlu0 %1200
    %v1202 = vsel %vm317, %v1180, 0.0
    %1203 = vadd.xlane.f32.xlu0 %v1202
    %v1204 = vpop.xlane.xlu0 %1203
    %v1205 = vadd.f32 %v1147, %v1183
    %v1206 = vadd.f32 %v1150, %v1186
    %v1207 = vadd.f32 %v1153, %v1189
    %v1208 = vadd.f32 %v1156, %v1192
    %v1209 = vadd.f32 %v1159, %v1195
    %v1210 = vadd.f32 %v1162, %v1198
    %v1211 = vadd.f32 %v1165, %v1201
    %v1212 = vadd.f32 %v1168, %v1204
    %s1213 = sld [smem:[#allocation4]]
    %v1214 = vstv %s1213
    %v1215 = vadd.f32 %v1205, %v1214
    %v1216 = vadd.f32 %v1206, %v1214
    %v1217 = vadd.f32 %v1207, %v1214
    %v1218 = vadd.f32 %v1208, %v1214
    %v1219 = vadd.f32 %v1209, %v1214
    %v1220 = vadd.f32 %v1210, %v1214
    %v1221 = vadd.f32 %v1211, %v1214
    %v1222 = vadd.f32 %v1212, %v1214
    %vm1223 = vcmp.gt.f32.partialorder %v1215, 0.0
    %vm1224 = vcmp.gt.f32.partialorder %v1216, 0.0
    %vm1225 = vcmp.gt.f32.partialorder %v1217, 0.0
    %vm1226 = vcmp.gt.f32.partialorder %v1218, 0.0
    %vm1227 = vcmp.gt.f32.partialorder %v1219, 0.0
    %vm1228 = vcmp.gt.f32.partialorder %v1220, 0.0
    %vm1229 = vcmp.gt.f32.partialorder %v1221, 0.0
    %vm1230 = vcmp.gt.f32.partialorder %v1222, 0.0
    %v1231 = vmin.f32 %v1215, 0.0
    %v1232 = vmin.f32 %v1216, 0.0
    %v1233 = vmin.f32 %v1217, 0.0
    %v1234 = vmin.f32 %v1218, 0.0
    %v1235 = vmin.f32 %v1219, 0.0
    %v1236 = vmin.f32 %v1220, 0.0
    %v1237 = vmin.f32 %v1221, 0.0
    %v1238 = vmin.f32 %v1222, 0.0
    %v1239 = vmul.f32 %v1231, 1.442695
    %v1240 = vpow.pop %v1239
    %v1241 = vmul.f32 %v1232, 1.442695
    %v1242 = vpow.pop %v1241
    %v1243 = vmul.f32 %v1233, 1.442695
    %v1244 = vpow.pop %v1243
    %v1245 = vmul.f32 %v1234, 1.442695
    %v1246 = vpow.pop %v1245
    %v1247 = vmul.f32 %v1235, 1.442695
    %v1248 = vpow.pop %v1247
    %v1249 = vmul.f32 %v1236, 1.442695
    %v1250 = vpow.pop %v1249
    %v1251 = vmul.f32 %v1237, 1.442695
    %v1252 = vpow.pop %v1251
    %v1253 = vmul.f32 %v1238, 1.442695
    %v1254 = vpow.pop %v1253
    %v1255 = vsub.f32 %v1240, 1.0
    %v1256 = vsub.f32 %v1242, 1.0
    %v1257 = vsub.f32 %v1244, 1.0
    %v1258 = vsub.f32 %v1246, 1.0
    %v1259 = vsub.f32 %v1248, 1.0
    %v1260 = vsub.f32 %v1250, 1.0
    %v1261 = vsub.f32 %v1252, 1.0
    %v1262 = vsub.f32 %v1254, 1.0
    %v1263 = vsel %vm1223, %v1215, %v1255
    %v1264 = vsel %vm1224, %v1216, %v1256
    %v1265 = vsel %vm1225, %v1217, %v1257
    %v1266 = vsel %vm1226, %v1218, %v1258
    %v1267 = vsel %vm1227, %v1219, %v1259
    %v1268 = vsel %vm1228, %v1220, %v1260
    %v1269 = vsel %vm1229, %v1221, %v1261
    %v1270 = vsel %vm1230, %v1222, %v1262
    %v1271 = vlaneseq
    %v1272 = vshrl.u32 %v1271, 7
    %v1273 = vsub.s32 1, %v1272
    %v1274 = vrot.slane %v1131, %v1273
    %v1275 = vmul.f32 %v1115, %v1274
    %v1276 = vmul.f32 %v1116, %v1274
    %v1277 = vmul.f32 %v1117, %v1274
    %v1278 = vmul.f32 %v1118, %v1274
    %v1279 = vmul.f32 %v1119, %v1274
    %v1280 = vmul.f32 %v1120, %v1274
    %v1281 = vmul.f32 %v1121, %v1274
    %v1282 = vmul.f32 %v1122, %v1274
    %v1283 = vsel %vm317, %v1275, 0.0
    %1284 = vadd.xlane.f32.xlu0 %v1283
    %v1285 = vpop.xlane.xlu0 %1284
    %v1286 = vsel %vm317, %v1276, 0.0
    %1287 = vadd.xlane.f32.xlu0 %v1286
    %v1288 = vpop.xlane.xlu0 %1287
    %v1289 = vsel %vm317, %v1277, 0.0
    %1290 = vadd.xlane.f32.xlu0 %v1289
    %v1291 = vpop.xlane.xlu0 %1290
    %v1292 = vsel %vm317, %v1278, 0.0
    %1293 = vadd.xlane.f32.xlu0 %v1292
    %v1294 = vpop.xlane.xlu0 %1293
    %v1295 = vsel %vm317, %v1279, 0.0
    %1296 = vadd.xlane.f32.xlu0 %v1295
    %v1297 = vpop.xlane.xlu0 %1296
    %v1298 = vsel %vm317, %v1280, 0.0
    %1299 = vadd.xlane.f32.xlu0 %v1298
    %v1300 = vpop.xlane.xlu0 %1299
    %v1301 = vsel %vm317, %v1281, 0.0
    %1302 = vadd.xlane.f32.xlu0 %v1301
    %v1303 = vpop.xlane.xlu0 %1302
    %v1304 = vsel %vm317, %v1282, 0.0
    %1305 = vadd.xlane.f32.xlu0 %v1304
    %v1306 = vpop.xlane.xlu0 %1305
    %v1307 = vlaneseq
    %v1308 = vshrl.u32 %v1307, 7
    %v1309 = vsub.s32 1, %v1308
    %v1310 = vrot.slane %v1132, %v1309
    %v1311 = vmul.f32 %v1123, %v1310
    %v1312 = vmul.f32 %v1124, %v1310
    %v1313 = vmul.f32 %v1125, %v1310
    %v1314 = vmul.f32 %v1126, %v1310
    %v1315 = vmul.f32 %v1127, %v1310
    %v1316 = vmul.f32 %v1128, %v1310
    %v1317 = vmul.f32 %v1129, %v1310
    %v1318 = vmul.f32 %v1130, %v1310
    %v1319 = vsel %vm317, %v1311, 0.0
    %1320 = vadd.xlane.f32.xlu0 %v1319
    %v1321 = vpop.xlane.xlu0 %1320
    %v1322 = vsel %vm317, %v1312, 0.0
    %1323 = vadd.xlane.f32.xlu0 %v1322
    %v1324 = vpop.xlane.xlu0 %1323
    %v1325 = vsel %vm317, %v1313, 0.0
    %1326 = vadd.xlane.f32.xlu0 %v1325
    %v1327 = vpop.xlane.xlu0 %1326
    %v1328 = vsel %vm317, %v1314, 0.0
    %1329 = vadd.xlane.f32.xlu0 %v1328
    %v1330 = vpop.xlane.xlu0 %1329
    %v1331 = vsel %vm317, %v1315, 0.0
    %1332 = vadd.xlane.f32.xlu0 %v1331
    %v1333 = vpop.xlane.xlu0 %1332
    %v1334 = vsel %vm317, %v1316, 0.0
    %1335 = vadd.xlane.f32.xlu0 %v1334
    %v1336 = vpop.xlane.xlu0 %1335
    %v1337 = vsel %vm317, %v1317, 0.0
    %1338 = vadd.xlane.f32.xlu0 %v1337
    %v1339 = vpop.xlane.xlu0 %1338
    %v1340 = vsel %vm317, %v1318, 0.0
    %1341 = vadd.xlane.f32.xlu0 %v1340
    %v1342 = vpop.xlane.xlu0 %1341
    %v1343 = vadd.f32 %v1285, %v1321
    %v1344 = vadd.f32 %v1288, %v1324
    %v1345 = vadd.f32 %v1291, %v1327
    %v1346 = vadd.f32 %v1294, %v1330
    %v1347 = vadd.f32 %v1297, %v1333
    %v1348 = vadd.f32 %v1300, %v1336
    %v1349 = vadd.f32 %v1303, %v1339
    %v1350 = vadd.f32 %v1306, %v1342
    %s1351 = sld [smem:[#allocation4 + $0x1]]
    %v1352 = vstv %s1351
    %v1353 = vadd.f32 %v1343, %v1352
    %v1354 = vadd.f32 %v1344, %v1352
    %v1355 = vadd.f32 %v1345, %v1352
    %v1356 = vadd.f32 %v1346, %v1352
    %v1357 = vadd.f32 %v1347, %v1352
    %v1358 = vadd.f32 %v1348, %v1352
    %v1359 = vadd.f32 %v1349, %v1352
    %v1360 = vadd.f32 %v1350, %v1352
    %vm1361 = vcmp.gt.f32.partialorder %v1353, 0.0
    %vm1362 = vcmp.gt.f32.partialorder %v1354, 0.0
    %vm1363 = vcmp.gt.f32.partialorder %v1355, 0.0
    %vm1364 = vcmp.gt.f32.partialorder %v1356, 0.0
    %vm1365 = vcmp.gt.f32.partialorder %v1357, 0.0
    %vm1366 = vcmp.gt.f32.partialorder %v1358, 0.0
    %vm1367 = vcmp.gt.f32.partialorder %v1359, 0.0
    %vm1368 = vcmp.gt.f32.partialorder %v1360, 0.0
    %v1369 = vmin.f32 %v1353, 0.0
    %v1370 = vmin.f32 %v1354, 0.0
    %v1371 = vmin.f32 %v1355, 0.0
    %v1372 = vmin.f32 %v1356, 0.0
    %v1373 = vmin.f32 %v1357, 0.0
    %v1374 = vmin.f32 %v1358, 0.0
    %v1375 = vmin.f32 %v1359, 0.0
    %v1376 = vmin.f32 %v1360, 0.0
    %v1377 = vmul.f32 %v1369, 1.442695
    %v1378 = vpow.pop %v1377
    %v1379 = vmul.f32 %v1370, 1.442695
    %v1380 = vpow.pop %v1379
    %v1381 = vmul.f32 %v1371, 1.442695
    %v1382 = vpow.pop %v1381
    %v1383 = vmul.f32 %v1372, 1.442695
    %v1384 = vpow.pop %v1383
    %v1385 = vmul.f32 %v1373, 1.442695
    %v1386 = vpow.pop %v1385
    %v1387 = vmul.f32 %v1374, 1.442695
    %v1388 = vpow.pop %v1387
    %v1389 = vmul.f32 %v1375, 1.442695
    %v1390 = vpow.pop %v1389
    %v1391 = vmul.f32 %v1376, 1.442695
    %v1392 = vpow.pop %v1391
    %v1393 = vsub.f32 %v1378, 1.0
    %v1394 = vsub.f32 %v1380, 1.0
    %v1395 = vsub.f32 %v1382, 1.0
    %v1396 = vsub.f32 %v1384, 1.0
    %v1397 = vsub.f32 %v1386, 1.0
    %v1398 = vsub.f32 %v1388, 1.0
    %v1399 = vsub.f32 %v1390, 1.0
    %v1400 = vsub.f32 %v1392, 1.0
    %v1401 = vsel %vm1361, %v1353, %v1393
    %v1402 = vsel %vm1362, %v1354, %v1394
    %v1403 = vsel %vm1363, %v1355, %v1395
    %v1404 = vsel %vm1364, %v1356, %v1396
    %v1405 = vsel %vm1365, %v1357, %v1397
    %v1406 = vsel %vm1366, %v1358, %v1398
    %v1407 = vsel %vm1367, %v1359, %v1399
    %v1408 = vsel %vm1368, %v1360, %v1400
    %v1409 = vlaneseq
    %v1410 = vand.u32 %v1409, 127
    %vm1411 = vcmp.lt.s32.totalorder %v1410, 2
    %v1420 = vlaneseq
    %v1421 = vshrl.u32 %v1420, 7
    %v1422 = vsub.s32 %v1410, %v1421
    %v1423 = vrot.slane %v1263, %v1422
    %v1424 = vlaneseq
    %v1425 = vshrl.u32 %v1424, 7
    %v1426 = vsub.s32 %v1410, %v1425
    %v1427 = vrot.slane %v1264, %v1426
    %v1428 = vlaneseq
    %v1429 = vshrl.u32 %v1428, 7
    %v1430 = vsub.s32 %v1410, %v1429
    %v1431 = vrot.slane %v1265, %v1430
    %v1432 = vlaneseq
    %v1433 = vshrl.u32 %v1432, 7
    %v1434 = vsub.s32 %v1410, %v1433
    %v1435 = vrot.slane %v1266, %v1434
    %v1436 = vlaneseq
    %v1437 = vshrl.u32 %v1436, 7
    %v1438 = vsub.s32 %v1410, %v1437
    %v1439 = vrot.slane %v1267, %v1438
    %v1440 = vlaneseq
    %v1441 = vshrl.u32 %v1440, 7
    %v1442 = vsub.s32 %v1410, %v1441
    %v1443 = vrot.slane %v1268, %v1442
    %v1444 = vlaneseq
    %v1445 = vshrl.u32 %v1444, 7
    %v1446 = vsub.s32 %v1410, %v1445
    %v1447 = vrot.slane %v1269, %v1446
    %v1448 = vlaneseq
    %v1449 = vshrl.u32 %v1448, 7
    %v1450 = vsub.s32 %v1410, %v1449
    %v1451 = vrot.slane %v1270, %v1450
    %vm1452 = vcmask 1041409
    %v1453 = vsel %vm1452, %v1427, %v1423
    %vm1454 = vcmask 1042434
    %v1455 = vsel %vm1454, %v1431, %v1453
    %vm1456 = vcmask 1043459
    %v1457 = vsel %vm1456, %v1435, %v1455
    %vm1458 = vcmask 1044484
    %v1459 = vsel %vm1458, %v1439, %v1457
    %vm1460 = vcmask 1045509
    %v1461 = vsel %vm1460, %v1443, %v1459
    %vm1462 = vcmask 1046534
    %v1463 = vsel %vm1462, %v1447, %v1461
    %vm1464 = vcmask 1047559
    %v1465 = vsel %vm1464, %v1451, %v1463
    %v1467 = vsel %vm1411, %v1465, 0.0
    %v1476 = vlaneseq
    %v1477 = vshrl.u32 %v1476, 7
    %v1478 = vsub.s32 %v1410, %v1477
    %v1479 = vrot.slane %v1401, %v1478
    %v1480 = vlaneseq
    %v1481 = vshrl.u32 %v1480, 7
    %v1482 = vsub.s32 %v1410, %v1481
    %v1483 = vrot.slane %v1402, %v1482
    %v1484 = vlaneseq
    %v1485 = vshrl.u32 %v1484, 7
    %v1486 = vsub.s32 %v1410, %v1485
    %v1487 = vrot.slane %v1403, %v1486
    %v1488 = vlaneseq
    %v1489 = vshrl.u32 %v1488, 7
    %v1490 = vsub.s32 %v1410, %v1489
    %v1491 = vrot.slane %v1404, %v1490
    %v1492 = vlaneseq
    %v1493 = vshrl.u32 %v1492, 7
    %v1494 = vsub.s32 %v1410, %v1493
    %v1495 = vrot.slane %v1405, %v1494
    %v1496 = vlaneseq
    %v1497 = vshrl.u32 %v1496, 7
    %v1498 = vsub.s32 %v1410, %v1497
    %v1499 = vrot.slane %v1406, %v1498
    %v1500 = vlaneseq
    %v1501 = vshrl.u32 %v1500, 7
    %v1502 = vsub.s32 %v1410, %v1501
    %v1503 = vrot.slane %v1407, %v1502
    %v1504 = vlaneseq
    %v1505 = vshrl.u32 %v1504, 7
    %v1506 = vsub.s32 %v1410, %v1505
    %v1507 = vrot.slane %v1408, %v1506
    %v1508 = vsel %vm1452, %v1483, %v1479
    %v1509 = vsel %vm1454, %v1487, %v1508
    %v1510 = vsel %vm1456, %v1491, %v1509
    %v1511 = vsel %vm1458, %v1495, %v1510
    %v1512 = vsel %vm1460, %v1499, %v1511
    %v1513 = vsel %vm1462, %v1503, %v1512
    %v1514 = vsel %vm1464, %v1507, %v1513
    %v1516 = vsel %vm1411, %v1514, 0.0
    %vm1517 = vcmask 64512
    %v1518 = vsel %vm1517, %v1467, 0.0
    %1519 = vadd.xlane.f32.xlu0 %v1518
    %v1520 = vpop.xlane.xlu0 %1519
    %v1521 = vrot.slane %v1520, 4
    %v1522 = vadd.f32 %v1520, %v1521
    %v1523 = vrot.slane %v1522, 2
    %v1524 = vadd.f32 %v1522, %v1523
    %v1525 = vrot.slane %v1524, 1
    %v1526 = vadd.f32 %v1524, %v1525
    %s1527 = vtos %v1526
    %v1528 = vsel %vm1517, %v1516, 0.0
    %1529 = vadd.xlane.f32.xlu0 %v1528
    %v1530 = vpop.xlane.xlu0 %1529
    %v1531 = vrot.slane %v1530, 4
    %v1532 = vadd.f32 %v1530, %v1531
    %v1533 = vrot.slane %v1532, 2
    %v1534 = vadd.f32 %v1532, %v1533
    %v1535 = vrot.slane %v1534, 1
    %v1536 = vadd.f32 %v1534, %v1535
    %s1537 = vtos %v1536
    %s1538 = sadd.f32 %s1527, %s1537
    %v1539 = vmul.f32 %v1467, %v1467
    %v1540 = vsel %vm1517, %v1539, 0.0
    %1541 = vadd.xlane.f32.xlu0 %v1540
    %v1542 = vpop.xlane.xlu0 %1541
    %v1543 = vrot.slane %v1542, 4
    %v1544 = vadd.f32 %v1542, %v1543
    %v1545 = vrot.slane %v1544, 2
    %v1546 = vadd.f32 %v1544, %v1545
    %v1547 = vrot.slane %v1546, 1
    %v1548 = vadd.f32 %v1546, %v1547
    %s1549 = vtos %v1548
    %v1550 = vmul.f32 %v1516, %v1516
    %v1551 = vsel %vm1517, %v1550, 0.0
    %1552 = vadd.xlane.f32.xlu0 %v1551
    %v1553 = vpop.xlane.xlu0 %1552
    %v1554 = vrot.slane %v1553, 4
    %v1555 = vadd.f32 %v1553, %v1554
    %v1556 = vrot.slane %v1555, 2
    %v1557 = vadd.f32 %v1555, %v1556
    %v1558 = vrot.slane %v1557, 1
    %v1559 = vadd.f32 %v1557, %v1558
    %s1560 = vtos %v1559
    %s1561 = sadd.f32 %s1549, %s1560
    %v1562 = vrcp.pop 32.0
    %s1563 = vtos %v1562
    %s1564 = smul.f32 %s1538, %s1563
    %s1565 = smul.f32 %s1538, %s1538
    %v1566 = vrcp.pop 32.0
    %s1567 = vtos %v1566
    %s1568 = smul.f32 %s1565, %s1567
    %s1569 = ssub.f32 %s1561, %s1568
    %v1570 = vrcp.pop 31.0
    %s1571 = vtos %v1570
    %s1572 = smul.f32 %s1569, %s1571
    %v1573 = vstv %s1572
    %v1574 = vrsqrt.pop %v1573
    %v1575 = vmul.f32 %v1573, %v1574
    %vm1576 = vcmp.eq.f32.partialorder %v1573, inf
    %v1577 = vsel %vm1576, %v1573, %v1575
    %vm1578 = vcmp.eq.f32.partialorder %v1573, 0.0
    %v1579 = vand.u32 %v1573, 2147483648
    %v1580 = vsel %vm1578, %v1579, %v1577
    %s1581 = vtos %v1580
    %v1582 = vstv %s1581
    %v1583 = vrcp.pop %v1582
    %s1584 = vtos %v1583
    %v1585 = vstv %s1564
    %v1586 = vsub.f32 %v1263, %v1585
    %v1587 = vsub.f32 %v1264, %v1585
    %v1588 = vsub.f32 %v1265, %v1585
    %v1589 = vsub.f32 %v1266, %v1585
    %v1590 = vsub.f32 %v1267, %v1585
    %v1591 = vsub.f32 %v1268, %v1585
    %v1592 = vsub.f32 %v1269, %v1585
    %v1593 = vsub.f32 %v1270, %v1585
    %v1594 = vstv %s1584
    %v1595 = vmul.f32 %v1586, %v1594
    %v1596 = vmul.f32 %v1587, %v1594
    %v1597 = vmul.f32 %v1588, %v1594
    %v1598 = vmul.f32 %v1589, %v1594
    %v1599 = vmul.f32 %v1590, %v1594
    %v1600 = vmul.f32 %v1591, %v1594
    %v1601 = vmul.f32 %v1592, %v1594
    %v1602 = vmul.f32 %v1593, %v1594
    %v1611 = vlaneseq
    %v1612 = vshrl.u32 %v1611, 7
    %v1613 = vsub.s32 %v1410, %v1612
    %v1614 = vrot.slane %v1595, %v1613
    %v1615 = vlaneseq
    %v1616 = vshrl.u32 %v1615, 7
    %v1617 = vsub.s32 %v1410, %v1616
    %v1618 = vrot.slane %v1596, %v1617
    %v1619 = vlaneseq
    %v1620 = vshrl.u32 %v1619, 7
    %v1621 = vsub.s32 %v1410, %v1620
    %v1622 = vrot.slane %v1597, %v1621
    %v1623 = vlaneseq
    %v1624 = vshrl.u32 %v1623, 7
    %v1625 = vsub.s32 %v1410, %v1624
    %v1626 = vrot.slane %v1598, %v1625
    %v1627 = vlaneseq
    %v1628 = vshrl.u32 %v1627, 7
    %v1629 = vsub.s32 %v1410, %v1628
    %v1630 = vrot.slane %v1599, %v1629
    %v1631 = vlaneseq
    %v1632 = vshrl.u32 %v1631, 7
    %v1633 = vsub.s32 %v1410, %v1632
    %v1634 = vrot.slane %v1600, %v1633
    %v1635 = vlaneseq
    %v1636 = vshrl.u32 %v1635, 7
    %v1637 = vsub.s32 %v1410, %v1636
    %v1638 = vrot.slane %v1601, %v1637
    %v1639 = vlaneseq
    %v1640 = vshrl.u32 %v1639, 7
    %v1641 = vsub.s32 %v1410, %v1640
    %v1642 = vrot.slane %v1602, %v1641
    %v1643 = vsel %vm1452, %v1618, %v1614
    %v1644 = vsel %vm1454, %v1622, %v1643
    %v1645 = vsel %vm1456, %v1626, %v1644
    %v1646 = vsel %vm1458, %v1630, %v1645
    %v1647 = vsel %vm1460, %v1634, %v1646
    %v1648 = vsel %vm1462, %v1638, %v1647
    %v1649 = vsel %vm1464, %v1642, %v1648
    %1651 = vst.msk [vmem:[%s6] sm:$0xff] %vm1517, %v1649
    %v1652 = vsub.f32 %v1401, %v1585
    %v1653 = vsub.f32 %v1402, %v1585
    %v1654 = vsub.f32 %v1403, %v1585
    %v1655 = vsub.f32 %v1404, %v1585
    %v1656 = vsub.f32 %v1405, %v1585
    %v1657 = vsub.f32 %v1406, %v1585
    %v1658 = vsub.f32 %v1407, %v1585
    %v1659 = vsub.f32 %v1408, %v1585
    %v1660 = vmul.f32 %v1652, %v1594
    %v1661 = vmul.f32 %v1653, %v1594
    %v1662 = vmul.f32 %v1654, %v1594
    %v1663 = vmul.f32 %v1655, %v1594
    %v1664 = vmul.f32 %v1656, %v1594
    %v1665 = vmul.f32 %v1657, %v1594
    %v1666 = vmul.f32 %v1658, %v1594
    %v1667 = vmul.f32 %v1659, %v1594
    %v1676 = vlaneseq
    %v1677 = vshrl.u32 %v1676, 7
    %v1678 = vsub.s32 %v1410, %v1677
    %v1679 = vrot.slane %v1660, %v1678
    %v1680 = vlaneseq
    %v1681 = vshrl.u32 %v1680, 7
    %v1682 = vsub.s32 %v1410, %v1681
    %v1683 = vrot.slane %v1661, %v1682
    %v1684 = vlaneseq
    %v1685 = vshrl.u32 %v1684, 7
    %v1686 = vsub.s32 %v1410, %v1685
    %v1687 = vrot.slane %v1662, %v1686
    %v1688 = vlaneseq
    %v1689 = vshrl.u32 %v1688, 7
    %v1690 = vsub.s32 %v1410, %v1689
    %v1691 = vrot.slane %v1663, %v1690
    %v1692 = vlaneseq
    %v1693 = vshrl.u32 %v1692, 7
    %v1694 = vsub.s32 %v1410, %v1693
    %v1695 = vrot.slane %v1664, %v1694
    %v1696 = vlaneseq
    %v1697 = vshrl.u32 %v1696, 7
    %v1698 = vsub.s32 %v1410, %v1697
    %v1699 = vrot.slane %v1665, %v1698
    %v1700 = vlaneseq
    %v1701 = vshrl.u32 %v1700, 7
    %v1702 = vsub.s32 %v1410, %v1701
    %v1703 = vrot.slane %v1666, %v1702
    %v1704 = vlaneseq
    %v1705 = vshrl.u32 %v1704, 7
    %v1706 = vsub.s32 %v1410, %v1705
    %v1707 = vrot.slane %v1667, %v1706
    %v1708 = vsel %vm1452, %v1683, %v1679
    %v1709 = vsel %vm1454, %v1687, %v1708
    %v1710 = vsel %vm1456, %v1691, %v1709
    %v1711 = vsel %vm1458, %v1695, %v1710
    %v1712 = vsel %vm1460, %v1699, %v1711
    %v1713 = vsel %vm1462, %v1703, %v1712
    %v1714 = vsel %vm1464, %v1707, %v1713
    %s1716 = scalar_lea.vmem %s6, 8
    %1717 = vst.msk [vmem:[%s1716] sm:$0xff] %vm1517, %v1714
    // Predicated region
    $region30: #{_lambda_.3} parent=1 // pred_check
      _
    $region31: #{_lambda_.3} parent=1 // pred_check_branch
      %1719 = sbr.rel (0) target = $region33
    $region32: #{_lambda_.3} parent=1 // pred_region
      _
    $region33: #{_lambda_.3} parent=1 // pred_fallthru
      _
    // Predicated region
    $region34: #{_lambda_.3} parent=1 // pred_check
      _
    $region35: #{_lambda_.3} parent=1 // pred_check_branch
      %1721 = sbr.rel (0) target = $region37
    $region36: #{_lambda_.3} parent=1 // pred_region
      _
    $region37: #{_lambda_.3} parent=1 // pred_fallthru
      _
    %1722 = vsyncpa [#allocation5], 1

</llo_original>
